<compile_context>
chip_gen: v7x
topology: tpu7x:2x2x1
jax: 0.10.0
libtpu: 0.0.40
codegen_flags: <defaults>
</compile_context>

<pallas_src>
import functools

import jax
import jax.numpy as jnp
import numpy as np
from jax import lax
from jax.experimental import pallas as pl
from jax.experimental.pallas import tpu as pltpu

EMB = 256          # stands in for 1024
HIDDEN = 128       # stands in for 512 (2*HIDDEN == EMB, as the module requires)
LINEAR = 128
NUM_CLASSES = 3


def _vmem():
    return pl.BlockSpec(memory_space=pltpu.MemorySpace.VMEM)


def _round_up(n, m):
    return ((n + m - 1) // m) * m


# ---------------------------------------------------------------------------
# Fused kernel: BiLSTM recurrence + tanh attention + Linear->ReLU->Linear head
# ---------------------------------------------------------------------------
def _atgru_fused_kernel(x_ref, tw_ref, lenc_ref, lenr_ref,
                        wih_ref, whhf_ref, whhb_ref, blstm_ref,
                        wh_ref, wz_ref, bt_ref, v_ref,
                        w1_ref, b1_ref, w2_ref, b2_ref,
                        logits_ref, alpha_ref,
                        gxf_scr, gxb_scr, hf_scr, hb_scr):
    S, B, H = hf_scr.shape
    D = 2 * H
    F32 = jnp.float32
    BF16 = jnp.bfloat16
    len_col = lenc_ref[...]                         # (B, 1) int32

    # --- Phase 1: hoisted input projection for BOTH directions (+ bias) -----
    # One big MXU call with M = S*B instead of S serialized M = B matmuls.
    gates_x = jnp.dot(x_ref[...], wih_ref[...],
                      preferred_element_type=F32) + blstm_ref[...]   # (S*B, 8H)
    gxf_scr[...] = gates_x[:, 0:4 * H].reshape(S, B, 4 * H)
    gxb_scr[...] = gates_x[:, 4 * H:8 * H].reshape(S, B, 4 * H)

    whh_f = whhf_ref[...]                           # (H, 4H) bf16
    whh_b = whhb_ref[...]

    def gate_math(g, c):
        i = jax.nn.sigmoid(g[:, 0:H])
        f = jax.nn.sigmoid(g[:, H:2 * H])
        gg = jnp.tanh(g[:, 2 * H:3 * H])
        o = jax.nn.sigmoid(g[:, 3 * H:4 * H])
        c_new = f * c + i * gg
        h_new = o * jnp.tanh(c_new)
        return h_new, c_new

    zeros = jnp.zeros((B, H), F32)

    # --- Phase 2: interleaved fwd/bwd recurrence (two independent chains) ---
    def body(t, carry):
        h_f, c_f, h_b, c_b = carry
        tb = S - 1 - t
        g_f = gxf_scr[t] + jnp.dot(h_f.astype(BF16), whh_f,
                                   preferred_element_type=F32)
        g_b = gxb_scr[tb] + jnp.dot(h_b.astype(BF16), whh_b,
                                    preferred_element_type=F32)
        hf_new, cf_new = gate_math(g_f, c_f)
        hb_new, cb_new = gate_math(g_b, c_b)
        vf = len_col > t                            # (B, 1) bool
        vb = len_col > tb
        # padded steps emit 0 (pad_packed_sequence); state frozen outside range
        hf_scr[t] = jnp.where(vf, hf_new, 0.0)
        hb_scr[tb] = jnp.where(vb, hb_new, 0.0)
        return (jnp.where(vf, hf_new, h_f), jnp.where(vf, cf_new, c_f),
                jnp.where(vb, hb_new, h_b), jnp.where(vb, cb_new, c_b))

    lax.fori_loop(0, S, body, (zeros, zeros, zeros, zeros), unroll=True)

    # --- Phase 3: Attention_Stance (time-major, kept in VMEM) ----------------
    h = jnp.concatenate([hf_scr[...], hb_scr[...]], axis=-1)   # (S, B, D) f32
    m1 = jnp.dot(h.reshape(S * B, D).astype(BF16), wh_ref[...],
                 preferred_element_type=F32).reshape(S, B, D)
    m2 = jnp.dot(tw_ref[...], wz_ref[...],
                 preferred_element_type=F32)                    # (B, D)
    s_tanh = jnp.tanh(m1 + m2[None, :, :] + bt_ref[...][None, :, :])
    u = jnp.sum(s_tanh * v_ref[...][None, :, :], axis=-1)       # (S, B)

    ids = lax.broadcasted_iota(jnp.int32, (S, B), 0)
    valid = ids < lenr_ref[...]                                  # (1,B) -> (S,B)
    u = jnp.where(valid, u, -1000000.0)                          # same sentinel as torch
    m = jnp.max(u, axis=0, keepdims=True)
    e = jnp.exp(u - m)
    denom = jnp.sum(e, axis=0, keepdims=True)
    alphas = e * pl.reciprocal(denom, approx=True)               # softmax over seq
    alpha_ref[...] = alphas                                      # (S, B)

    ctx = jnp.sum(alphas[:, :, None] * h, axis=0)                # (B, D)

    # --- Phase 4: Linear -> ReLU -> Linear head (dropout == identity) -------
    hid = jnp.maximum(
        jnp.dot(ctx.astype(BF16), w1_ref[...],
                preferred_element_type=F32) + b1_ref[...], 0.0)
    logits_ref[...] = (jnp.dot(hid, w2_ref[...],
                               preferred_element_type=F32) + b2_ref[...])


# ---------------------------------------------------------------------------
# Wrapper (plain JAX): squeeze, target-word averaging, batch padding, casts
# ---------------------------------------------------------------------------
@jax.jit
def atgru_forward(p, x, x_len, target_word):
    # x: (B, 1, S, EMB), target_word: (B, 1, Tw, EMB), x_len: (B,) int
    x = jnp.squeeze(x, 1)                               # (B, S, EMB)
    tw = jnp.squeeze(target_word, 1)                    # (B, Tw, EMB)
    if tw.shape[1] != EMB:                              # mirrors `size(1) != 1024`
        tw = jnp.sum(tw, axis=1) / tw.shape[1]          # (B, EMB)
    B, S, E = x.shape
    Bp = _round_up(max(B, 8), 8)                        # pad batch to 8 sublanes
    pad = Bp - B

    x_p = jnp.pad(x, ((0, pad), (0, 0), (0, 0)))
    tw_p = jnp.pad(tw, ((0, pad), (0, 0)))
    len_p = jnp.pad(x_len.astype(jnp.int32), ((0, pad),))

    bf = jnp.bfloat16
    x_flat = jnp.transpose(x_p, (1, 0, 2)).reshape(S * Bp, E).astype(bf)
    tw_bf = tw_p.astype(bf)
    len_col = len_p.reshape(Bp, 1)
    len_row = len_p.reshape(1, Bp)

    # Combined fwd+bwd input weights / biases so the hoisted projection is one matmul.
    wih_all = jnp.concatenate([p['wih_f'], p['wih_b']], axis=1).astype(bf)   # (E, 8H)
    b_all = jnp.concatenate([p['b_f'], p['b_b']], axis=1)                    # (1, 8H)

    logits_p, alphas_tm = pl.pallas_call(
        _atgru_fused_kernel,
        out_shape=(jax.ShapeDtypeStruct((Bp, NUM_CLASSES), jnp.float32),
                   jax.ShapeDtypeStruct((S, Bp), jnp.float32)),
        in_specs=[_vmem()] * 16,
        out_specs=(_vmem(), _vmem()),
        scratch_shapes=[
            pltpu.VMEM((S, Bp, 4 * HIDDEN), jnp.float32),   # fwd input gates
            pltpu.VMEM((S, Bp, 4 * HIDDEN), jnp.float32),   # bwd input gates
            pltpu.VMEM((S, Bp, HIDDEN), jnp.float32),       # fwd hidden states
            pltpu.VMEM((S, Bp, HIDDEN), jnp.float32),       # bwd hidden states
        ],
    )(x_flat, tw_bf, len_col, len_row,
      wih_all, p['whh_f'].astype(bf), p['whh_b'].astype(bf), b_all,
      p['W_h'].astype(bf), p['W_z'].astype(bf), p['b_tanh'], p['v'],
      p['W1'].astype(bf), p['b1'], p['W2'], p['b2'])

    logits = logits_p[:B]                               # drop padded batch rows
    alphas = jnp.transpose(alphas_tm)[:B]               # (B, S)
    return logits, alphas


# ---------------------------------------------------------------------------
# Deterministic synthetic parameters (shapes from ATGRU.__init__, scaled init)
# ---------------------------------------------------------------------------
def init_params(key):
    ks = jax.random.split(key, 12)
    H, E, D = HIDDEN, EMB, 2 * HIDDEN

    def u(k, shape, fan):
        s = 1.0 / np.sqrt(fan)
        return jax.random.uniform(k, shape, jnp.float32, -s, s)

    def pos(k, shape, fan):  # torch.rand-style (positive), scaled for stability
        return jax.random.uniform(k, shape, jnp.float32, 0.0, 1.0) / np.sqrt(fan)

    return dict(
        # LSTM weights stored pre-transposed: (in, 4H) / (H, 4H); bias = b_ih + b_hh
        wih_f=u(ks[0], (E, 4 * H), H), whh_f=u(ks[1], (H, 4 * H), H),
        b_f=u(ks[2], (1, 4 * H), H),
        wih_b=u(ks[3], (E, 4 * H), H), whh_b=u(ks[4], (H, 4 * H), H),
        b_b=u(ks[5], (1, 4 * H), H),
        W_h=pos(ks[6], (D, D), D), W_z=pos(ks[7], (D, D), D),
        b_tanh=pos(ks[8], (1, D), D), v=pos(ks[9], (1, D), D),
        W1=u(ks[10], (D, LINEAR), D), b1=jnp.zeros((1, LINEAR), jnp.float32),
        W2=u(ks[11], (LINEAR, NUM_CLASSES), LINEAR),
        b2=jnp.zeros((1, NUM_CLASSES), jnp.float32),
    )


# ---------------------------------------------------------------------------
# Pure-JAX reference (f32, same math, no Pallas) for a sanity check
# ---------------------------------------------------------------------------
def reference_forward(p, x, x_len, target_word):
    hi = functools.partial(jnp.dot, precision=lax.Precision.HIGHEST)
    x = jnp.squeeze(x, 1)
    tw = jnp.squeeze(target_word, 1)
    if tw.shape[1] != EMB:
        tw = jnp.sum(tw, axis=1) / tw.shape[1]
    B, S, _ = x.shape
    H = HIDDEN

    def run_dir(wih, whh, b, reverse):
        def step(carry, inp):
            h, c = carry
            x_t, valid = inp
            g = hi(x_t, wih) + hi(h, whh) + b
            i = jax.nn.sigmoid(g[:, :H]); f = jax.nn.sigmoid(g[:, H:2 * H])
            gg = jnp.tanh(g[:, 2 * H:3 * H]); o = jax.nn.sigmoid(g[:, 3 * H:])
            c_new = f * c + i * gg
            h_new = o * jnp.tanh(c_new)
            return ((jnp.where(valid, h_new, h), jnp.where(valid, c_new, c)),
                    jnp.where(valid, h_new, 0.0))
        x_tm = jnp.transpose(x, (1, 0, 2))
        valid = jnp.arange(S)[:, None, None] < x_len[None, :, None]
        init = (jnp.zeros((B, H), jnp.float32), jnp.zeros((B, H), jnp.float32))
        _, outs = lax.scan(step, init, (x_tm, valid), reverse=reverse)
        return outs

    of = run_dir(p['wih_f'], p['whh_f'], p['b_f'], False)
    ob = run_dir(p['wih_b'], p['whh_b'], p['b_b'], True)
    h = jnp.transpose(jnp.concatenate([of, ob], -1), (1, 0, 2))

    m1 = jnp.einsum('bsd,de->bse', h, p['W_h'], precision=lax.Precision.HIGHEST)
    m2 = hi(tw, p['W_z'])
    st = jnp.tanh(m1 + m2[:, None, :] + p['b_tanh'][None])
    u = jnp.sum(st * p['v'][None], axis=-1)
    valid = jnp.arange(S)[None, :] < x_len[:, None]
    u = jnp.where(valid, u, -1000000.0)
    alphas = jax.nn.softmax(u, axis=1)
    ctx = jnp.einsum('bs,bsd->bd', alphas, h, precision=lax.Precision.HIGHEST)
    lin = jnp.maximum(hi(ctx, p['W1']) + p['b1'], 0.0)
    return hi(lin, p['W2']) + p['b2'], alphas


if __name__ == "__main__":
    B, S, Tw = 4, 8, 3
    key = jax.random.PRNGKey(0)
    kp, kx, kt = jax.random.split(key, 3)

    params = init_params(kp)
    x = jax.random.normal(kx, (B, 1, S, EMB), jnp.float32)
    target_word = jax.random.normal(kt, (B, 1, Tw, EMB), jnp.float32)
    x_len = jnp.array([S, 5, 3, S], dtype=jnp.int32)

    logits, alphas = atgru_forward(params, x, x_len, target_word)
    jax.block_until_ready((logits, alphas))

    ref_logits, ref_alphas = reference_forward(params, x, x_len, target_word)
    assert logits.shape == (B, NUM_CLASSES) and alphas.shape == (B, S)
    assert bool(jnp.all(jnp.isfinite(logits)))
    np.testing.assert_allclose(np.asarray(alphas), np.asarray(ref_alphas),
                               rtol=5e-2, atol=5e-2)
    np.testing.assert_allclose(np.asarray(logits), np.asarray(ref_logits),
                               rtol=5e-2, atol=5e-2)
    print("KERNEL_OK")
</pallas_src>

<mosaic_0001>
module attributes {stable_mosaic.version = 11 : i64} {
  func.func @_atgru_fused_kernel(%arg0: memref<64x256xbf16, #tpu.memory_space<vmem>>, %arg1: memref<8x256xbf16, #tpu.memory_space<vmem>>, %arg2: memref<8x1xi32, #tpu.memory_space<vmem>>, %arg3: memref<1x8xi32, #tpu.memory_space<vmem>>, %arg4: memref<256x1024xbf16, #tpu.memory_space<vmem>>, %arg5: memref<128x512xbf16, #tpu.memory_space<vmem>>, %arg6: memref<128x512xbf16, #tpu.memory_space<vmem>>, %arg7: memref<1x1024xf32, #tpu.memory_space<vmem>>, %arg8: memref<256x256xbf16, #tpu.memory_space<vmem>>, %arg9: memref<256x256xbf16, #tpu.memory_space<vmem>>, %arg10: memref<1x256xf32, #tpu.memory_space<vmem>>, %arg11: memref<1x256xf32, #tpu.memory_space<vmem>>, %arg12: memref<256x128xbf16, #tpu.memory_space<vmem>>, %arg13: memref<1x128xf32, #tpu.memory_space<vmem>>, %arg14: memref<128x3xf32, #tpu.memory_space<vmem>>, %arg15: memref<1x3xf32, #tpu.memory_space<vmem>>, %arg16: memref<8x3xf32, #tpu.memory_space<vmem>>, %arg17: memref<8x8xf32, #tpu.memory_space<vmem>>, %arg18: memref<8x8x512xf32, #tpu.memory_space<vmem>>, %arg19: memref<8x8x512xf32, #tpu.memory_space<vmem>>, %arg20: memref<8x8x128xf32, #tpu.memory_space<vmem>>, %arg21: memref<8x8x128xf32, #tpu.memory_space<vmem>>) attributes {dimension_semantics = [], scalar_prefetch = 0 : i64, scratch_operands = 4 : i64, tpu.core_type = #tpu.core_type<tc>} {
    %c0 = arith.constant 0 : index
    %c0_0 = arith.constant 0 : index
    %0 = vector.load %arg2[%c0, %c0_0] : memref<8x1xi32, #tpu.memory_space<vmem>>, vector<8x1xi32>
    %c0_1 = arith.constant 0 : index
    %c0_2 = arith.constant 0 : index
    %1 = vector.load %arg0[%c0_1, %c0_2] : memref<64x256xbf16, #tpu.memory_space<vmem>>, vector<64x256xbf16>
    %c0_3 = arith.constant 0 : index
    %c0_4 = arith.constant 0 : index
    %2 = vector.load %arg4[%c0_3, %c0_4] : memref<256x1024xbf16, #tpu.memory_space<vmem>>, vector<256x1024xbf16>
    %cst = arith.constant dense<0.000000e+00> : vector<64x1024xf32>
    %3 = tpu.matmul %1, %2, %cst {dimension_numbers = #tpu.dot_dimension_numbers<[1], [0], [0], [1], [0, 0, 1, 1], [], []>} : vector<64x256xbf16>, vector<256x1024xbf16>, vector<64x1024xf32> -> vector<64x1024xf32>
    %c0_5 = arith.constant 0 : index
    %c0_6 = arith.constant 0 : index
    %4 = vector.load %arg7[%c0_5, %c0_6] : memref<1x1024xf32, #tpu.memory_space<vmem>>, vector<1x1024xf32>
    %5 = vector.broadcast %4 : vector<1x1024xf32> to vector<64x1024xf32>
    %6 = arith.addf %3, %5 : vector<64x1024xf32>
    %7 = vector.extract_strided_slice %6 {offsets = [0, 0], sizes = [64, 512], strides = [1, 1]} : vector<64x1024xf32> to vector<64x512xf32>
    %8 = vector.shape_cast %7 : vector<64x512xf32> to vector<8x8x512xf32>
    %c0_7 = arith.constant 0 : index
    %c0_8 = arith.constant 0 : index
    %c0_9 = arith.constant 0 : index
    %9 = vector.load %arg18[%c0_7, %c0_8, %c0_9] : memref<8x8x512xf32, #tpu.memory_space<vmem>>, vector<8x8x512xf32>
    tpu.vector_store %arg18[%c0_7, %c0_8, %c0_9], %8 {strides = array<i32>} : memref<8x8x512xf32, #tpu.memory_space<vmem>>, vector<8x8x512xf32>,
    %10 = vector.extract_strided_slice %6 {offsets = [0, 512], sizes = [64, 512], strides = [1, 1]} : vector<64x1024xf32> to vector<64x512xf32>
    %11 = vector.shape_cast %10 : vector<64x512xf32> to vector<8x8x512xf32>
    %c0_10 = arith.constant 0 : index
    %c0_11 = arith.constant 0 : index
    %c0_12 = arith.constant 0 : index
    %12 = vector.load %arg19[%c0_10, %c0_11, %c0_12] : memref<8x8x512xf32, #tpu.memory_space<vmem>>, vector<8x8x512xf32>
    tpu.vector_store %arg19[%c0_10, %c0_11, %c0_12], %11 {strides = array<i32>} : memref<8x8x512xf32, #tpu.memory_space<vmem>>, vector<8x8x512xf32>,
    %c0_13 = arith.constant 0 : index
    %c0_14 = arith.constant 0 : index
    %13 = vector.load %arg5[%c0_13, %c0_14] : memref<128x512xbf16, #tpu.memory_space<vmem>>, vector<128x512xbf16>
    %c0_15 = arith.constant 0 : index
    %c0_16 = arith.constant 0 : index
    %14 = vector.load %arg6[%c0_15, %c0_16] : memref<128x512xbf16, #tpu.memory_space<vmem>>, vector<128x512xbf16>
    %cst_17 = arith.constant 0.000000e+00 : f32
    %15 = vector.broadcast %cst_17 : f32 to vector<8x128xf32>
    %c0_i32 = arith.constant 0 : i32
    %c7_i32 = arith.constant 7 : i32
    %16 = arith.subi %c7_i32, %c0_i32 : i32
    %17 = arith.index_cast %c0_i32 : i32 to index
    %c0_18 = arith.constant 0 : index
    %c0_19 = arith.constant 0 : index
    %18 = vector.load %arg18[%17, %c0_18, %c0_19] : memref<8x8x512xf32, #tpu.memory_space<vmem>>, vector<1x8x512xf32>
    %19 = vector.shape_cast %18 : vector<1x8x512xf32> to vector<8x512xf32>
    %20 = arith.truncf %15 : vector<8x128xf32> to vector<8x128xbf16>
    %cst_20 = arith.constant dense<0.000000e+00> : vector<8x512xf32>
    %21 = tpu.matmul %20, %13, %cst_20 {dimension_numbers = #tpu.dot_dimension_numbers<[1], [0], [0], [1], [0, 0, 1, 1], [], []>} : vector<8x128xbf16>, vector<128x512xbf16>, vector<8x512xf32> -> vector<8x512xf32>
    %22 = arith.addf %19, %21 : vector<8x512xf32>
    %23 = arith.index_cast %16 : i32 to index
    %c0_21 = arith.constant 0 : index
    %c0_22 = arith.constant 0 : index
    %24 = vector.load %arg19[%23, %c0_21, %c0_22] : memref<8x8x512xf32, #tpu.memory_space<vmem>>, vector<1x8x512xf32>
    %25 = vector.shape_cast %24 : vector<1x8x512xf32> to vector<8x512xf32>
    %26 = arith.truncf %15 : vector<8x128xf32> to vector<8x128xbf16>
    %cst_23 = arith.constant dense<0.000000e+00> : vector<8x512xf32>
    %27 = tpu.matmul %26, %14, %cst_23 {dimension_numbers = #tpu.dot_dimension_numbers<[1], [0], [0], [1], [0, 0, 1, 1], [], []>} : vector<8x128xbf16>, vector<128x512xbf16>, vector<8x512xf32> -> vector<8x512xf32>
    %28 = arith.addf %25, %27 : vector<8x512xf32>
    %29 = vector.extract_strided_slice %22 {offsets = [0, 0], sizes = [8, 128], strides = [1, 1]} : vector<8x512xf32> to vector<8x128xf32>
    %30 = arith.negf %29 : vector<8x128xf32>
    %31 = math.exp %30 : vector<8x128xf32>
    %cst_24 = arith.constant 1.000000e+00 : f32
    %32 = vector.broadcast %cst_24 : f32 to vector<8x128xf32>
    %33 = arith.addf %32, %31 : vector<8x128xf32>
    %34 = arith.divf %32, %33 : vector<8x128xf32>
    %35 = vector.extract_strided_slice %22 {offsets = [0, 128], sizes = [8, 128], strides = [1, 1]} : vector<8x512xf32> to vector<8x128xf32>
    %36 = arith.negf %35 : vector<8x128xf32>
    %37 = math.exp %36 : vector<8x128xf32>
    %cst_25 = arith.constant 1.000000e+00 : f32
    %38 = vector.broadcast %cst_25 : f32 to vector<8x128xf32>
    %39 = arith.addf %38, %37 : vector<8x128xf32>
    %40 = arith.divf %38, %39 : vector<8x128xf32>
    %41 = vector.extract_strided_slice %22 {offsets = [0, 256], sizes = [8, 128], strides = [1, 1]} : vector<8x512xf32> to vector<8x128xf32>
    %42 = math.tanh %41 : vector<8x128xf32>
    %43 = vector.extract_strided_slice %22 {offsets = [0, 384], sizes = [8, 128], strides = [1, 1]} : vector<8x512xf32> to vector<8x128xf32>
    %44 = arith.negf %43 : vector<8x128xf32>
    %45 = math.exp %44 : vector<8x128xf32>
    %cst_26 = arith.constant 1.000000e+00 : f32
    %46 = vector.broadcast %cst_26 : f32 to vector<8x128xf32>
    %47 = arith.addf %46, %45 : vector<8x128xf32>
    %48 = arith.divf %46, %47 : vector<8x128xf32>
    %49 = arith.mulf %40, %15 : vector<8x128xf32>
    %50 = arith.mulf %34, %42 : vector<8x128xf32>
    %51 = arith.addf %49, %50 : vector<8x128xf32>
    %52 = math.tanh %51 : vector<8x128xf32>
    %53 = arith.mulf %48, %52 : vector<8x128xf32>
    %54 = vector.extract_strided_slice %28 {offsets = [0, 0], sizes = [8, 128], strides = [1, 1]} : vector<8x512xf32> to vector<8x128xf32>
    %55 = arith.negf %54 : vector<8x128xf32>
    %56 = math.exp %55 : vector<8x128xf32>
    %cst_27 = arith.constant 1.000000e+00 : f32
    %57 = vector.broadcast %cst_27 : f32 to vector<8x128xf32>
    %58 = arith.addf %57, %56 : vector<8x128xf32>
    %59 = arith.divf %57, %58 : vector<8x128xf32>
    %60 = vector.extract_strided_slice %28 {offsets = [0, 128], sizes = [8, 128], strides = [1, 1]} : vector<8x512xf32> to vector<8x128xf32>
    %61 = arith.negf %60 : vector<8x128xf32>
    %62 = math.exp %61 : vector<8x128xf32>
    %cst_28 = arith.constant 1.000000e+00 : f32
    %63 = vector.broadcast %cst_28 : f32 to vector<8x128xf32>
    %64 = arith.addf %63, %62 : vector<8x128xf32>
    %65 = arith.divf %63, %64 : vector<8x128xf32>
    %66 = vector.extract_strided_slice %28 {offsets = [0, 256], sizes = [8, 128], strides = [1, 1]} : vector<8x512xf32> to vector<8x128xf32>
    %67 = math.tanh %66 : vector<8x128xf32>
    %68 = vector.extract_strided_slice %28 {offsets = [0, 384], sizes = [8, 128], strides = [1, 1]} : vector<8x512xf32> to vector<8x128xf32>
    %69 = arith.negf %68 : vector<8x128xf32>
    %70 = math.exp %69 : vector<8x128xf32>
    %cst_29 = arith.constant 1.000000e+00 : f32
    %71 = vector.broadcast %cst_29 : f32 to vector<8x128xf32>
    %72 = arith.addf %71, %70 : vector<8x128xf32>
    %73 = arith.divf %71, %72 : vector<8x128xf32>
    %74 = arith.mulf %65, %15 : vector<8x128xf32>
    %75 = arith.mulf %59, %67 : vector<8x128xf32>
    %76 = arith.addf %74, %75 : vector<8x128xf32>
    %77 = math.tanh %76 : vector<8x128xf32>
    %78 = arith.mulf %73, %77 : vector<8x128xf32>
    %79 = vector.broadcast %c0_i32 : i32 to vector<8x1xi32>
    %80 = arith.cmpi sgt, %0, %79 : vector<8x1xi32>
    %81 = vector.broadcast %16 : i32 to vector<8x1xi32>
    %82 = arith.cmpi sgt, %0, %81 : vector<8x1xi32>
    %cst_30 = arith.constant 0.000000e+00 : f32
    %83 = vector.shape_cast %80 : vector<8x1xi1> to vector<8x1xi1>
    %84 = vector.broadcast %83 : vector<8x1xi1> to vector<8x128xi1>
    %85 = vector.broadcast %cst_30 : f32 to vector<8x128xf32>
    %86 = arith.select %84, %53, %85 : vector<8x128xi1>, vector<8x128xf32>
    %87 = arith.index_cast %c0_i32 : i32 to index
    %c0_31 = arith.constant 0 : index
    %c0_32 = arith.constant 0 : index
    %88 = vector.load %arg20[%87, %c0_31, %c0_32] : memref<8x8x128xf32, #tpu.memory_space<vmem>>, vector<1x8x128xf32>
    %89 = vector.shape_cast %88 : vector<1x8x128xf32> to vector<8x128xf32>
    %90 = vector.shape_cast %86 : vector<8x128xf32> to vector<1x8x128xf32>
    tpu.vector_store %arg20[%87, %c0_31, %c0_32], %90 {strides = array<i32>} : memref<8x8x128xf32, #tpu.memory_space<vmem>>, vector<1x8x128xf32>,
    %cst_33 = arith.constant 0.000000e+00 : f32
    %91 = vector.shape_cast %82 : vector<8x1xi1> to vector<8x1xi1>
    %92 = vector.broadcast %91 : vector<8x1xi1> to vector<8x128xi1>
    %93 = vector.broadcast %cst_33 : f32 to vector<8x128xf32>
    %94 = arith.select %92, %78, %93 : vector<8x128xi1>, vector<8x128xf32>
    %95 = arith.index_cast %16 : i32 to index
    %c0_34 = arith.constant 0 : index
    %c0_35 = arith.constant 0 : index
    %96 = vector.load %arg21[%95, %c0_34, %c0_35] : memref<8x8x128xf32, #tpu.memory_space<vmem>>, vector<1x8x128xf32>
    %97 = vector.shape_cast %96 : vector<1x8x128xf32> to vector<8x128xf32>
    %98 = vector.shape_cast %94 : vector<8x128xf32> to vector<1x8x128xf32>
    tpu.vector_store %arg21[%95, %c0_34, %c0_35], %98 {strides = array<i32>} : memref<8x8x128xf32, #tpu.memory_space<vmem>>, vector<1x8x128xf32>,
    %99 = vector.shape_cast %80 : vector<8x1xi1> to vector<8x1xi1>
    %100 = vector.broadcast %99 : vector<8x1xi1> to vector<8x128xi1>
    %101 = arith.select %100, %53, %15 : vector<8x128xi1>, vector<8x128xf32>
    %102 = vector.shape_cast %80 : vector<8x1xi1> to vector<8x1xi1>
    %103 = vector.broadcast %102 : vector<8x1xi1> to vector<8x128xi1>
    %104 = arith.select %103, %51, %15 : vector<8x128xi1>, vector<8x128xf32>
    %105 = vector.shape_cast %82 : vector<8x1xi1> to vector<8x1xi1>
    %106 = vector.broadcast %105 : vector<8x1xi1> to vector<8x128xi1>
    %107 = arith.select %106, %78, %15 : vector<8x128xi1>, vector<8x128xf32>
    %108 = vector.shape_cast %82 : vector<8x1xi1> to vector<8x1xi1>
    %109 = vector.broadcast %108 : vector<8x1xi1> to vector<8x128xi1>
    %110 = arith.select %109, %76, %15 : vector<8x128xi1>, vector<8x128xf32>
    %c1_i32 = arith.constant 1 : i32
    %c7_i32_36 = arith.constant 7 : i32
    %111 = arith.subi %c7_i32_36, %c1_i32 : i32
    %112 = arith.index_cast %c1_i32 : i32 to index
    %c0_37 = arith.constant 0 : index
    %c0_38 = arith.constant 0 : index
    %113 = vector.load %arg18[%112, %c0_37, %c0_38] : memref<8x8x512xf32, #tpu.memory_space<vmem>>, vector<1x8x512xf32>
    %114 = vector.shape_cast %113 : vector<1x8x512xf32> to vector<8x512xf32>
    %115 = arith.truncf %101 : vector<8x128xf32> to vector<8x128xbf16>
    %cst_39 = arith.constant dense<0.000000e+00> : vector<8x512xf32>
    %116 = tpu.matmul %115, %13, %cst_39 {dimension_numbers = #tpu.dot_dimension_numbers<[1], [0], [0], [1], [0, 0, 1, 1], [], []>} : vector<8x128xbf16>, vector<128x512xbf16>, vector<8x512xf32> -> vector<8x512xf32>
    %117 = arith.addf %114, %116 : vector<8x512xf32>
    %118 = arith.index_cast %111 : i32 to index
    %c0_40 = arith.constant 0 : index
    %c0_41 = arith.constant 0 : index
    %119 = vector.load %arg19[%118, %c0_40, %c0_41] : memref<8x8x512xf32, #tpu.memory_space<vmem>>, vector<1x8x512xf32>
    %120 = vector.shape_cast %119 : vector<1x8x512xf32> to vector<8x512xf32>
    %121 = arith.truncf %107 : vector<8x128xf32> to vector<8x128xbf16>
    %cst_42 = arith.constant dense<0.000000e+00> : vector<8x512xf32>
    %122 = tpu.matmul %121, %14, %cst_42 {dimension_numbers = #tpu.dot_dimension_numbers<[1], [0], [0], [1], [0, 0, 1, 1], [], []>} : vector<8x128xbf16>, vector<128x512xbf16>, vector<8x512xf32> -> vector<8x512xf32>
    %123 = arith.addf %120, %122 : vector<8x512xf32>
    %124 = vector.extract_strided_slice %117 {offsets = [0, 0], sizes = [8, 128], strides = [1, 1]} : vector<8x512xf32> to vector<8x128xf32>
    %125 = arith.negf %124 : vector<8x128xf32>
    %126 = math.exp %125 : vector<8x128xf32>
    %cst_43 = arith.constant 1.000000e+00 : f32
    %127 = vector.broadcast %cst_43 : f32 to vector<8x128xf32>
    %128 = arith.addf %127, %126 : vector<8x128xf32>
    %129 = arith.divf %127, %128 : vector<8x128xf32>
    %130 = vector.extract_strided_slice %117 {offsets = [0, 128], sizes = [8, 128], strides = [1, 1]} : vector<8x512xf32> to vector<8x128xf32>
    %131 = arith.negf %130 : vector<8x128xf32>
    %132 = math.exp %131 : vector<8x128xf32>
    %cst_44 = arith.constant 1.000000e+00 : f32
    %133 = vector.broadcast %cst_44 : f32 to vector<8x128xf32>
    %134 = arith.addf %133, %132 : vector<8x128xf32>
    %135 = arith.divf %133, %134 : vector<8x128xf32>
    %136 = vector.extract_strided_slice %117 {offsets = [0, 256], sizes = [8, 128], strides = [1, 1]} : vector<8x512xf32> to vector<8x128xf32>
    %137 = math.tanh %136 : vector<8x128xf32>
    %138 = vector.extract_strided_slice %117 {offsets = [0, 384], sizes = [8, 128], strides = [1, 1]} : vector<8x512xf32> to vector<8x128xf32>
    %139 = arith.negf %138 : vector<8x128xf32>
    %140 = math.exp %139 : vector<8x128xf32>
    %cst_45 = arith.constant 1.000000e+00 : f32
    %141 = vector.broadcast %cst_45 : f32 to vector<8x128xf32>
    %142 = arith.addf %141, %140 : vector<8x128xf32>
    %143 = arith.divf %141, %142 : vector<8x128xf32>
    %144 = arith.mulf %135, %104 : vector<8x128xf32>
    %145 = arith.mulf %129, %137 : vector<8x128xf32>
    %146 = arith.addf %144, %145 : vector<8x128xf32>
    %147 = math.tanh %146 : vector<8x128xf32>
    %148 = arith.mulf %143, %147 : vector<8x128xf32>
    %149 = vector.extract_strided_slice %123 {offsets = [0, 0], sizes = [8, 128], strides = [1, 1]} : vector<8x512xf32> to vector<8x128xf32>
    %150 = arith.negf %149 : vector<8x128xf32>
    %151 = math.exp %150 : vector<8x128xf32>
    %cst_46 = arith.constant 1.000000e+00 : f32
    %152 = vector.broadcast %cst_46 : f32 to vector<8x128xf32>
    %153 = arith.addf %152, %151 : vector<8x128xf32>
    %154 = arith.divf %152, %153 : vector<8x128xf32>
    %155 = vector.extract_strided_slice %123 {offsets = [0, 128], sizes = [8, 128], strides = [1, 1]} : vector<8x512xf32> to vector<8x128xf32>
    %156 = arith.negf %155 : vector<8x128xf32>
    %157 = math.exp %156 : vector<8x128xf32>
    %cst_47 = arith.constant 1.000000e+00 : f32
    %158 = vector.broadcast %cst_47 : f32 to vector<8x128xf32>
    %159 = arith.addf %158, %157 : vector<8x128xf32>
    %160 = arith.divf %158, %159 : vector<8x128xf32>
    %161 = vector.extract_strided_slice %123 {offsets = [0, 256], sizes = [8, 128], strides = [1, 1]} : vector<8x512xf32> to vector<8x128xf32>
    %162 = math.tanh %161 : vector<8x128xf32>
    %163 = vector.extract_strided_slice %123 {offsets = [0, 384], sizes = [8, 128], strides = [1, 1]} : vector<8x512xf32> to vector<8x128xf32>
    %164 = arith.negf %163 : vector<8x128xf32>
    %165 = math.exp %164 : vector<8x128xf32>
    %cst_48 = arith.constant 1.000000e+00 : f32
    %166 = vector.broadcast %cst_48 : f32 to vector<8x128xf32>
    %167 = arith.addf %166, %165 : vector<8x128xf32>
    %168 = arith.divf %166, %167 : vector<8x128xf32>
    %169 = arith.mulf %160, %110 : vector<8x128xf32>
    %170 = arith.mulf %154, %162 : vector<8x128xf32>
    %171 = arith.addf %169, %170 : vector<8x128xf32>
    %172 = math.tanh %171 : vector<8x128xf32>
    %173 = arith.mulf %168, %172 : vector<8x128xf32>
    %174 = vector.broadcast %c1_i32 : i32 to vector<8x1xi32>
    %175 = arith.cmpi sgt, %0, %174 : vector<8x1xi32>
    %176 = vector.broadcast %111 : i32 to vector<8x1xi32>
    %177 = arith.cmpi sgt, %0, %176 : vector<8x1xi32>
    %cst_49 = arith.constant 0.000000e+00 : f32
    %178 = vector.shape_cast %175 : vector<8x1xi1> to vector<8x1xi1>
    %179 = vector.broadcast %178 : vector<8x1xi1> to vector<8x128xi1>
    %180 = vector.broadcast %cst_49 : f32 to vector<8x128xf32>
    %181 = arith.select %179, %148, %180 : vector<8x128xi1>, vector<8x128xf32>
    %182 = arith.index_cast %c1_i32 : i32 to index
    %c0_50 = arith.constant 0 : index
    %c0_51 = arith.constant 0 : index
    %183 = vector.load %arg20[%182, %c0_50, %c0_51] : memref<8x8x128xf32, #tpu.memory_space<vmem>>, vector<1x8x128xf32>
    %184 = vector.shape_cast %183 : vector<1x8x128xf32> to vector<8x128xf32>
    %185 = vector.shape_cast %181 : vector<8x128xf32> to vector<1x8x128xf32>
    tpu.vector_store %arg20[%182, %c0_50, %c0_51], %185 {strides = array<i32>} : memref<8x8x128xf32, #tpu.memory_space<vmem>>, vector<1x8x128xf32>,
    %cst_52 = arith.constant 0.000000e+00 : f32
    %186 = vector.shape_cast %177 : vector<8x1xi1> to vector<8x1xi1>
    %187 = vector.broadcast %186 : vector<8x1xi1> to vector<8x128xi1>
    %188 = vector.broadcast %cst_52 : f32 to vector<8x128xf32>
    %189 = arith.select %187, %173, %188 : vector<8x128xi1>, vector<8x128xf32>
    %190 = arith.index_cast %111 : i32 to index
    %c0_53 = arith.constant 0 : index
    %c0_54 = arith.constant 0 : index
    %191 = vector.load %arg21[%190, %c0_53, %c0_54] : memref<8x8x128xf32, #tpu.memory_space<vmem>>, vector<1x8x128xf32>
    %192 = vector.shape_cast %191 : vector<1x8x128xf32> to vector<8x128xf32>
    %193 = vector.shape_cast %189 : vector<8x128xf32> to vector<1x8x128xf32>
    tpu.vector_store %arg21[%190, %c0_53, %c0_54], %193 {strides = array<i32>} : memref<8x8x128xf32, #tpu.memory_space<vmem>>, vector<1x8x128xf32>,
    %194 = vector.shape_cast %175 : vector<8x1xi1> to vector<8x1xi1>
    %195 = vector.broadcast %194 : vector<8x1xi1> to vector<8x128xi1>
    %196 = arith.select %195, %148, %101 : vector<8x128xi1>, vector<8x128xf32>
    %197 = vector.shape_cast %175 : vector<8x1xi1> to vector<8x1xi1>
    %198 = vector.broadcast %197 : vector<8x1xi1> to vector<8x128xi1>
    %199 = arith.select %198, %146, %104 : vector<8x128xi1>, vector<8x128xf32>
    %200 = vector.shape_cast %177 : vector<8x1xi1> to vector<8x1xi1>
    %201 = vector.broadcast %200 : vector<8x1xi1> to vector<8x128xi1>
    %202 = arith.select %201, %173, %107 : vector<8x128xi1>, vector<8x128xf32>
    %203 = vector.shape_cast %177 : vector<8x1xi1> to vector<8x1xi1>
    %204 = vector.broadcast %203 : vector<8x1xi1> to vector<8x128xi1>
    %205 = arith.select %204, %171, %110 : vector<8x128xi1>, vector<8x128xf32>
    %c2_i32 = arith.constant 2 : i32
    %c7_i32_55 = arith.constant 7 : i32
    %206 = arith.subi %c7_i32_55, %c2_i32 : i32
    %207 = arith.index_cast %c2_i32 : i32 to index
    %c0_56 = arith.constant 0 : index
    %c0_57 = arith.constant 0 : index
    %208 = vector.load %arg18[%207, %c0_56, %c0_57] : memref<8x8x512xf32, #tpu.memory_space<vmem>>, vector<1x8x512xf32>
    %209 = vector.shape_cast %208 : vector<1x8x512xf32> to vector<8x512xf32>
    %210 = arith.truncf %196 : vector<8x128xf32> to vector<8x128xbf16>
    %cst_58 = arith.constant dense<0.000000e+00> : vector<8x512xf32>
    %211 = tpu.matmul %210, %13, %cst_58 {dimension_numbers = #tpu.dot_dimension_numbers<[1], [0], [0], [1], [0, 0, 1, 1], [], []>} : vector<8x128xbf16>, vector<128x512xbf16>, vector<8x512xf32> -> vector<8x512xf32>
    %212 = arith.addf %209, %211 : vector<8x512xf32>
    %213 = arith.index_cast %206 : i32 to index
    %c0_59 = arith.constant 0 : index
    %c0_60 = arith.constant 0 : index
    %214 = vector.load %arg19[%213, %c0_59, %c0_60] : memref<8x8x512xf32, #tpu.memory_space<vmem>>, vector<1x8x512xf32>
    %215 = vector.shape_cast %214 : vector<1x8x512xf32> to vector<8x512xf32>
    %216 = arith.truncf %202 : vector<8x128xf32> to vector<8x128xbf16>
    %cst_61 = arith.constant dense<0.000000e+00> : vector<8x512xf32>
    %217 = tpu.matmul %216, %14, %cst_61 {dimension_numbers = #tpu.dot_dimension_numbers<[1], [0], [0], [1], [0, 0, 1, 1], [], []>} : vector<8x128xbf16>, vector<128x512xbf16>, vector<8x512xf32> -> vector<8x512xf32>
    %218 = arith.addf %215, %217 : vector<8x512xf32>
    %219 = vector.extract_strided_slice %212 {offsets = [0, 0], sizes = [8, 128], strides = [1, 1]} : vector<8x512xf32> to vector<8x128xf32>
    %220 = arith.negf %219 : vector<8x128xf32>
    %221 = math.exp %220 : vector<8x128xf32>
    %cst_62 = arith.constant 1.000000e+00 : f32
    %222 = vector.broadcast %cst_62 : f32 to vector<8x128xf32>
    %223 = arith.addf %222, %221 : vector<8x128xf32>
    %224 = arith.divf %222, %223 : vector<8x128xf32>
    %225 = vector.extract_strided_slice %212 {offsets = [0, 128], sizes = [8, 128], strides = [1, 1]} : vector<8x512xf32> to vector<8x128xf32>
    %226 = arith.negf %225 : vector<8x128xf32>
    %227 = math.exp %226 : vector<8x128xf32>
    %cst_63 = arith.constant 1.000000e+00 : f32
    %228 = vector.broadcast %cst_63 : f32 to vector<8x128xf32>
    %229 = arith.addf %228, %227 : vector<8x128xf32>
    %230 = arith.divf %228, %229 : vector<8x128xf32>
    %231 = vector.extract_strided_slice %212 {offsets = [0, 256], sizes = [8, 128], strides = [1, 1]} : vector<8x512xf32> to vector<8x128xf32>
    %232 = math.tanh %231 : vector<8x128xf32>
    %233 = vector.extract_strided_slice %212 {offsets = [0, 384], sizes = [8, 128], strides = [1, 1]} : vector<8x512xf32> to vector<8x128xf32>
    %234 = arith.negf %233 : vector<8x128xf32>
    %235 = math.exp %234 : vector<8x128xf32>
    %cst_64 = arith.constant 1.000000e+00 : f32
    %236 = vector.broadcast %cst_64 : f32 to vector<8x128xf32>
    %237 = arith.addf %236, %235 : vector<8x128xf32>
    %238 = arith.divf %236, %237 : vector<8x128xf32>
    %239 = arith.mulf %230, %199 : vector<8x128xf32>
    %240 = arith.mulf %224, %232 : vector<8x128xf32>
    %241 = arith.addf %239, %240 : vector<8x128xf32>
    %242 = math.tanh %241 : vector<8x128xf32>
    %243 = arith.mulf %238, %242 : vector<8x128xf32>
    %244 = vector.extract_strided_slice %218 {offsets = [0, 0], sizes = [8, 128], strides = [1, 1]} : vector<8x512xf32> to vector<8x128xf32>
    %245 = arith.negf %244 : vector<8x128xf32>
    %246 = math.exp %245 : vector<8x128xf32>
    %cst_65 = arith.constant 1.000000e+00 : f32
    %247 = vector.broadcast %cst_65 : f32 to vector<8x128xf32>
    %248 = arith.addf %247, %246 : vector<8x128xf32>
    %249 = arith.divf %247, %248 : vector<8x128xf32>
    %250 = vector.extract_strided_slice %218 {offsets = [0, 128], sizes = [8, 128], strides = [1, 1]} : vector<8x512xf32> to vector<8x128xf32>
    %251 = arith.negf %250 : vector<8x128xf32>
    %252 = math.exp %251 : vector<8x128xf32>
    %cst_66 = arith.constant 1.000000e+00 : f32
    %253 = vector.broadcast %cst_66 : f32 to vector<8x128xf32>
    %254 = arith.addf %253, %252 : vector<8x128xf32>
    %255 = arith.divf %253, %254 : vector<8x128xf32>
    %256 = vector.extract_strided_slice %218 {offsets = [0, 256], sizes = [8, 128], strides = [1, 1]} : vector<8x512xf32> to vector<8x128xf32>
    %257 = math.tanh %256 : vector<8x128xf32>
    %258 = vector.extract_strided_slice %218 {offsets = [0, 384], sizes = [8, 128], strides = [1, 1]} : vector<8x512xf32> to vector<8x128xf32>
    %259 = arith.negf %258 : vector<8x128xf32>
    %260 = math.exp %259 : vector<8x128xf32>
    %cst_67 = arith.constant 1.000000e+00 : f32
    %261 = vector.broadcast %cst_67 : f32 to vector<8x128xf32>
    %262 = arith.addf %261, %260 : vector<8x128xf32>
    %263 = arith.divf %261, %262 : vector<8x128xf32>
    %264 = arith.mulf %255, %205 : vector<8x128xf32>
    %265 = arith.mulf %249, %257 : vector<8x128xf32>
    %266 = arith.addf %264, %265 : vector<8x128xf32>
    %267 = math.tanh %266 : vector<8x128xf32>
    %268 = arith.mulf %263, %267 : vector<8x128xf32>
    %269 = vector.broadcast %c2_i32 : i32 to vector<8x1xi32>
    %270 = arith.cmpi sgt, %0, %269 : vector<8x1xi32>
    %271 = vector.broadcast %206 : i32 to vector<8x1xi32>
    %272 = arith.cmpi sgt, %0, %271 : vector<8x1xi32>
    %cst_68 = arith.constant 0.000000e+00 : f32
    %273 = vector.shape_cast %270 : vector<8x1xi1> to vector<8x1xi1>
    %274 = vector.broadcast %273 : vector<8x1xi1> to vector<8x128xi1>
    %275 = vector.broadcast %cst_68 : f32 to vector<8x128xf32>
    %276 = arith.select %274, %243, %275 : vector<8x128xi1>, vector<8x128xf32>
    %277 = arith.index_cast %c2_i32 : i32 to index
    %c0_69 = arith.constant 0 : index
    %c0_70 = arith.constant 0 : index
    %278 = vector.load %arg20[%277, %c0_69, %c0_70] : memref<8x8x128xf32, #tpu.memory_space<vmem>>, vector<1x8x128xf32>
    %279 = vector.shape_cast %278 : vector<1x8x128xf32> to vector<8x128xf32>
    %280 = vector.shape_cast %276 : vector<8x128xf32> to vector<1x8x128xf32>
    tpu.vector_store %arg20[%277, %c0_69, %c0_70], %280 {strides = array<i32>} : memref<8x8x128xf32, #tpu.memory_space<vmem>>, vector<1x8x128xf32>,
    %cst_71 = arith.constant 0.000000e+00 : f32
    %281 = vector.shape_cast %272 : vector<8x1xi1> to vector<8x1xi1>
    %282 = vector.broadcast %281 : vector<8x1xi1> to vector<8x128xi1>
    %283 = vector.broadcast %cst_71 : f32 to vector<8x128xf32>
    %284 = arith.select %282, %268, %283 : vector<8x128xi1>, vector<8x128xf32>
    %285 = arith.index_cast %206 : i32 to index
    %c0_72 = arith.constant 0 : index
    %c0_73 = arith.constant 0 : index
    %286 = vector.load %arg21[%285, %c0_72, %c0_73] : memref<8x8x128xf32, #tpu.memory_space<vmem>>, vector<1x8x128xf32>
    %287 = vector.shape_cast %286 : vector<1x8x128xf32> to vector<8x128xf32>
    %288 = vector.shape_cast %284 : vector<8x128xf32> to vector<1x8x128xf32>
    tpu.vector_store %arg21[%285, %c0_72, %c0_73], %288 {strides = array<i32>} : memref<8x8x128xf32, #tpu.memory_space<vmem>>, vector<1x8x128xf32>,
    %289 = vector.shape_cast %270 : vector<8x1xi1> to vector<8x1xi1>
    %290 = vector.broadcast %289 : vector<8x1xi1> to vector<8x128xi1>
    %291 = arith.select %290, %243, %196 : vector<8x128xi1>, vector<8x128xf32>
    %292 = vector.shape_cast %270 : vector<8x1xi1> to vector<8x1xi1>
    %293 = vector.broadcast %292 : vector<8x1xi1> to vector<8x128xi1>
    %294 = arith.select %293, %241, %199 : vector<8x128xi1>, vector<8x128xf32>
    %295 = vector.shape_cast %272 : vector<8x1xi1> to vector<8x1xi1>
    %296 = vector.broadcast %295 : vector<8x1xi1> to vector<8x128xi1>
    %297 = arith.select %296, %268, %202 : vector<8x128xi1>, vector<8x128xf32>
    %298 = vector.shape_cast %272 : vector<8x1xi1> to vector<8x1xi1>
    %299 = vector.broadcast %298 : vector<8x1xi1> to vector<8x128xi1>
    %300 = arith.select %299, %266, %205 : vector<8x128xi1>, vector<8x128xf32>
    %c3_i32 = arith.constant 3 : i32
    %c7_i32_74 = arith.constant 7 : i32
    %301 = arith.subi %c7_i32_74, %c3_i32 : i32
    %302 = arith.index_cast %c3_i32 : i32 to index
    %c0_75 = arith.constant 0 : index
    %c0_76 = arith.constant 0 : index
    %303 = vector.load %arg18[%302, %c0_75, %c0_76] : memref<8x8x512xf32, #tpu.memory_space<vmem>>, vector<1x8x512xf32>
    %304 = vector.shape_cast %303 : vector<1x8x512xf32> to vector<8x512xf32>
    %305 = arith.truncf %291 : vector<8x128xf32> to vector<8x128xbf16>
    %cst_77 = arith.constant dense<0.000000e+00> : vector<8x512xf32>
    %306 = tpu.matmul %305, %13, %cst_77 {dimension_numbers = #tpu.dot_dimension_numbers<[1], [0], [0], [1], [0, 0, 1, 1], [], []>} : vector<8x128xbf16>, vector<128x512xbf16>, vector<8x512xf32> -> vector<8x512xf32>
    %307 = arith.addf %304, %306 : vector<8x512xf32>
    %308 = arith.index_cast %301 : i32 to index
    %c0_78 = arith.constant 0 : index
    %c0_79 = arith.constant 0 : index
    %309 = vector.load %arg19[%308, %c0_78, %c0_79] : memref<8x8x512xf32, #tpu.memory_space<vmem>>, vector<1x8x512xf32>
    %310 = vector.shape_cast %309 : vector<1x8x512xf32> to vector<8x512xf32>
    %311 = arith.truncf %297 : vector<8x128xf32> to vector<8x128xbf16>
    %cst_80 = arith.constant dense<0.000000e+00> : vector<8x512xf32>
    %312 = tpu.matmul %311, %14, %cst_80 {dimension_numbers = #tpu.dot_dimension_numbers<[1], [0], [0], [1], [0, 0, 1, 1], [], []>} : vector<8x128xbf16>, vector<128x512xbf16>, vector<8x512xf32> -> vector<8x512xf32>
    %313 = arith.addf %310, %312 : vector<8x512xf32>
    %314 = vector.extract_strided_slice %307 {offsets = [0, 0], sizes = [8, 128], strides = [1, 1]} : vector<8x512xf32> to vector<8x128xf32>
    %315 = arith.negf %314 : vector<8x128xf32>
    %316 = math.exp %315 : vector<8x128xf32>
    %cst_81 = arith.constant 1.000000e+00 : f32
    %317 = vector.broadcast %cst_81 : f32 to vector<8x128xf32>
    %318 = arith.addf %317, %316 : vector<8x128xf32>
    %319 = arith.divf %317, %318 : vector<8x128xf32>
    %320 = vector.extract_strided_slice %307 {offsets = [0, 128], sizes = [8, 128], strides = [1, 1]} : vector<8x512xf32> to vector<8x128xf32>
    %321 = arith.negf %320 : vector<8x128xf32>
    %322 = math.exp %321 : vector<8x128xf32>
    %cst_82 = arith.constant 1.000000e+00 : f32
    %323 = vector.broadcast %cst_82 : f32 to vector<8x128xf32>
    %324 = arith.addf %323, %322 : vector<8x128xf32>
    %325 = arith.divf %323, %324 : vector<8x128xf32>
    %326 = vector.extract_strided_slice %307 {offsets = [0, 256], sizes = [8, 128], strides = [1, 1]} : vector<8x512xf32> to vector<8x128xf32>
    %327 = math.tanh %326 : vector<8x128xf32>
    %328 = vector.extract_strided_slice %307 {offsets = [0, 384], sizes = [8, 128], strides = [1, 1]} : vector<8x512xf32> to vector<8x128xf32>
    %329 = arith.negf %328 : vector<8x128xf32>
    %330 = math.exp %329 : vector<8x128xf32>
    %cst_83 = arith.constant 1.000000e+00 : f32
    %331 = vector.broadcast %cst_83 : f32 to vector<8x128xf32>
    %332 = arith.addf %331, %330 : vector<8x128xf32>
    %333 = arith.divf %331, %332 : vector<8x128xf32>
    %334 = arith.mulf %325, %294 : vector<8x128xf32>
    %335 = arith.mulf %319, %327 : vector<8x128xf32>
    %336 = arith.addf %334, %335 : vector<8x128xf32>
    %337 = math.tanh %336 : vector<8x128xf32>
    %338 = arith.mulf %333, %337 : vector<8x128xf32>
    %339 = vector.extract_strided_slice %313 {offsets = [0, 0], sizes = [8, 128], strides = [1, 1]} : vector<8x512xf32> to vector<8x128xf32>
    %340 = arith.negf %339 : vector<8x128xf32>
    %341 = math.exp %340 : vector<8x128xf32>
    %cst_84 = arith.constant 1.000000e+00 : f32
    %342 = vector.broadcast %cst_84 : f32 to vector<8x128xf32>
    %343 = arith.addf %342, %341 : vector<8x128xf32>
    %344 = arith.divf %342, %343 : vector<8x128xf32>
    %345 = vector.extract_strided_slice %313 {offsets = [0, 128], sizes = [8, 128], strides = [1, 1]} : vector<8x512xf32> to vector<8x128xf32>
    %346 = arith.negf %345 : vector<8x128xf32>
    %347 = math.exp %346 : vector<8x128xf32>
    %cst_85 = arith.constant 1.000000e+00 : f32
    %348 = vector.broadcast %cst_85 : f32 to vector<8x128xf32>
    %349 = arith.addf %348, %347 : vector<8x128xf32>
    %350 = arith.divf %348, %349 : vector<8x128xf32>
    %351 = vector.extract_strided_slice %313 {offsets = [0, 256], sizes = [8, 128], strides = [1, 1]} : vector<8x512xf32> to vector<8x128xf32>
    %352 = math.tanh %351 : vector<8x128xf32>
    %353 = vector.extract_strided_slice %313 {offsets = [0, 384], sizes = [8, 128], strides = [1, 1]} : vector<8x512xf32> to vector<8x128xf32>
    %354 = arith.negf %353 : vector<8x128xf32>
    %355 = math.exp %354 : vector<8x128xf32>
    %cst_86 = arith.constant 1.000000e+00 : f32
    %356 = vector.broadcast %cst_86 : f32 to vector<8x128xf32>
    %357 = arith.addf %356, %355 : vector<8x128xf32>
    %358 = arith.divf %356, %357 : vector<8x128xf32>
    %359 = arith.mulf %350, %300 : vector<8x128xf32>
    %360 = arith.mulf %344, %352 : vector<8x128xf32>
    %361 = arith.addf %359, %360 : vector<8x128xf32>
    %362 = math.tanh %361 : vector<8x128xf32>
    %363 = arith.mulf %358, %362 : vector<8x128xf32>
    %364 = vector.broadcast %c3_i32 : i32 to vector<8x1xi32>
    %365 = arith.cmpi sgt, %0, %364 : vector<8x1xi32>
    %366 = vector.broadcast %301 : i32 to vector<8x1xi32>
    %367 = arith.cmpi sgt, %0, %366 : vector<8x1xi32>
    %cst_87 = arith.constant 0.000000e+00 : f32
    %368 = vector.shape_cast %365 : vector<8x1xi1> to vector<8x1xi1>
    %369 = vector.broadcast %368 : vector<8x1xi1> to vector<8x128xi1>
    %370 = vector.broadcast %cst_87 : f32 to vector<8x128xf32>
    %371 = arith.select %369, %338, %370 : vector<8x128xi1>, vector<8x128xf32>
    %372 = arith.index_cast %c3_i32 : i32 to index
    %c0_88 = arith.constant 0 : index
    %c0_89 = arith.constant 0 : index
    %373 = vector.load %arg20[%372, %c0_88, %c0_89] : memref<8x8x128xf32, #tpu.memory_space<vmem>>, vector<1x8x128xf32>
    %374 = vector.shape_cast %373 : vector<1x8x128xf32> to vector<8x128xf32>
    %375 = vector.shape_cast %371 : vector<8x128xf32> to vector<1x8x128xf32>
    tpu.vector_store %arg20[%372, %c0_88, %c0_89], %375 {strides = array<i32>} : memref<8x8x128xf32, #tpu.memory_space<vmem>>, vector<1x8x128xf32>,
    %cst_90 = arith.constant 0.000000e+00 : f32
    %376 = vector.shape_cast %367 : vector<8x1xi1> to vector<8x1xi1>
    %377 = vector.broadcast %376 : vector<8x1xi1> to vector<8x128xi1>
    %378 = vector.broadcast %cst_90 : f32 to vector<8x128xf32>
    %379 = arith.select %377, %363, %378 : vector<8x128xi1>, vector<8x128xf32>
    %380 = arith.index_cast %301 : i32 to index
    %c0_91 = arith.constant 0 : index
    %c0_92 = arith.constant 0 : index
    %381 = vector.load %arg21[%380, %c0_91, %c0_92] : memref<8x8x128xf32, #tpu.memory_space<vmem>>, vector<1x8x128xf32>
    %382 = vector.shape_cast %381 : vector<1x8x128xf32> to vector<8x128xf32>
    %383 = vector.shape_cast %379 : vector<8x128xf32> to vector<1x8x128xf32>
    tpu.vector_store %arg21[%380, %c0_91, %c0_92], %383 {strides = array<i32>} : memref<8x8x128xf32, #tpu.memory_space<vmem>>, vector<1x8x128xf32>,
    %384 = vector.shape_cast %365 : vector<8x1xi1> to vector<8x1xi1>
    %385 = vector.broadcast %384 : vector<8x1xi1> to vector<8x128xi1>
    %386 = arith.select %385, %338, %291 : vector<8x128xi1>, vector<8x128xf32>
    %387 = vector.shape_cast %365 : vector<8x1xi1> to vector<8x1xi1>
    %388 = vector.broadcast %387 : vector<8x1xi1> to vector<8x128xi1>
    %389 = arith.select %388, %336, %294 : vector<8x128xi1>, vector<8x128xf32>
    %390 = vector.shape_cast %367 : vector<8x1xi1> to vector<8x1xi1>
    %391 = vector.broadcast %390 : vector<8x1xi1> to vector<8x128xi1>
    %392 = arith.select %391, %363, %297 : vector<8x128xi1>, vector<8x128xf32>
    %393 = vector.shape_cast %367 : vector<8x1xi1> to vector<8x1xi1>
    %394 = vector.broadcast %393 : vector<8x1xi1> to vector<8x128xi1>
    %395 = arith.select %394, %361, %300 : vector<8x128xi1>, vector<8x128xf32>
    %c4_i32 = arith.constant 4 : i32
    %c7_i32_93 = arith.constant 7 : i32
    %396 = arith.subi %c7_i32_93, %c4_i32 : i32
    %397 = arith.index_cast %c4_i32 : i32 to index
    %c0_94 = arith.constant 0 : index
    %c0_95 = arith.constant 0 : index
    %398 = vector.load %arg18[%397, %c0_94, %c0_95] : memref<8x8x512xf32, #tpu.memory_space<vmem>>, vector<1x8x512xf32>
    %399 = vector.shape_cast %398 : vector<1x8x512xf32> to vector<8x512xf32>
    %400 = arith.truncf %386 : vector<8x128xf32> to vector<8x128xbf16>
    %cst_96 = arith.constant dense<0.000000e+00> : vector<8x512xf32>
    %401 = tpu.matmul %400, %13, %cst_96 {dimension_numbers = #tpu.dot_dimension_numbers<[1], [0], [0], [1], [0, 0, 1, 1], [], []>} : vector<8x128xbf16>, vector<128x512xbf16>, vector<8x512xf32> -> vector<8x512xf32>
    %402 = arith.addf %399, %401 : vector<8x512xf32>
    %403 = arith.index_cast %396 : i32 to index
    %c0_97 = arith.constant 0 : index
    %c0_98 = arith.constant 0 : index
    %404 = vector.load %arg19[%403, %c0_97, %c0_98] : memref<8x8x512xf32, #tpu.memory_space<vmem>>, vector<1x8x512xf32>
    %405 = vector.shape_cast %404 : vector<1x8x512xf32> to vector<8x512xf32>
    %406 = arith.truncf %392 : vector<8x128xf32> to vector<8x128xbf16>
    %cst_99 = arith.constant dense<0.000000e+00> : vector<8x512xf32>
    %407 = tpu.matmul %406, %14, %cst_99 {dimension_numbers = #tpu.dot_dimension_numbers<[1], [0], [0], [1], [0, 0, 1, 1], [], []>} : vector<8x128xbf16>, vector<128x512xbf16>, vector<8x512xf32> -> vector<8x512xf32>
    %408 = arith.addf %405, %407 : vector<8x512xf32>
    %409 = vector.extract_strided_slice %402 {offsets = [0, 0], sizes = [8, 128], strides = [1, 1]} : vector<8x512xf32> to vector<8x128xf32>
    %410 = arith.negf %409 : vector<8x128xf32>
    %411 = math.exp %410 : vector<8x128xf32>
    %cst_100 = arith.constant 1.000000e+00 : f32
    %412 = vector.broadcast %cst_100 : f32 to vector<8x128xf32>
    %413 = arith.addf %412, %411 : vector<8x128xf32>
    %414 = arith.divf %412, %413 : vector<8x128xf32>
    %415 = vector.extract_strided_slice %402 {offsets = [0, 128], sizes = [8, 128], strides = [1, 1]} : vector<8x512xf32> to vector<8x128xf32>
    %416 = arith.negf %415 : vector<8x128xf32>
    %417 = math.exp %416 : vector<8x128xf32>
    %cst_101 = arith.constant 1.000000e+00 : f32
    %418 = vector.broadcast %cst_101 : f32 to vector<8x128xf32>
    %419 = arith.addf %418, %417 : vector<8x128xf32>
    %420 = arith.divf %418, %419 : vector<8x128xf32>
    %421 = vector.extract_strided_slice %402 {offsets = [0, 256], sizes = [8, 128], strides = [1, 1]} : vector<8x512xf32> to vector<8x128xf32>
    %422 = math.tanh %421 : vector<8x128xf32>
    %423 = vector.extract_strided_slice %402 {offsets = [0, 384], sizes = [8, 128], strides = [1, 1]} : vector<8x512xf32> to vector<8x128xf32>
    %424 = arith.negf %423 : vector<8x128xf32>
    %425 = math.exp %424 : vector<8x128xf32>
    %cst_102 = arith.constant 1.000000e+00 : f32
    %426 = vector.broadcast %cst_102 : f32 to vector<8x128xf32>
    %427 = arith.addf %426, %425 : vector<8x128xf32>
    %428 = arith.divf %426, %427 : vector<8x128xf32>
    %429 = arith.mulf %420, %389 : vector<8x128xf32>
    %430 = arith.mulf %414, %422 : vector<8x128xf32>
    %431 = arith.addf %429, %430 : vector<8x128xf32>
    %432 = math.tanh %431 : vector<8x128xf32>
    %433 = arith.mulf %428, %432 : vector<8x128xf32>
    %434 = vector.extract_strided_slice %408 {offsets = [0, 0], sizes = [8, 128], strides = [1, 1]} : vector<8x512xf32> to vector<8x128xf32>
    %435 = arith.negf %434 : vector<8x128xf32>
    %436 = math.exp %435 : vector<8x128xf32>
    %cst_103 = arith.constant 1.000000e+00 : f32
    %437 = vector.broadcast %cst_103 : f32 to vector<8x128xf32>
    %438 = arith.addf %437, %436 : vector<8x128xf32>
    %439 = arith.divf %437, %438 : vector<8x128xf32>
    %440 = vector.extract_strided_slice %408 {offsets = [0, 128], sizes = [8, 128], strides = [1, 1]} : vector<8x512xf32> to vector<8x128xf32>
    %441 = arith.negf %440 : vector<8x128xf32>
    %442 = math.exp %441 : vector<8x128xf32>
    %cst_104 = arith.constant 1.000000e+00 : f32
    %443 = vector.broadcast %cst_104 : f32 to vector<8x128xf32>
    %444 = arith.addf %443, %442 : vector<8x128xf32>
    %445 = arith.divf %443, %444 : vector<8x128xf32>
    %446 = vector.extract_strided_slice %408 {offsets = [0, 256], sizes = [8, 128], strides = [1, 1]} : vector<8x512xf32> to vector<8x128xf32>
    %447 = math.tanh %446 : vector<8x128xf32>
    %448 = vector.extract_strided_slice %408 {offsets = [0, 384], sizes = [8, 128], strides = [1, 1]} : vector<8x512xf32> to vector<8x128xf32>
    %449 = arith.negf %448 : vector<8x128xf32>
    %450 = math.exp %449 : vector<8x128xf32>
    %cst_105 = arith.constant 1.000000e+00 : f32
    %451 = vector.broadcast %cst_105 : f32 to vector<8x128xf32>
    %452 = arith.addf %451, %450 : vector<8x128xf32>
    %453 = arith.divf %451, %452 : vector<8x128xf32>
    %454 = arith.mulf %445, %395 : vector<8x128xf32>
    %455 = arith.mulf %439, %447 : vector<8x128xf32>
    %456 = arith.addf %454, %455 : vector<8x128xf32>
    %457 = math.tanh %456 : vector<8x128xf32>
    %458 = arith.mulf %453, %457 : vector<8x128xf32>
    %459 = vector.broadcast %c4_i32 : i32 to vector<8x1xi32>
    %460 = arith.cmpi sgt, %0, %459 : vector<8x1xi32>
    %461 = vector.broadcast %396 : i32 to vector<8x1xi32>
    %462 = arith.cmpi sgt, %0, %461 : vector<8x1xi32>
    %cst_106 = arith.constant 0.000000e+00 : f32
    %463 = vector.shape_cast %460 : vector<8x1xi1> to vector<8x1xi1>
    %464 = vector.broadcast %463 : vector<8x1xi1> to vector<8x128xi1>
    %465 = vector.broadcast %cst_106 : f32 to vector<8x128xf32>
    %466 = arith.select %464, %433, %465 : vector<8x128xi1>, vector<8x128xf32>
    %467 = arith.index_cast %c4_i32 : i32 to index
    %c0_107 = arith.constant 0 : index
    %c0_108 = arith.constant 0 : index
    %468 = vector.load %arg20[%467, %c0_107, %c0_108] : memref<8x8x128xf32, #tpu.memory_space<vmem>>, vector<1x8x128xf32>
    %469 = vector.shape_cast %468 : vector<1x8x128xf32> to vector<8x128xf32>
    %470 = vector.shape_cast %466 : vector<8x128xf32> to vector<1x8x128xf32>
    tpu.vector_store %arg20[%467, %c0_107, %c0_108], %470 {strides = array<i32>} : memref<8x8x128xf32, #tpu.memory_space<vmem>>, vector<1x8x128xf32>,
    %cst_109 = arith.constant 0.000000e+00 : f32
    %471 = vector.shape_cast %462 : vector<8x1xi1> to vector<8x1xi1>
    %472 = vector.broadcast %471 : vector<8x1xi1> to vector<8x128xi1>
    %473 = vector.broadcast %cst_109 : f32 to vector<8x128xf32>
    %474 = arith.select %472, %458, %473 : vector<8x128xi1>, vector<8x128xf32>
    %475 = arith.index_cast %396 : i32 to index
    %c0_110 = arith.constant 0 : index
    %c0_111 = arith.constant 0 : index
    %476 = vector.load %arg21[%475, %c0_110, %c0_111] : memref<8x8x128xf32, #tpu.memory_space<vmem>>, vector<1x8x128xf32>
    %477 = vector.shape_cast %476 : vector<1x8x128xf32> to vector<8x128xf32>
    %478 = vector.shape_cast %474 : vector<8x128xf32> to vector<1x8x128xf32>
    tpu.vector_store %arg21[%475, %c0_110, %c0_111], %478 {strides = array<i32>} : memref<8x8x128xf32, #tpu.memory_space<vmem>>, vector<1x8x128xf32>,
    %479 = vector.shape_cast %460 : vector<8x1xi1> to vector<8x1xi1>
    %480 = vector.broadcast %479 : vector<8x1xi1> to vector<8x128xi1>
    %481 = arith.select %480, %433, %386 : vector<8x128xi1>, vector<8x128xf32>
    %482 = vector.shape_cast %460 : vector<8x1xi1> to vector<8x1xi1>
    %483 = vector.broadcast %482 : vector<8x1xi1> to vector<8x128xi1>
    %484 = arith.select %483, %431, %389 : vector<8x128xi1>, vector<8x128xf32>
    %485 = vector.shape_cast %462 : vector<8x1xi1> to vector<8x1xi1>
    %486 = vector.broadcast %485 : vector<8x1xi1> to vector<8x128xi1>
    %487 = arith.select %486, %458, %392 : vector<8x128xi1>, vector<8x128xf32>
    %488 = vector.shape_cast %462 : vector<8x1xi1> to vector<8x1xi1>
    %489 = vector.broadcast %488 : vector<8x1xi1> to vector<8x128xi1>
    %490 = arith.select %489, %456, %395 : vector<8x128xi1>, vector<8x128xf32>
    %c5_i32 = arith.constant 5 : i32
    %c7_i32_112 = arith.constant 7 : i32
    %491 = arith.subi %c7_i32_112, %c5_i32 : i32
    %492 = arith.index_cast %c5_i32 : i32 to index
    %c0_113 = arith.constant 0 : index
    %c0_114 = arith.constant 0 : index
    %493 = vector.load %arg18[%492, %c0_113, %c0_114] : memref<8x8x512xf32, #tpu.memory_space<vmem>>, vector<1x8x512xf32>
    %494 = vector.shape_cast %493 : vector<1x8x512xf32> to vector<8x512xf32>
    %495 = arith.truncf %481 : vector<8x128xf32> to vector<8x128xbf16>
    %cst_115 = arith.constant dense<0.000000e+00> : vector<8x512xf32>
    %496 = tpu.matmul %495, %13, %cst_115 {dimension_numbers = #tpu.dot_dimension_numbers<[1], [0], [0], [1], [0, 0, 1, 1], [], []>} : vector<8x128xbf16>, vector<128x512xbf16>, vector<8x512xf32> -> vector<8x512xf32>
    %497 = arith.addf %494, %496 : vector<8x512xf32>
    %498 = arith.index_cast %491 : i32 to index
    %c0_116 = arith.constant 0 : index
    %c0_117 = arith.constant 0 : index
    %499 = vector.load %arg19[%498, %c0_116, %c0_117] : memref<8x8x512xf32, #tpu.memory_space<vmem>>, vector<1x8x512xf32>
    %500 = vector.shape_cast %499 : vector<1x8x512xf32> to vector<8x512xf32>
    %501 = arith.truncf %487 : vector<8x128xf32> to vector<8x128xbf16>
    %cst_118 = arith.constant dense<0.000000e+00> : vector<8x512xf32>
    %502 = tpu.matmul %501, %14, %cst_118 {dimension_numbers = #tpu.dot_dimension_numbers<[1], [0], [0], [1], [0, 0, 1, 1], [], []>} : vector<8x128xbf16>, vector<128x512xbf16>, vector<8x512xf32> -> vector<8x512xf32>
    %503 = arith.addf %500, %502 : vector<8x512xf32>
    %504 = vector.extract_strided_slice %497 {offsets = [0, 0], sizes = [8, 128], strides = [1, 1]} : vector<8x512xf32> to vector<8x128xf32>
    %505 = arith.negf %504 : vector<8x128xf32>
    %506 = math.exp %505 : vector<8x128xf32>
    %cst_119 = arith.constant 1.000000e+00 : f32
    %507 = vector.broadcast %cst_119 : f32 to vector<8x128xf32>
    %508 = arith.addf %507, %506 : vector<8x128xf32>
    %509 = arith.divf %507, %508 : vector<8x128xf32>
    %510 = vector.extract_strided_slice %497 {offsets = [0, 128], sizes = [8, 128], strides = [1, 1]} : vector<8x512xf32> to vector<8x128xf32>
    %511 = arith.negf %510 : vector<8x128xf32>
    %512 = math.exp %511 : vector<8x128xf32>
    %cst_120 = arith.constant 1.000000e+00 : f32
    %513 = vector.broadcast %cst_120 : f32 to vector<8x128xf32>
    %514 = arith.addf %513, %512 : vector<8x128xf32>
    %515 = arith.divf %513, %514 : vector<8x128xf32>
    %516 = vector.extract_strided_slice %497 {offsets = [0, 256], sizes = [8, 128], strides = [1, 1]} : vector<8x512xf32> to vector<8x128xf32>
    %517 = math.tanh %516 : vector<8x128xf32>
    %518 = vector.extract_strided_slice %497 {offsets = [0, 384], sizes = [8, 128], strides = [1, 1]} : vector<8x512xf32> to vector<8x128xf32>
    %519 = arith.negf %518 : vector<8x128xf32>
    %520 = math.exp %519 : vector<8x128xf32>
    %cst_121 = arith.constant 1.000000e+00 : f32
    %521 = vector.broadcast %cst_121 : f32 to vector<8x128xf32>
    %522 = arith.addf %521, %520 : vector<8x128xf32>
    %523 = arith.divf %521, %522 : vector<8x128xf32>
    %524 = arith.mulf %515, %484 : vector<8x128xf32>
    %525 = arith.mulf %509, %517 : vector<8x128xf32>
    %526 = arith.addf %524, %525 : vector<8x128xf32>
    %527 = math.tanh %526 : vector<8x128xf32>
    %528 = arith.mulf %523, %527 : vector<8x128xf32>
    %529 = vector.extract_strided_slice %503 {offsets = [0, 0], sizes = [8, 128], strides = [1, 1]} : vector<8x512xf32> to vector<8x128xf32>
    %530 = arith.negf %529 : vector<8x128xf32>
    %531 = math.exp %530 : vector<8x128xf32>
    %cst_122 = arith.constant 1.000000e+00 : f32
    %532 = vector.broadcast %cst_122 : f32 to vector<8x128xf32>
    %533 = arith.addf %532, %531 : vector<8x128xf32>
    %534 = arith.divf %532, %533 : vector<8x128xf32>
    %535 = vector.extract_strided_slice %503 {offsets = [0, 128], sizes = [8, 128], strides = [1, 1]} : vector<8x512xf32> to vector<8x128xf32>
    %536 = arith.negf %535 : vector<8x128xf32>
    %537 = math.exp %536 : vector<8x128xf32>
    %cst_123 = arith.constant 1.000000e+00 : f32
    %538 = vector.broadcast %cst_123 : f32 to vector<8x128xf32>
    %539 = arith.addf %538, %537 : vector<8x128xf32>
    %540 = arith.divf %538, %539 : vector<8x128xf32>
    %541 = vector.extract_strided_slice %503 {offsets = [0, 256], sizes = [8, 128], strides = [1, 1]} : vector<8x512xf32> to vector<8x128xf32>
    %542 = math.tanh %541 : vector<8x128xf32>
    %543 = vector.extract_strided_slice %503 {offsets = [0, 384], sizes = [8, 128], strides = [1, 1]} : vector<8x512xf32> to vector<8x128xf32>
    %544 = arith.negf %543 : vector<8x128xf32>
    %545 = math.exp %544 : vector<8x128xf32>
    %cst_124 = arith.constant 1.000000e+00 : f32
    %546 = vector.broadcast %cst_124 : f32 to vector<8x128xf32>
    %547 = arith.addf %546, %545 : vector<8x128xf32>
    %548 = arith.divf %546, %547 : vector<8x128xf32>
    %549 = arith.mulf %540, %490 : vector<8x128xf32>
    %550 = arith.mulf %534, %542 : vector<8x128xf32>
    %551 = arith.addf %549, %550 : vector<8x128xf32>
    %552 = math.tanh %551 : vector<8x128xf32>
    %553 = arith.mulf %548, %552 : vector<8x128xf32>
    %554 = vector.broadcast %c5_i32 : i32 to vector<8x1xi32>
    %555 = arith.cmpi sgt, %0, %554 : vector<8x1xi32>
    %556 = vector.broadcast %491 : i32 to vector<8x1xi32>
    %557 = arith.cmpi sgt, %0, %556 : vector<8x1xi32>
    %cst_125 = arith.constant 0.000000e+00 : f32
    %558 = vector.shape_cast %555 : vector<8x1xi1> to vector<8x1xi1>
    %559 = vector.broadcast %558 : vector<8x1xi1> to vector<8x128xi1>
    %560 = vector.broadcast %cst_125 : f32 to vector<8x128xf32>
    %561 = arith.select %559, %528, %560 : vector<8x128xi1>, vector<8x128xf32>
    %562 = arith.index_cast %c5_i32 : i32 to index
    %c0_126 = arith.constant 0 : index
    %c0_127 = arith.constant 0 : index
    %563 = vector.load %arg20[%562, %c0_126, %c0_127] : memref<8x8x128xf32, #tpu.memory_space<vmem>>, vector<1x8x128xf32>
    %564 = vector.shape_cast %563 : vector<1x8x128xf32> to vector<8x128xf32>
    %565 = vector.shape_cast %561 : vector<8x128xf32> to vector<1x8x128xf32>
    tpu.vector_store %arg20[%562, %c0_126, %c0_127], %565 {strides = array<i32>} : memref<8x8x128xf32, #tpu.memory_space<vmem>>, vector<1x8x128xf32>,
    %cst_128 = arith.constant 0.000000e+00 : f32
    %566 = vector.shape_cast %557 : vector<8x1xi1> to vector<8x1xi1>
    %567 = vector.broadcast %566 : vector<8x1xi1> to vector<8x128xi1>
    %568 = vector.broadcast %cst_128 : f32 to vector<8x128xf32>
    %569 = arith.select %567, %553, %568 : vector<8x128xi1>, vector<8x128xf32>
    %570 = arith.index_cast %491 : i32 to index
    %c0_129 = arith.constant 0 : index
    %c0_130 = arith.constant 0 : index
    %571 = vector.load %arg21[%570, %c0_129, %c0_130] : memref<8x8x128xf32, #tpu.memory_space<vmem>>, vector<1x8x128xf32>
    %572 = vector.shape_cast %571 : vector<1x8x128xf32> to vector<8x128xf32>
    %573 = vector.shape_cast %569 : vector<8x128xf32> to vector<1x8x128xf32>
    tpu.vector_store %arg21[%570, %c0_129, %c0_130], %573 {strides = array<i32>} : memref<8x8x128xf32, #tpu.memory_space<vmem>>, vector<1x8x128xf32>,
    %574 = vector.shape_cast %555 : vector<8x1xi1> to vector<8x1xi1>
    %575 = vector.broadcast %574 : vector<8x1xi1> to vector<8x128xi1>
    %576 = arith.select %575, %528, %481 : vector<8x128xi1>, vector<8x128xf32>
    %577 = vector.shape_cast %555 : vector<8x1xi1> to vector<8x1xi1>
    %578 = vector.broadcast %577 : vector<8x1xi1> to vector<8x128xi1>
    %579 = arith.select %578, %526, %484 : vector<8x128xi1>, vector<8x128xf32>
    %580 = vector.shape_cast %557 : vector<8x1xi1> to vector<8x1xi1>
    %581 = vector.broadcast %580 : vector<8x1xi1> to vector<8x128xi1>
    %582 = arith.select %581, %553, %487 : vector<8x128xi1>, vector<8x128xf32>
    %583 = vector.shape_cast %557 : vector<8x1xi1> to vector<8x1xi1>
    %584 = vector.broadcast %583 : vector<8x1xi1> to vector<8x128xi1>
    %585 = arith.select %584, %551, %490 : vector<8x128xi1>, vector<8x128xf32>
    %c6_i32 = arith.constant 6 : i32
    %c7_i32_131 = arith.constant 7 : i32
    %586 = arith.subi %c7_i32_131, %c6_i32 : i32
    %587 = arith.index_cast %c6_i32 : i32 to index
    %c0_132 = arith.constant 0 : index
    %c0_133 = arith.constant 0 : index
    %588 = vector.load %arg18[%587, %c0_132, %c0_133] : memref<8x8x512xf32, #tpu.memory_space<vmem>>, vector<1x8x512xf32>
    %589 = vector.shape_cast %588 : vector<1x8x512xf32> to vector<8x512xf32>
    %590 = arith.truncf %576 : vector<8x128xf32> to vector<8x128xbf16>
    %cst_134 = arith.constant dense<0.000000e+00> : vector<8x512xf32>
    %591 = tpu.matmul %590, %13, %cst_134 {dimension_numbers = #tpu.dot_dimension_numbers<[1], [0], [0], [1], [0, 0, 1, 1], [], []>} : vector<8x128xbf16>, vector<128x512xbf16>, vector<8x512xf32> -> vector<8x512xf32>
    %592 = arith.addf %589, %591 : vector<8x512xf32>
    %593 = arith.index_cast %586 : i32 to index
    %c0_135 = arith.constant 0 : index
    %c0_136 = arith.constant 0 : index
    %594 = vector.load %arg19[%593, %c0_135, %c0_136] : memref<8x8x512xf32, #tpu.memory_space<vmem>>, vector<1x8x512xf32>
    %595 = vector.shape_cast %594 : vector<1x8x512xf32> to vector<8x512xf32>
    %596 = arith.truncf %582 : vector<8x128xf32> to vector<8x128xbf16>
    %cst_137 = arith.constant dense<0.000000e+00> : vector<8x512xf32>
    %597 = tpu.matmul %596, %14, %cst_137 {dimension_numbers = #tpu.dot_dimension_numbers<[1], [0], [0], [1], [0, 0, 1, 1], [], []>} : vector<8x128xbf16>, vector<128x512xbf16>, vector<8x512xf32> -> vector<8x512xf32>
    %598 = arith.addf %595, %597 : vector<8x512xf32>
    %599 = vector.extract_strided_slice %592 {offsets = [0, 0], sizes = [8, 128], strides = [1, 1]} : vector<8x512xf32> to vector<8x128xf32>
    %600 = arith.negf %599 : vector<8x128xf32>
    %601 = math.exp %600 : vector<8x128xf32>
    %cst_138 = arith.constant 1.000000e+00 : f32
    %602 = vector.broadcast %cst_138 : f32 to vector<8x128xf32>
    %603 = arith.addf %602, %601 : vector<8x128xf32>
    %604 = arith.divf %602, %603 : vector<8x128xf32>
    %605 = vector.extract_strided_slice %592 {offsets = [0, 128], sizes = [8, 128], strides = [1, 1]} : vector<8x512xf32> to vector<8x128xf32>
    %606 = arith.negf %605 : vector<8x128xf32>
    %607 = math.exp %606 : vector<8x128xf32>
    %cst_139 = arith.constant 1.000000e+00 : f32
    %608 = vector.broadcast %cst_139 : f32 to vector<8x128xf32>
    %609 = arith.addf %608, %607 : vector<8x128xf32>
    %610 = arith.divf %608, %609 : vector<8x128xf32>
    %611 = vector.extract_strided_slice %592 {offsets = [0, 256], sizes = [8, 128], strides = [1, 1]} : vector<8x512xf32> to vector<8x128xf32>
    %612 = math.tanh %611 : vector<8x128xf32>
    %613 = vector.extract_strided_slice %592 {offsets = [0, 384], sizes = [8, 128], strides = [1, 1]} : vector<8x512xf32> to vector<8x128xf32>
    %614 = arith.negf %613 : vector<8x128xf32>
    %615 = math.exp %614 : vector<8x128xf32>
    %cst_140 = arith.constant 1.000000e+00 : f32
    %616 = vector.broadcast %cst_140 : f32 to vector<8x128xf32>
    %617 = arith.addf %616, %615 : vector<8x128xf32>
    %618 = arith.divf %616, %617 : vector<8x128xf32>
    %619 = arith.mulf %610, %579 : vector<8x128xf32>
    %620 = arith.mulf %604, %612 : vector<8x128xf32>
    %621 = arith.addf %619, %620 : vector<8x128xf32>
    %622 = math.tanh %621 : vector<8x128xf32>
    %623 = arith.mulf %618, %622 : vector<8x128xf32>
    %624 = vector.extract_strided_slice %598 {offsets = [0, 0], sizes = [8, 128], strides = [1, 1]} : vector<8x512xf32> to vector<8x128xf32>
    %625 = arith.negf %624 : vector<8x128xf32>
    %626 = math.exp %625 : vector<8x128xf32>
    %cst_141 = arith.constant 1.000000e+00 : f32
    %627 = vector.broadcast %cst_141 : f32 to vector<8x128xf32>
    %628 = arith.addf %627, %626 : vector<8x128xf32>
    %629 = arith.divf %627, %628 : vector<8x128xf32>
    %630 = vector.extract_strided_slice %598 {offsets = [0, 128], sizes = [8, 128], strides = [1, 1]} : vector<8x512xf32> to vector<8x128xf32>
    %631 = arith.negf %630 : vector<8x128xf32>
    %632 = math.exp %631 : vector<8x128xf32>
    %cst_142 = arith.constant 1.000000e+00 : f32
    %633 = vector.broadcast %cst_142 : f32 to vector<8x128xf32>
    %634 = arith.addf %633, %632 : vector<8x128xf32>
    %635 = arith.divf %633, %634 : vector<8x128xf32>
    %636 = vector.extract_strided_slice %598 {offsets = [0, 256], sizes = [8, 128], strides = [1, 1]} : vector<8x512xf32> to vector<8x128xf32>
    %637 = math.tanh %636 : vector<8x128xf32>
    %638 = vector.extract_strided_slice %598 {offsets = [0, 384], sizes = [8, 128], strides = [1, 1]} : vector<8x512xf32> to vector<8x128xf32>
    %639 = arith.negf %638 : vector<8x128xf32>
    %640 = math.exp %639 : vector<8x128xf32>
    %cst_143 = arith.constant 1.000000e+00 : f32
    %641 = vector.broadcast %cst_143 : f32 to vector<8x128xf32>
    %642 = arith.addf %641, %640 : vector<8x128xf32>
    %643 = arith.divf %641, %642 : vector<8x128xf32>
    %644 = arith.mulf %635, %585 : vector<8x128xf32>
    %645 = arith.mulf %629, %637 : vector<8x128xf32>
    %646 = arith.addf %644, %645 : vector<8x128xf32>
    %647 = math.tanh %646 : vector<8x128xf32>
    %648 = arith.mulf %643, %647 : vector<8x128xf32>
    %649 = vector.broadcast %c6_i32 : i32 to vector<8x1xi32>
    %650 = arith.cmpi sgt, %0, %649 : vector<8x1xi32>
    %651 = vector.broadcast %586 : i32 to vector<8x1xi32>
    %652 = arith.cmpi sgt, %0, %651 : vector<8x1xi32>
    %cst_144 = arith.constant 0.000000e+00 : f32
    %653 = vector.shape_cast %650 : vector<8x1xi1> to vector<8x1xi1>
    %654 = vector.broadcast %653 : vector<8x1xi1> to vector<8x128xi1>
    %655 = vector.broadcast %cst_144 : f32 to vector<8x128xf32>
    %656 = arith.select %654, %623, %655 : vector<8x128xi1>, vector<8x128xf32>
    %657 = arith.index_cast %c6_i32 : i32 to index
    %c0_145 = arith.constant 0 : index
    %c0_146 = arith.constant 0 : index
    %658 = vector.load %arg20[%657, %c0_145, %c0_146] : memref<8x8x128xf32, #tpu.memory_space<vmem>>, vector<1x8x128xf32>
    %659 = vector.shape_cast %658 : vector<1x8x128xf32> to vector<8x128xf32>
    %660 = vector.shape_cast %656 : vector<8x128xf32> to vector<1x8x128xf32>
    tpu.vector_store %arg20[%657, %c0_145, %c0_146], %660 {strides = array<i32>} : memref<8x8x128xf32, #tpu.memory_space<vmem>>, vector<1x8x128xf32>,
    %cst_147 = arith.constant 0.000000e+00 : f32
    %661 = vector.shape_cast %652 : vector<8x1xi1> to vector<8x1xi1>
    %662 = vector.broadcast %661 : vector<8x1xi1> to vector<8x128xi1>
    %663 = vector.broadcast %cst_147 : f32 to vector<8x128xf32>
    %664 = arith.select %662, %648, %663 : vector<8x128xi1>, vector<8x128xf32>
    %665 = arith.index_cast %586 : i32 to index
    %c0_148 = arith.constant 0 : index
    %c0_149 = arith.constant 0 : index
    %666 = vector.load %arg21[%665, %c0_148, %c0_149] : memref<8x8x128xf32, #tpu.memory_space<vmem>>, vector<1x8x128xf32>
    %667 = vector.shape_cast %666 : vector<1x8x128xf32> to vector<8x128xf32>
    %668 = vector.shape_cast %664 : vector<8x128xf32> to vector<1x8x128xf32>
    tpu.vector_store %arg21[%665, %c0_148, %c0_149], %668 {strides = array<i32>} : memref<8x8x128xf32, #tpu.memory_space<vmem>>, vector<1x8x128xf32>,
    %669 = vector.shape_cast %650 : vector<8x1xi1> to vector<8x1xi1>
    %670 = vector.broadcast %669 : vector<8x1xi1> to vector<8x128xi1>
    %671 = arith.select %670, %623, %576 : vector<8x128xi1>, vector<8x128xf32>
    %672 = vector.shape_cast %650 : vector<8x1xi1> to vector<8x1xi1>
    %673 = vector.broadcast %672 : vector<8x1xi1> to vector<8x128xi1>
    %674 = arith.select %673, %621, %579 : vector<8x128xi1>, vector<8x128xf32>
    %675 = vector.shape_cast %652 : vector<8x1xi1> to vector<8x1xi1>
    %676 = vector.broadcast %675 : vector<8x1xi1> to vector<8x128xi1>
    %677 = arith.select %676, %648, %582 : vector<8x128xi1>, vector<8x128xf32>
    %678 = vector.shape_cast %652 : vector<8x1xi1> to vector<8x1xi1>
    %679 = vector.broadcast %678 : vector<8x1xi1> to vector<8x128xi1>
    %680 = arith.select %679, %646, %585 : vector<8x128xi1>, vector<8x128xf32>
    %c7_i32_150 = arith.constant 7 : i32
    %c7_i32_151 = arith.constant 7 : i32
    %681 = arith.subi %c7_i32_151, %c7_i32_150 : i32
    %682 = arith.index_cast %c7_i32_150 : i32 to index
    %c0_152 = arith.constant 0 : index
    %c0_153 = arith.constant 0 : index
    %683 = vector.load %arg18[%682, %c0_152, %c0_153] : memref<8x8x512xf32, #tpu.memory_space<vmem>>, vector<1x8x512xf32>
    %684 = vector.shape_cast %683 : vector<1x8x512xf32> to vector<8x512xf32>
    %685 = arith.truncf %671 : vector<8x128xf32> to vector<8x128xbf16>
    %cst_154 = arith.constant dense<0.000000e+00> : vector<8x512xf32>
    %686 = tpu.matmul %685, %13, %cst_154 {dimension_numbers = #tpu.dot_dimension_numbers<[1], [0], [0], [1], [0, 0, 1, 1], [], []>} : vector<8x128xbf16>, vector<128x512xbf16>, vector<8x512xf32> -> vector<8x512xf32>
    %687 = arith.addf %684, %686 : vector<8x512xf32>
    %688 = arith.index_cast %681 : i32 to index
    %c0_155 = arith.constant 0 : index
    %c0_156 = arith.constant 0 : index
    %689 = vector.load %arg19[%688, %c0_155, %c0_156] : memref<8x8x512xf32, #tpu.memory_space<vmem>>, vector<1x8x512xf32>
    %690 = vector.shape_cast %689 : vector<1x8x512xf32> to vector<8x512xf32>
    %691 = arith.truncf %677 : vector<8x128xf32> to vector<8x128xbf16>
    %cst_157 = arith.constant dense<0.000000e+00> : vector<8x512xf32>
    %692 = tpu.matmul %691, %14, %cst_157 {dimension_numbers = #tpu.dot_dimension_numbers<[1], [0], [0], [1], [0, 0, 1, 1], [], []>} : vector<8x128xbf16>, vector<128x512xbf16>, vector<8x512xf32> -> vector<8x512xf32>
    %693 = arith.addf %690, %692 : vector<8x512xf32>
    %694 = vector.extract_strided_slice %687 {offsets = [0, 0], sizes = [8, 128], strides = [1, 1]} : vector<8x512xf32> to vector<8x128xf32>
    %695 = arith.negf %694 : vector<8x128xf32>
    %696 = math.exp %695 : vector<8x128xf32>
    %cst_158 = arith.constant 1.000000e+00 : f32
    %697 = vector.broadcast %cst_158 : f32 to vector<8x128xf32>
    %698 = arith.addf %697, %696 : vector<8x128xf32>
    %699 = arith.divf %697, %698 : vector<8x128xf32>
    %700 = vector.extract_strided_slice %687 {offsets = [0, 128], sizes = [8, 128], strides = [1, 1]} : vector<8x512xf32> to vector<8x128xf32>
    %701 = arith.negf %700 : vector<8x128xf32>
    %702 = math.exp %701 : vector<8x128xf32>
    %cst_159 = arith.constant 1.000000e+00 : f32
    %703 = vector.broadcast %cst_159 : f32 to vector<8x128xf32>
    %704 = arith.addf %703, %702 : vector<8x128xf32>
    %705 = arith.divf %703, %704 : vector<8x128xf32>
    %706 = vector.extract_strided_slice %687 {offsets = [0, 256], sizes = [8, 128], strides = [1, 1]} : vector<8x512xf32> to vector<8x128xf32>
    %707 = math.tanh %706 : vector<8x128xf32>
    %708 = vector.extract_strided_slice %687 {offsets = [0, 384], sizes = [8, 128], strides = [1, 1]} : vector<8x512xf32> to vector<8x128xf32>
    %709 = arith.negf %708 : vector<8x128xf32>
    %710 = math.exp %709 : vector<8x128xf32>
    %cst_160 = arith.constant 1.000000e+00 : f32
    %711 = vector.broadcast %cst_160 : f32 to vector<8x128xf32>
    %712 = arith.addf %711, %710 : vector<8x128xf32>
    %713 = arith.divf %711, %712 : vector<8x128xf32>
    %714 = arith.mulf %705, %674 : vector<8x128xf32>
    %715 = arith.mulf %699, %707 : vector<8x128xf32>
    %716 = arith.addf %714, %715 : vector<8x128xf32>
    %717 = math.tanh %716 : vector<8x128xf32>
    %718 = arith.mulf %713, %717 : vector<8x128xf32>
    %719 = vector.extract_strided_slice %693 {offsets = [0, 0], sizes = [8, 128], strides = [1, 1]} : vector<8x512xf32> to vector<8x128xf32>
    %720 = arith.negf %719 : vector<8x128xf32>
    %721 = math.exp %720 : vector<8x128xf32>
    %cst_161 = arith.constant 1.000000e+00 : f32
    %722 = vector.broadcast %cst_161 : f32 to vector<8x128xf32>
    %723 = arith.addf %722, %721 : vector<8x128xf32>
    %724 = arith.divf %722, %723 : vector<8x128xf32>
    %725 = vector.extract_strided_slice %693 {offsets = [0, 128], sizes = [8, 128], strides = [1, 1]} : vector<8x512xf32> to vector<8x128xf32>
    %726 = arith.negf %725 : vector<8x128xf32>
    %727 = math.exp %726 : vector<8x128xf32>
    %cst_162 = arith.constant 1.000000e+00 : f32
    %728 = vector.broadcast %cst_162 : f32 to vector<8x128xf32>
    %729 = arith.addf %728, %727 : vector<8x128xf32>
    %730 = arith.divf %728, %729 : vector<8x128xf32>
    %731 = vector.extract_strided_slice %693 {offsets = [0, 256], sizes = [8, 128], strides = [1, 1]} : vector<8x512xf32> to vector<8x128xf32>
    %732 = math.tanh %731 : vector<8x128xf32>
    %733 = vector.extract_strided_slice %693 {offsets = [0, 384], sizes = [8, 128], strides = [1, 1]} : vector<8x512xf32> to vector<8x128xf32>
    %734 = arith.negf %733 : vector<8x128xf32>
    %735 = math.exp %734 : vector<8x128xf32>
    %cst_163 = arith.constant 1.000000e+00 : f32
    %736 = vector.broadcast %cst_163 : f32 to vector<8x128xf32>
    %737 = arith.addf %736, %735 : vector<8x128xf32>
    %738 = arith.divf %736, %737 : vector<8x128xf32>
    %739 = arith.mulf %730, %680 : vector<8x128xf32>
    %740 = arith.mulf %724, %732 : vector<8x128xf32>
    %741 = arith.addf %739, %740 : vector<8x128xf32>
    %742 = math.tanh %741 : vector<8x128xf32>
    %743 = arith.mulf %738, %742 : vector<8x128xf32>
    %744 = vector.broadcast %c7_i32_150 : i32 to vector<8x1xi32>
    %745 = arith.cmpi sgt, %0, %744 : vector<8x1xi32>
    %746 = vector.broadcast %681 : i32 to vector<8x1xi32>
    %747 = arith.cmpi sgt, %0, %746 : vector<8x1xi32>
    %cst_164 = arith.constant 0.000000e+00 : f32
    %748 = vector.shape_cast %745 : vector<8x1xi1> to vector<8x1xi1>
    %749 = vector.broadcast %748 : vector<8x1xi1> to vector<8x128xi1>
    %750 = vector.broadcast %cst_164 : f32 to vector<8x128xf32>
    %751 = arith.select %749, %718, %750 : vector<8x128xi1>, vector<8x128xf32>
    %752 = arith.index_cast %c7_i32_150 : i32 to index
    %c0_165 = arith.constant 0 : index
    %c0_166 = arith.constant 0 : index
    %753 = vector.load %arg20[%752, %c0_165, %c0_166] : memref<8x8x128xf32, #tpu.memory_space<vmem>>, vector<1x8x128xf32>
    %754 = vector.shape_cast %753 : vector<1x8x128xf32> to vector<8x128xf32>
    %755 = vector.shape_cast %751 : vector<8x128xf32> to vector<1x8x128xf32>
    tpu.vector_store %arg20[%752, %c0_165, %c0_166], %755 {strides = array<i32>} : memref<8x8x128xf32, #tpu.memory_space<vmem>>, vector<1x8x128xf32>,
    %cst_167 = arith.constant 0.000000e+00 : f32
    %756 = vector.shape_cast %747 : vector<8x1xi1> to vector<8x1xi1>
    %757 = vector.broadcast %756 : vector<8x1xi1> to vector<8x128xi1>
    %758 = vector.broadcast %cst_167 : f32 to vector<8x128xf32>
    %759 = arith.select %757, %743, %758 : vector<8x128xi1>, vector<8x128xf32>
    %760 = arith.index_cast %681 : i32 to index
    %c0_168 = arith.constant 0 : index
    %c0_169 = arith.constant 0 : index
    %761 = vector.load %arg21[%760, %c0_168, %c0_169] : memref<8x8x128xf32, #tpu.memory_space<vmem>>, vector<1x8x128xf32>
    %762 = vector.shape_cast %761 : vector<1x8x128xf32> to vector<8x128xf32>
    %763 = vector.shape_cast %759 : vector<8x128xf32> to vector<1x8x128xf32>
    tpu.vector_store %arg21[%760, %c0_168, %c0_169], %763 {strides = array<i32>} : memref<8x8x128xf32, #tpu.memory_space<vmem>>, vector<1x8x128xf32>,
    %764 = vector.shape_cast %745 : vector<8x1xi1> to vector<8x1xi1>
    %765 = vector.broadcast %764 : vector<8x1xi1> to vector<8x128xi1>
    %766 = arith.select %765, %718, %671 : vector<8x128xi1>, vector<8x128xf32>
    %767 = vector.shape_cast %745 : vector<8x1xi1> to vector<8x1xi1>
    %768 = vector.broadcast %767 : vector<8x1xi1> to vector<8x128xi1>
    %769 = arith.select %768, %716, %674 : vector<8x128xi1>, vector<8x128xf32>
    %770 = vector.shape_cast %747 : vector<8x1xi1> to vector<8x1xi1>
    %771 = vector.broadcast %770 : vector<8x1xi1> to vector<8x128xi1>
    %772 = arith.select %771, %743, %677 : vector<8x128xi1>, vector<8x128xf32>
    %773 = vector.shape_cast %747 : vector<8x1xi1> to vector<8x1xi1>
    %774 = vector.broadcast %773 : vector<8x1xi1> to vector<8x128xi1>
    %775 = arith.select %774, %741, %680 : vector<8x128xi1>, vector<8x128xf32>
    %c8_i32 = arith.constant 8 : i32
    %c0_170 = arith.constant 0 : index
    %c0_171 = arith.constant 0 : index
    %c0_172 = arith.constant 0 : index
    %776 = vector.load %arg20[%c0_170, %c0_171, %c0_172] : memref<8x8x128xf32, #tpu.memory_space<vmem>>, vector<8x8x128xf32>
    %c0_173 = arith.constant 0 : index
    %c0_174 = arith.constant 0 : index
    %c0_175 = arith.constant 0 : index
    %777 = vector.load %arg21[%c0_173, %c0_174, %c0_175] : memref<8x8x128xf32, #tpu.memory_space<vmem>>, vector<8x8x128xf32>
    %778 = tpu.concatenate %776, %777 in 2 : vector<8x8x128xf32>, vector<8x8x128xf32> -> vector<8x8x256xf32>
    %779 = vector.shape_cast %778 : vector<8x8x256xf32> to vector<64x256xf32>
    %780 = arith.truncf %779 : vector<64x256xf32> to vector<64x256xbf16>
    %c0_176 = arith.constant 0 : index
    %c0_177 = arith.constant 0 : index
    %781 = vector.load %arg8[%c0_176, %c0_177] : memref<256x256xbf16, #tpu.memory_space<vmem>>, vector<256x256xbf16>
    %cst_178 = arith.constant dense<0.000000e+00> : vector<64x256xf32>
    %782 = tpu.matmul %780, %781, %cst_178 {dimension_numbers = #tpu.dot_dimension_numbers<[1], [0], [0], [1], [0, 0, 1, 1], [], []>} : vector<64x256xbf16>, vector<256x256xbf16>, vector<64x256xf32> -> vector<64x256xf32>
    %783 = vector.shape_cast %782 : vector<64x256xf32> to vector<8x8x256xf32>
    %c0_179 = arith.constant 0 : index
    %c0_180 = arith.constant 0 : index
    %784 = vector.load %arg1[%c0_179, %c0_180] : memref<8x256xbf16, #tpu.memory_space<vmem>>, vector<8x256xbf16>
    %c0_181 = arith.constant 0 : index
    %c0_182 = arith.constant 0 : index
    %785 = vector.load %arg9[%c0_181, %c0_182] : memref<256x256xbf16, #tpu.memory_space<vmem>>, vector<256x256xbf16>
    %cst_183 = arith.constant dense<0.000000e+00> : vector<8x256xf32>
    %786 = tpu.matmul %784, %785, %cst_183 {dimension_numbers = #tpu.dot_dimension_numbers<[1], [0], [0], [1], [0, 0, 1, 1], [], []>} : vector<8x256xbf16>, vector<256x256xbf16>, vector<8x256xf32> -> vector<8x256xf32>
    %787 = vector.shape_cast %786 : vector<8x256xf32> to vector<1x8x256xf32>
    %788 = vector.broadcast %787 : vector<1x8x256xf32> to vector<8x8x256xf32>
    %789 = arith.addf %783, %788 : vector<8x8x256xf32>
    %c0_184 = arith.constant 0 : index
    %c0_185 = arith.constant 0 : index
    %790 = vector.load %arg10[%c0_184, %c0_185] : memref<1x256xf32, #tpu.memory_space<vmem>>, vector<1x256xf32>
    %791 = vector.shape_cast %790 : vector<1x256xf32> to vector<1x1x256xf32>
    %792 = vector.broadcast %791 : vector<1x1x256xf32> to vector<8x8x256xf32>
    %793 = arith.addf %789, %792 : vector<8x8x256xf32>
    %794 = math.tanh %793 : vector<8x8x256xf32>
    %c0_186 = arith.constant 0 : index
    %c0_187 = arith.constant 0 : index
    %795 = vector.load %arg11[%c0_186, %c0_187] : memref<1x256xf32, #tpu.memory_space<vmem>>, vector<1x256xf32>
    %796 = vector.shape_cast %795 : vector<1x256xf32> to vector<1x1x256xf32>
    %797 = vector.broadcast %796 : vector<1x1x256xf32> to vector<8x8x256xf32>
    %798 = arith.mulf %794, %797 : vector<8x8x256xf32>
    %cst_188 = arith.constant dense<0.000000e+00> : vector<8x8xf32>
    %799 = vector.multi_reduction <add>, %798, %cst_188 [2] : vector<8x8x256xf32> to vector<8x8xf32>
    %800 = tpu.iota {dimensions = array<i32: 0>} : vector<8x8xi32>
    %c0_189 = arith.constant 0 : index
    %c0_190 = arith.constant 0 : index
    %801 = vector.load %arg3[%c0_189, %c0_190] : memref<1x8xi32, #tpu.memory_space<vmem>>, vector<1x8xi32>
    %802 = vector.broadcast %801 : vector<1x8xi32> to vector<8x8xi32>
    %803 = arith.cmpi slt, %800, %802 : vector<8x8xi32>
    %cst_191 = arith.constant -1.000000e+06 : f32
    %804 = vector.broadcast %cst_191 : f32 to vector<8x8xf32>
    %805 = arith.select %803, %799, %804 : vector<8x8xi1>, vector<8x8xf32>
    %cst_192 = arith.constant dense<0xFF800000> : vector<8xf32>
    %806 = vector.multi_reduction <maximumf>, %805, %cst_192 [0] : vector<8x8xf32> to vector<8xf32>
    %807 = vector.shape_cast %806 : vector<8xf32> to vector<1x8xf32>
    %808 = vector.broadcast %807 : vector<1x8xf32> to vector<8x8xf32>
    %809 = arith.subf %805, %808 : vector<8x8xf32>
    %810 = math.exp %809 : vector<8x8xf32>
    %cst_193 = arith.constant dense<0.000000e+00> : vector<8xf32>
    %811 = vector.multi_reduction <add>, %810, %cst_193 [0] : vector<8x8xf32> to vector<8xf32>
    %812 = vector.shape_cast %811 : vector<8xf32> to vector<1x8xf32>
    %813 = tpu.reciprocal %812 {approx = true} : vector<1x8xf32> -> vector<1x8xf32>
    %814 = vector.broadcast %813 : vector<1x8xf32> to vector<8x8xf32>
    %815 = arith.mulf %810, %814 : vector<8x8xf32>
    %c0_194 = arith.constant 0 : index
    %c0_195 = arith.constant 0 : index
    %816 = vector.load %arg17[%c0_194, %c0_195] : memref<8x8xf32, #tpu.memory_space<vmem>>, vector<8x8xf32>
    tpu.vector_store %arg17[%c0_194, %c0_195], %815 {strides = array<i32>} : memref<8x8xf32, #tpu.memory_space<vmem>>, vector<8x8xf32>,
    %817 = vector.shape_cast %815 : vector<8x8xf32> to vector<8x8x1xf32>
    %818 = vector.broadcast %817 : vector<8x8x1xf32> to vector<8x8x256xf32>
    %819 = arith.mulf %818, %778 : vector<8x8x256xf32>
    %cst_196 = arith.constant dense<0.000000e+00> : vector<8x256xf32>
    %820 = vector.multi_reduction <add>, %819, %cst_196 [0] : vector<8x8x256xf32> to vector<8x256xf32>
    %821 = arith.truncf %820 : vector<8x256xf32> to vector<8x256xbf16>
    %c0_197 = arith.constant 0 : index
    %c0_198 = arith.constant 0 : index
    %822 = vector.load %arg12[%c0_197, %c0_198] : memref<256x128xbf16, #tpu.memory_space<vmem>>, vector<256x128xbf16>
    %cst_199 = arith.constant dense<0.000000e+00> : vector<8x128xf32>
    %823 = tpu.matmul %821, %822, %cst_199 {dimension_numbers = #tpu.dot_dimension_numbers<[1], [0], [0], [1], [0, 0, 1, 1], [], []>} : vector<8x256xbf16>, vector<256x128xbf16>, vector<8x128xf32> -> vector<8x128xf32>
    %c0_200 = arith.constant 0 : index
    %c0_201 = arith.constant 0 : index
    %824 = vector.load %arg13[%c0_200, %c0_201] : memref<1x128xf32, #tpu.memory_space<vmem>>, vector<1x128xf32>
    %825 = vector.broadcast %824 : vector<1x128xf32> to vector<8x128xf32>
    %826 = arith.addf %823, %825 : vector<8x128xf32>
    %cst_202 = arith.constant 0.000000e+00 : f32
    %827 = vector.broadcast %cst_202 : f32 to vector<8x128xf32>
    %828 = arith.maximumf %826, %827 : vector<8x128xf32>
    %c0_203 = arith.constant 0 : index
    %c0_204 = arith.constant 0 : index
    %829 = vector.load %arg14[%c0_203, %c0_204] : memref<128x3xf32, #tpu.memory_space<vmem>>, vector<128x3xf32>
    %cst_205 = arith.constant dense<0.000000e+00> : vector<8x3xf32>
    %830 = tpu.matmul %828, %829, %cst_205 {dimension_numbers = #tpu.dot_dimension_numbers<[1], [0], [0], [1], [0, 0, 1, 1], [], []>} : vector<8x128xf32>, vector<128x3xf32>, vector<8x3xf32> -> vector<8x3xf32>
    %c0_206 = arith.constant 0 : index
    %c0_207 = arith.constant 0 : index
    %831 = vector.load %arg15[%c0_206, %c0_207] : memref<1x3xf32, #tpu.memory_space<vmem>>, vector<1x3xf32>
    %832 = vector.broadcast %831 : vector<1x3xf32> to vector<8x3xf32>
    %833 = arith.addf %830, %832 : vector<8x3xf32>
    %c0_208 = arith.constant 0 : index
    %c0_209 = arith.constant 0 : index
    %834 = vector.load %arg16[%c0_208, %c0_209] : memref<8x3xf32, #tpu.memory_space<vmem>>, vector<8x3xf32>
    tpu.vector_store %arg16[%c0_208, %c0_209], %833 {strides = array<i32>} : memref<8x3xf32, #tpu.memory_space<vmem>>, vector<8x3xf32>,
    return
  }
}

</mosaic_0001>

<llo_original>
// kernel: atgru_forward.1
$region0: #{atgru_forward.1}
  #allocation0 [shape = 'u32[]', space=smem, size = 0x4, offset = 0x4, fixed_abs, tag = 'smem constant byte address 0x4 - core index']
  #allocation1 [shape = 'u32[144,128]{1,0:T(1,128)}', space=vmem, size = 0x12000, scoped, tag = 'internal scratch']
  #allocation2 [shape = 'f32[8,8,512]{2,1,0:T(8,128)}', space=vmem, size = 0x20000, scoped, tag = 'scratch operand']
  #allocation3 [shape = 'f32[8,8,512]{2,1,0:T(8,128)}', space=vmem, size = 0x20000, scoped, tag = 'scratch operand']
  #allocation4 [shape = 'f32[8,8,128]{2,1,0:T(8,128)}', space=vmem, size = 0x8000, scoped, tag = 'scratch operand']
  #allocation5 [shape = 'f32[8,8,128]{2,1,0:T(8,128)}', space=vmem, size = 0x8000, scoped, tag = 'scratch operand']
  %s0 = inlined_call_operand.vmem [shape: bf16[64,256], index: 0, kind: input, shape index: {}]
  %s1 = inlined_call_operand.vmem [shape: bf16[8,256], index: 1, kind: input, shape index: {}]
  %s2 = inlined_call_operand.vmem [shape: s32[8,1], index: 2, kind: input, shape index: {}]
  %s3 = inlined_call_operand.vmem [shape: s32[1,8], index: 3, kind: input, shape index: {}]
  %s4 = inlined_call_operand.vmem [shape: bf16[256,1024], index: 4, kind: input, shape index: {}]
  %s5 = inlined_call_operand.vmem [shape: bf16[128,512], index: 5, kind: input, shape index: {}]
  %s6 = inlined_call_operand.vmem [shape: bf16[128,512], index: 6, kind: input, shape index: {}]
  %s7 = inlined_call_operand.vmem [shape: f32[1,1024], index: 7, kind: input, shape index: {}]
  %s8 = inlined_call_operand.vmem [shape: bf16[256,256], index: 8, kind: input, shape index: {}]
  %s9 = inlined_call_operand.vmem [shape: bf16[256,256], index: 9, kind: input, shape index: {}]
  %s10 = inlined_call_operand.vmem [shape: f32[1,256], index: 10, kind: input, shape index: {}]
  %s11 = inlined_call_operand.vmem [shape: f32[1,256], index: 11, kind: input, shape index: {}]
  %s12 = inlined_call_operand.vmem [shape: bf16[256,128], index: 12, kind: input, shape index: {}]
  %s13 = inlined_call_operand.vmem [shape: f32[1,128], index: 13, kind: input, shape index: {}]
  %s14 = inlined_call_operand.vmem [shape: f32[128,3], index: 14, kind: input, shape index: {}]
  %s15 = inlined_call_operand.vmem [shape: f32[1,3], index: 15, kind: input, shape index: {}]
  %s16 = inlined_call_operand.vmem [shape: f32[8,3], index: 16, kind: output, shape index: {0}]
  %s17 = inlined_call_operand.vmem [shape: f32[8,8], index: 17, kind: output, shape index: {1}]
  %18 = xla_tuple %s16, %s17
  %s19 = sld [smem:[#allocation0]]
  $region82: #{atgru_forward.1} parent=0
    _
  %s21 = ssub.s32 1, %s19
  %s22 = scalar_select 0, %s21, %s19
  // Predicated region
  $region2: #{atgru_forward.1} parent=0 // pred_check
    _
  $region3: #{atgru_forward.1} parent=0 // pred_check_branch
    %24 = sbr.rel (0) target = $region5
  $region4: #{atgru_forward.1} parent=0 // pred_region
    _
  $region5: #{atgru_forward.1} parent=0 // pred_fallthru
    _
  // Predicated region
  $region6: #{atgru_forward.1} parent=0 // pred_check
    _
  $region7: #{atgru_forward.1} parent=0 // pred_check_branch
    %26 = sbr.rel (0) target = $region9
  $region8: #{atgru_forward.1} parent=0 // pred_region
    _
  $region9: #{atgru_forward.1} parent=0 // pred_fallthru
    _
  // Predicated region
  $region10: #{atgru_forward.1} parent=0 // pred_check
    _
  $region11: #{atgru_forward.1} parent=0 // pred_check_branch
    %28 = sbr.rel (0) target = $region13
  $region12: #{atgru_forward.1} parent=0 // pred_region
    _
  $region13: #{atgru_forward.1} parent=0 // pred_fallthru
    _
  // Predicated region
  $region14: #{atgru_forward.1} parent=0 // pred_check
    _
  $region15: #{atgru_forward.1} parent=0 // pred_check_branch
    %30 = sbr.rel (0) target = $region17
  $region16: #{atgru_forward.1} parent=0 // pred_region
    _
  $region17: #{atgru_forward.1} parent=0 // pred_fallthru
    _
  // Predicated region
  $region18: #{atgru_forward.1} parent=0 // pred_check
    _
  $region19: #{atgru_forward.1} parent=0 // pred_check_branch
    %32 = sbr.rel (0) target = $region21
  $region20: #{atgru_forward.1} parent=0 // pred_region
    _
  $region21: #{atgru_forward.1} parent=0 // pred_fallthru
    _
  // Predicated region
  $region22: #{atgru_forward.1} parent=0 // pred_check
    _
  $region23: #{atgru_forward.1} parent=0 // pred_check_branch
    %34 = sbr.rel (0) target = $region25
  $region24: #{atgru_forward.1} parent=0 // pred_region
    _
  $region25: #{atgru_forward.1} parent=0 // pred_fallthru
    _
  // Predicated region
  $region26: #{atgru_forward.1} parent=0 // pred_check
    _
  $region27: #{atgru_forward.1} parent=0 // pred_check_branch
    %36 = sbr.rel (0) target = $region29
  $region28: #{atgru_forward.1} parent=0 // pred_region
    _
  $region29: #{atgru_forward.1} parent=0 // pred_fallthru
    _
  // Predicated region
  $region30: #{atgru_forward.1} parent=0 // pred_check
    _
  $region31: #{atgru_forward.1} parent=0 // pred_check_branch
    %38 = sbr.rel (0) target = $region33
  $region32: #{atgru_forward.1} parent=0 // pred_region
    _
  $region33: #{atgru_forward.1} parent=0 // pred_fallthru
    _
  // Predicated region
  $region34: #{atgru_forward.1} parent=0 // pred_check
    _
  $region35: #{atgru_forward.1} parent=0 // pred_check_branch
    %40 = sbr.rel (0) target = $region37
  $region36: #{atgru_forward.1} parent=0 // pred_region
    _
  $region37: #{atgru_forward.1} parent=0 // pred_fallthru
    _
  // Predicated region
  $region38: #{atgru_forward.1} parent=0 // pred_check
    _
  $region39: #{atgru_forward.1} parent=0 // pred_check_branch
    %42 = sbr.rel (0) target = $region41
  $region40: #{atgru_forward.1} parent=0 // pred_region
    _
  $region41: #{atgru_forward.1} parent=0 // pred_fallthru
    _
  // Predicated region
  $region42: #{atgru_forward.1} parent=0 // pred_check
    _
  $region43: #{atgru_forward.1} parent=0 // pred_check_branch
    %44 = sbr.rel (0) target = $region45
  $region44: #{atgru_forward.1} parent=0 // pred_region
    _
  $region45: #{atgru_forward.1} parent=0 // pred_fallthru
    _
  // Predicated region
  $region46: #{atgru_forward.1} parent=0 // pred_check
    _
  $region47: #{atgru_forward.1} parent=0 // pred_check_branch
    %46 = sbr.rel (0) target = $region49
  $region48: #{atgru_forward.1} parent=0 // pred_region
    _
  $region49: #{atgru_forward.1} parent=0 // pred_fallthru
    _
  // Predicated region
  $region50: #{atgru_forward.1} parent=0 // pred_check
    _
  $region51: #{atgru_forward.1} parent=0 // pred_check_branch
    %48 = sbr.rel (0) target = $region53
  $region52: #{atgru_forward.1} parent=0 // pred_region
    _
  $region53: #{atgru_forward.1} parent=0 // pred_fallthru
    _
  // Predicated region
  $region54: #{atgru_forward.1} parent=0 // pred_check
    _
  $region55: #{atgru_forward.1} parent=0 // pred_check_branch
    %50 = sbr.rel (0) target = $region57
  $region56: #{atgru_forward.1} parent=0 // pred_region
    _
  $region57: #{atgru_forward.1} parent=0 // pred_fallthru
    _
  // Predicated region
  $region58: #{atgru_forward.1} parent=0 // pred_check
    _
  $region59: #{atgru_forward.1} parent=0 // pred_check_branch
    %52 = sbr.rel (0) target = $region61
  $region60: #{atgru_forward.1} parent=0 // pred_region
    _
  $region61: #{atgru_forward.1} parent=0 // pred_fallthru
    _
  // Predicated region
  $region62: #{atgru_forward.1} parent=0 // pred_check
    _
  $region63: #{atgru_forward.1} parent=0 // pred_check_branch
    %54 = sbr.rel (0) target = $region65
  $region64: #{atgru_forward.1} parent=0 // pred_region
    _
  $region65: #{atgru_forward.1} parent=0 // pred_fallthru
    _
  %v56 = vld [vmem:[%s2] sm:$0xff]
  %v57 = vld [vmem:[%s0] sm:$0xff]
  %v58 = vld [vmem:[%s0 + $0x8] sm:$0xff]
  %v59 = vld [vmem:[%s0 + $0x10] sm:$0xff]
  %v60 = vld [vmem:[%s0 + $0x18] sm:$0xff]
  %v61 = vld [vmem:[%s0 + $0x20] sm:$0xff]
  %v62 = vld [vmem:[%s0 + $0x28] sm:$0xff]
  %v63 = vld [vmem:[%s0 + $0x30] sm:$0xff]
  %v64 = vld [vmem:[%s0 + $0x38] sm:$0xff]
  %v65 = vld [vmem:[%s4] sm:$0xff]
  %v66 = vld [vmem:[%s4 + $0x8] sm:$0xff]
  %v67 = vld [vmem:[%s4 + $0x10] sm:$0xff]
  %v68 = vld [vmem:[%s4 + $0x18] sm:$0xff]
  %v69 = vld [vmem:[%s4 + $0x20] sm:$0xff]
  %v70 = vld [vmem:[%s4 + $0x28] sm:$0xff]
  %v71 = vld [vmem:[%s4 + $0x30] sm:$0xff]
  %v72 = vld [vmem:[%s4 + $0x38] sm:$0xff]
  %v73 = vld [vmem:[%s4 + $0x40] sm:$0xff]
  %v74 = vld [vmem:[%s4 + $0x48] sm:$0xff]
  %v75 = vld [vmem:[%s4 + $0x50] sm:$0xff]
  %v76 = vld [vmem:[%s4 + $0x58] sm:$0xff]
  %v77 = vld [vmem:[%s4 + $0x60] sm:$0xff]
  %v78 = vld [vmem:[%s4 + $0x68] sm:$0xff]
  %v79 = vld [vmem:[%s4 + $0x70] sm:$0xff]
  %v80 = vld [vmem:[%s4 + $0x78] sm:$0xff]
  %v81 = vld [vmem:[%s4 + $0x80] sm:$0xff]
  %v82 = vld [vmem:[%s4 + $0x88] sm:$0xff]
  %v83 = vld [vmem:[%s4 + $0x90] sm:$0xff]
  %v84 = vld [vmem:[%s4 + $0x98] sm:$0xff]
  %v85 = vld [vmem:[%s4 + $0xa0] sm:$0xff]
  %v86 = vld [vmem:[%s4 + $0xa8] sm:$0xff]
  %v87 = vld [vmem:[%s4 + $0xb0] sm:$0xff]
  %v88 = vld [vmem:[%s4 + $0xb8] sm:$0xff]
  %v89 = vld [vmem:[%s4 + $0xc0] sm:$0xff]
  %v90 = vld [vmem:[%s4 + $0xc8] sm:$0xff]
  %v91 = vld [vmem:[%s4 + $0xd0] sm:$0xff]
  %v92 = vld [vmem:[%s4 + $0xd8] sm:$0xff]
  %v93 = vld [vmem:[%s4 + $0xe0] sm:$0xff]
  %v94 = vld [vmem:[%s4 + $0xe8] sm:$0xff]
  %v95 = vld [vmem:[%s4 + $0xf0] sm:$0xff]
  %v96 = vld [vmem:[%s4 + $0xf8] sm:$0xff]
  %v97 = vld [vmem:[%s4 + $0x100] sm:$0xff]
  %v98 = vld [vmem:[%s4 + $0x108] sm:$0xff]
  %v99 = vld [vmem:[%s4 + $0x110] sm:$0xff]
  %v100 = vld [vmem:[%s4 + $0x118] sm:$0xff]
  %v101 = vld [vmem:[%s4 + $0x120] sm:$0xff]
  %v102 = vld [vmem:[%s4 + $0x128] sm:$0xff]
  %v103 = vld [vmem:[%s4 + $0x130] sm:$0xff]
  %v104 = vld [vmem:[%s4 + $0x138] sm:$0xff]
  %v105 = vld [vmem:[%s4 + $0x140] sm:$0xff]
  %v106 = vld [vmem:[%s4 + $0x148] sm:$0xff]
  %v107 = vld [vmem:[%s4 + $0x150] sm:$0xff]
  %v108 = vld [vmem:[%s4 + $0x158] sm:$0xff]
  %v109 = vld [vmem:[%s4 + $0x160] sm:$0xff]
  %v110 = vld [vmem:[%s4 + $0x168] sm:$0xff]
  %v111 = vld [vmem:[%s4 + $0x170] sm:$0xff]
  %v112 = vld [vmem:[%s4 + $0x178] sm:$0xff]
  %v113 = vld [vmem:[%s4 + $0x180] sm:$0xff]
  %v114 = vld [vmem:[%s4 + $0x188] sm:$0xff]
  %v115 = vld [vmem:[%s4 + $0x190] sm:$0xff]
  %v116 = vld [vmem:[%s4 + $0x198] sm:$0xff]
  %v117 = vld [vmem:[%s4 + $0x1a0] sm:$0xff]
  %v118 = vld [vmem:[%s4 + $0x1a8] sm:$0xff]
  %v119 = vld [vmem:[%s4 + $0x1b0] sm:$0xff]
  %v120 = vld [vmem:[%s4 + $0x1b8] sm:$0xff]
  %v121 = vld [vmem:[%s4 + $0x1c0] sm:$0xff]
  %v122 = vld [vmem:[%s4 + $0x1c8] sm:$0xff]
  %v123 = vld [vmem:[%s4 + $0x1d0] sm:$0xff]
  %v124 = vld [vmem:[%s4 + $0x1d8] sm:$0xff]
  %v125 = vld [vmem:[%s4 + $0x1e0] sm:$0xff]
  %v126 = vld [vmem:[%s4 + $0x1e8] sm:$0xff]
  %v127 = vld [vmem:[%s4 + $0x1f0] sm:$0xff]
  %v128 = vld [vmem:[%s4 + $0x1f8] sm:$0xff]
  %v129 = vld [vmem:[%s4 + $0x200] sm:$0xff]
  %v130 = vld [vmem:[%s4 + $0x208] sm:$0xff]
  %v131 = vld [vmem:[%s4 + $0x210] sm:$0xff]
  %v132 = vld [vmem:[%s4 + $0x218] sm:$0xff]
  %v133 = vld [vmem:[%s4 + $0x220] sm:$0xff]
  %v134 = vld [vmem:[%s4 + $0x228] sm:$0xff]
  %v135 = vld [vmem:[%s4 + $0x230] sm:$0xff]
  %v136 = vld [vmem:[%s4 + $0x238] sm:$0xff]
  %v137 = vld [vmem:[%s4 + $0x240] sm:$0xff]
  %v138 = vld [vmem:[%s4 + $0x248] sm:$0xff]
  %v139 = vld [vmem:[%s4 + $0x250] sm:$0xff]
  %v140 = vld [vmem:[%s4 + $0x258] sm:$0xff]
  %v141 = vld [vmem:[%s4 + $0x260] sm:$0xff]
  %v142 = vld [vmem:[%s4 + $0x268] sm:$0xff]
  %v143 = vld [vmem:[%s4 + $0x270] sm:$0xff]
  %v144 = vld [vmem:[%s4 + $0x278] sm:$0xff]
  %v145 = vld [vmem:[%s4 + $0x280] sm:$0xff]
  %v146 = vld [vmem:[%s4 + $0x288] sm:$0xff]
  %v147 = vld [vmem:[%s4 + $0x290] sm:$0xff]
  %v148 = vld [vmem:[%s4 + $0x298] sm:$0xff]
  %v149 = vld [vmem:[%s4 + $0x2a0] sm:$0xff]
  %v150 = vld [vmem:[%s4 + $0x2a8] sm:$0xff]
  %v151 = vld [vmem:[%s4 + $0x2b0] sm:$0xff]
  %v152 = vld [vmem:[%s4 + $0x2b8] sm:$0xff]
  %v153 = vld [vmem:[%s4 + $0x2c0] sm:$0xff]
  %v154 = vld [vmem:[%s4 + $0x2c8] sm:$0xff]
  %v155 = vld [vmem:[%s4 + $0x2d0] sm:$0xff]
  %v156 = vld [vmem:[%s4 + $0x2d8] sm:$0xff]
  %v157 = vld [vmem:[%s4 + $0x2e0] sm:$0xff]
  %v158 = vld [vmem:[%s4 + $0x2e8] sm:$0xff]
  %v159 = vld [vmem:[%s4 + $0x2f0] sm:$0xff]
  %v160 = vld [vmem:[%s4 + $0x2f8] sm:$0xff]
  %v161 = vld [vmem:[%s4 + $0x300] sm:$0xff]
  %v162 = vld [vmem:[%s4 + $0x308] sm:$0xff]
  %v163 = vld [vmem:[%s4 + $0x310] sm:$0xff]
  %v164 = vld [vmem:[%s4 + $0x318] sm:$0xff]
  %v165 = vld [vmem:[%s4 + $0x320] sm:$0xff]
  %v166 = vld [vmem:[%s4 + $0x328] sm:$0xff]
  %v167 = vld [vmem:[%s4 + $0x330] sm:$0xff]
  %v168 = vld [vmem:[%s4 + $0x338] sm:$0xff]
  %v169 = vld [vmem:[%s4 + $0x340] sm:$0xff]
  %v170 = vld [vmem:[%s4 + $0x348] sm:$0xff]
  %v171 = vld [vmem:[%s4 + $0x350] sm:$0xff]
  %v172 = vld [vmem:[%s4 + $0x358] sm:$0xff]
  %v173 = vld [vmem:[%s4 + $0x360] sm:$0xff]
  %v174 = vld [vmem:[%s4 + $0x368] sm:$0xff]
  %v175 = vld [vmem:[%s4 + $0x370] sm:$0xff]
  %v176 = vld [vmem:[%s4 + $0x378] sm:$0xff]
  %v177 = vld [vmem:[%s4 + $0x380] sm:$0xff]
  %v178 = vld [vmem:[%s4 + $0x388] sm:$0xff]
  %v179 = vld [vmem:[%s4 + $0x390] sm:$0xff]
  %v180 = vld [vmem:[%s4 + $0x398] sm:$0xff]
  %v181 = vld [vmem:[%s4 + $0x3a0] sm:$0xff]
  %v182 = vld [vmem:[%s4 + $0x3a8] sm:$0xff]
  %v183 = vld [vmem:[%s4 + $0x3b0] sm:$0xff]
  %v184 = vld [vmem:[%s4 + $0x3b8] sm:$0xff]
  %v185 = vld [vmem:[%s4 + $0x3c0] sm:$0xff]
  %v186 = vld [vmem:[%s4 + $0x3c8] sm:$0xff]
  %v187 = vld [vmem:[%s4 + $0x3d0] sm:$0xff]
  %v188 = vld [vmem:[%s4 + $0x3d8] sm:$0xff]
  %v189 = vld [vmem:[%s4 + $0x3e0] sm:$0xff]
  %v190 = vld [vmem:[%s4 + $0x3e8] sm:$0xff]
  %v191 = vld [vmem:[%s4 + $0x3f0] sm:$0xff]
  %v192 = vld [vmem:[%s4 + $0x3f8] sm:$0xff]
  %v193 = vld [vmem:[%s7] sm:$0xff]
  %v195 = vlaneseq
  %v196 = vshrl.u32 %v195, 7
  %v197 = vsub.s32 0, %v196
  %v198 = vrot.slane %v193, %v197
  %v199 = vlaneseq
  %v200 = vshrl.u32 %v199, 7
  %v201 = vsub.s32 1, %v200
  %v202 = vrot.slane %v193, %v201
  %v203 = vlaneseq
  %v204 = vshrl.u32 %v203, 7
  %v205 = vsub.s32 2, %v204
  %v206 = vrot.slane %v193, %v205
  %v207 = vlaneseq
  %v208 = vshrl.u32 %v207, 7
  %v209 = vsub.s32 3, %v208
  %v210 = vrot.slane %v193, %v209
  %v211 = vlaneseq
  %v212 = vshrl.u32 %v211, 7
  %v213 = vsub.s32 4, %v212
  %v214 = vrot.slane %v193, %v213
  %v215 = vlaneseq
  %v216 = vshrl.u32 %v215, 7
  %v217 = vsub.s32 5, %v216
  %v218 = vrot.slane %v193, %v217
  %v219 = vlaneseq
  %v220 = vshrl.u32 %v219, 7
  %v221 = vsub.s32 6, %v220
  %v222 = vrot.slane %v193, %v221
  %v223 = vlaneseq
  %v224 = vshrl.u32 %v223, 7
  %v225 = vsub.s32 7, %v224
  %v226 = vrot.slane %v193, %v225
  %v243 = vunpack.c.l.b16 %v57
  %v244 = vunpack.c.h.b16 %v57
  %v245 = vunpack.c.l.b16 %v58
  %v246 = vunpack.c.h.b16 %v58
  %v247 = vunpack.c.l.b16 %v59
  %v248 = vunpack.c.h.b16 %v59
  %v249 = vunpack.c.l.b16 %v60
  %v250 = vunpack.c.h.b16 %v60
  %v251 = vunpack.c.l.b16 %v61
  %v252 = vunpack.c.h.b16 %v61
  %v253 = vunpack.c.l.b16 %v62
  %v254 = vunpack.c.h.b16 %v62
  %v255 = vunpack.c.l.b16 %v63
  %v256 = vunpack.c.h.b16 %v63
  %v257 = vunpack.c.l.b16 %v64
  %v258 = vunpack.c.h.b16 %v64
  %v259 = vpack.c.b16 %v245, %v243
  %v260 = vpack.c.b16 %v246, %v244
  %v261 = vpack.c.b16 %v249, %v247
  %v262 = vpack.c.b16 %v250, %v248
  %v263 = vpack.c.b16 %v253, %v251
  %v264 = vpack.c.b16 %v254, %v252
  %v265 = vpack.c.b16 %v257, %v255
  %v266 = vpack.c.b16 %v258, %v256
  %v403 = vunpack.c.l.b16 %v65
  %v404 = vunpack.c.h.b16 %v65
  %v405 = vunpack.c.l.b16 %v66
  %v406 = vunpack.c.h.b16 %v66
  %v407 = vunpack.c.l.b16 %v67
  %v408 = vunpack.c.h.b16 %v67
  %v409 = vunpack.c.l.b16 %v68
  %v410 = vunpack.c.h.b16 %v68
  %v411 = vunpack.c.l.b16 %v69
  %v412 = vunpack.c.h.b16 %v69
  %v413 = vunpack.c.l.b16 %v70
  %v414 = vunpack.c.h.b16 %v70
  %v415 = vunpack.c.l.b16 %v71
  %v416 = vunpack.c.h.b16 %v71
  %v417 = vunpack.c.l.b16 %v72
  %v418 = vunpack.c.h.b16 %v72
  %v419 = vunpack.c.l.b16 %v73
  %v420 = vunpack.c.h.b16 %v73
  %v421 = vunpack.c.l.b16 %v74
  %v422 = vunpack.c.h.b16 %v74
  %v423 = vunpack.c.l.b16 %v75
  %v424 = vunpack.c.h.b16 %v75
  %v425 = vunpack.c.l.b16 %v76
  %v426 = vunpack.c.h.b16 %v76
  %v427 = vunpack.c.l.b16 %v77
  %v428 = vunpack.c.h.b16 %v77
  %v429 = vunpack.c.l.b16 %v78
  %v430 = vunpack.c.h.b16 %v78
  %v431 = vunpack.c.l.b16 %v79
  %v432 = vunpack.c.h.b16 %v79
  %v433 = vunpack.c.l.b16 %v80
  %v434 = vunpack.c.h.b16 %v80
  %v435 = vunpack.c.l.b16 %v81
  %v436 = vunpack.c.h.b16 %v81
  %v437 = vunpack.c.l.b16 %v82
  %v438 = vunpack.c.h.b16 %v82
  %v439 = vunpack.c.l.b16 %v83
  %v440 = vunpack.c.h.b16 %v83
  %v441 = vunpack.c.l.b16 %v84
  %v442 = vunpack.c.h.b16 %v84
  %v443 = vunpack.c.l.b16 %v85
  %v444 = vunpack.c.h.b16 %v85
  %v445 = vunpack.c.l.b16 %v86
  %v446 = vunpack.c.h.b16 %v86
  %v447 = vunpack.c.l.b16 %v87
  %v448 = vunpack.c.h.b16 %v87
  %v449 = vunpack.c.l.b16 %v88
  %v450 = vunpack.c.h.b16 %v88
  %v451 = vunpack.c.l.b16 %v89
  %v452 = vunpack.c.h.b16 %v89
  %v453 = vunpack.c.l.b16 %v90
  %v454 = vunpack.c.h.b16 %v90
  %v455 = vunpack.c.l.b16 %v91
  %v456 = vunpack.c.h.b16 %v91
  %v457 = vunpack.c.l.b16 %v92
  %v458 = vunpack.c.h.b16 %v92
  %v459 = vunpack.c.l.b16 %v93
  %v460 = vunpack.c.h.b16 %v93
  %v461 = vunpack.c.l.b16 %v94
  %v462 = vunpack.c.h.b16 %v94
  %v463 = vunpack.c.l.b16 %v95
  %v464 = vunpack.c.h.b16 %v95
  %v465 = vunpack.c.l.b16 %v96
  %v466 = vunpack.c.h.b16 %v96
  %v467 = vunpack.c.l.b16 %v97
  %v468 = vunpack.c.h.b16 %v97
  %v469 = vunpack.c.l.b16 %v98
  %v470 = vunpack.c.h.b16 %v98
  %v471 = vunpack.c.l.b16 %v99
  %v472 = vunpack.c.h.b16 %v99
  %v473 = vunpack.c.l.b16 %v100
  %v474 = vunpack.c.h.b16 %v100
  %v475 = vunpack.c.l.b16 %v101
  %v476 = vunpack.c.h.b16 %v101
  %v477 = vunpack.c.l.b16 %v102
  %v478 = vunpack.c.h.b16 %v102
  %v479 = vunpack.c.l.b16 %v103
  %v480 = vunpack.c.h.b16 %v103
  %v481 = vunpack.c.l.b16 %v104
  %v482 = vunpack.c.h.b16 %v104
  %v483 = vunpack.c.l.b16 %v105
  %v484 = vunpack.c.h.b16 %v105
  %v485 = vunpack.c.l.b16 %v106
  %v486 = vunpack.c.h.b16 %v106
  %v487 = vunpack.c.l.b16 %v107
  %v488 = vunpack.c.h.b16 %v107
  %v489 = vunpack.c.l.b16 %v108
  %v490 = vunpack.c.h.b16 %v108
  %v491 = vunpack.c.l.b16 %v109
  %v492 = vunpack.c.h.b16 %v109
  %v493 = vunpack.c.l.b16 %v110
  %v494 = vunpack.c.h.b16 %v110
  %v495 = vunpack.c.l.b16 %v111
  %v496 = vunpack.c.h.b16 %v111
  %v497 = vunpack.c.l.b16 %v112
  %v498 = vunpack.c.h.b16 %v112
  %v499 = vunpack.c.l.b16 %v113
  %v500 = vunpack.c.h.b16 %v113
  %v501 = vunpack.c.l.b16 %v114
  %v502 = vunpack.c.h.b16 %v114
  %v503 = vunpack.c.l.b16 %v115
  %v504 = vunpack.c.h.b16 %v115
  %v505 = vunpack.c.l.b16 %v116
  %v506 = vunpack.c.h.b16 %v116
  %v507 = vunpack.c.l.b16 %v117
  %v508 = vunpack.c.h.b16 %v117
  %v509 = vunpack.c.l.b16 %v118
  %v510 = vunpack.c.h.b16 %v118
  %v511 = vunpack.c.l.b16 %v119
  %v512 = vunpack.c.h.b16 %v119
  %v513 = vunpack.c.l.b16 %v120
  %v514 = vunpack.c.h.b16 %v120
  %v515 = vunpack.c.l.b16 %v121
  %v516 = vunpack.c.h.b16 %v121
  %v517 = vunpack.c.l.b16 %v122
  %v518 = vunpack.c.h.b16 %v122
  %v519 = vunpack.c.l.b16 %v123
  %v520 = vunpack.c.h.b16 %v123
  %v521 = vunpack.c.l.b16 %v124
  %v522 = vunpack.c.h.b16 %v124
  %v523 = vunpack.c.l.b16 %v125
  %v524 = vunpack.c.h.b16 %v125
  %v525 = vunpack.c.l.b16 %v126
  %v526 = vunpack.c.h.b16 %v126
  %v527 = vunpack.c.l.b16 %v127
  %v528 = vunpack.c.h.b16 %v127
  %v529 = vunpack.c.l.b16 %v128
  %v530 = vunpack.c.h.b16 %v128
  %v531 = vunpack.c.l.b16 %v129
  %v532 = vunpack.c.h.b16 %v129
  %v533 = vunpack.c.l.b16 %v130
  %v534 = vunpack.c.h.b16 %v130
  %v535 = vunpack.c.l.b16 %v131
  %v536 = vunpack.c.h.b16 %v131
  %v537 = vunpack.c.l.b16 %v132
  %v538 = vunpack.c.h.b16 %v132
  %v539 = vunpack.c.l.b16 %v133
  %v540 = vunpack.c.h.b16 %v133
  %v541 = vunpack.c.l.b16 %v134
  %v542 = vunpack.c.h.b16 %v134
  %v543 = vunpack.c.l.b16 %v135
  %v544 = vunpack.c.h.b16 %v135
  %v545 = vunpack.c.l.b16 %v136
  %v546 = vunpack.c.h.b16 %v136
  %v547 = vunpack.c.l.b16 %v137
  %v548 = vunpack.c.h.b16 %v137
  %v549 = vunpack.c.l.b16 %v138
  %v550 = vunpack.c.h.b16 %v138
  %v551 = vunpack.c.l.b16 %v139
  %v552 = vunpack.c.h.b16 %v139
  %v553 = vunpack.c.l.b16 %v140
  %v554 = vunpack.c.h.b16 %v140
  %v555 = vunpack.c.l.b16 %v141
  %v556 = vunpack.c.h.b16 %v141
  %v557 = vunpack.c.l.b16 %v142
  %v558 = vunpack.c.h.b16 %v142
  %v559 = vunpack.c.l.b16 %v143
  %v560 = vunpack.c.h.b16 %v143
  %v561 = vunpack.c.l.b16 %v144
  %v562 = vunpack.c.h.b16 %v144
  %v563 = vunpack.c.l.b16 %v145
  %v564 = vunpack.c.h.b16 %v145
  %v565 = vunpack.c.l.b16 %v146
  %v566 = vunpack.c.h.b16 %v146
  %v567 = vunpack.c.l.b16 %v147
  %v568 = vunpack.c.h.b16 %v147
  %v569 = vunpack.c.l.b16 %v148
  %v570 = vunpack.c.h.b16 %v148
  %v571 = vunpack.c.l.b16 %v149
  %v572 = vunpack.c.h.b16 %v149
  %v573 = vunpack.c.l.b16 %v150
  %v574 = vunpack.c.h.b16 %v150
  %v575 = vunpack.c.l.b16 %v151
  %v576 = vunpack.c.h.b16 %v151
  %v577 = vunpack.c.l.b16 %v152
  %v578 = vunpack.c.h.b16 %v152
  %v579 = vunpack.c.l.b16 %v153
  %v580 = vunpack.c.h.b16 %v153
  %v581 = vunpack.c.l.b16 %v154
  %v582 = vunpack.c.h.b16 %v154
  %v583 = vunpack.c.l.b16 %v155
  %v584 = vunpack.c.h.b16 %v155
  %v585 = vunpack.c.l.b16 %v156
  %v586 = vunpack.c.h.b16 %v156
  %v587 = vunpack.c.l.b16 %v157
  %v588 = vunpack.c.h.b16 %v157
  %v589 = vunpack.c.l.b16 %v158
  %v590 = vunpack.c.h.b16 %v158
  %v591 = vunpack.c.l.b16 %v159
  %v592 = vunpack.c.h.b16 %v159
  %v593 = vunpack.c.l.b16 %v160
  %v594 = vunpack.c.h.b16 %v160
  %v595 = vunpack.c.l.b16 %v161
  %v596 = vunpack.c.h.b16 %v161
  %v597 = vunpack.c.l.b16 %v162
  %v598 = vunpack.c.h.b16 %v162
  %v599 = vunpack.c.l.b16 %v163
  %v600 = vunpack.c.h.b16 %v163
  %v601 = vunpack.c.l.b16 %v164
  %v602 = vunpack.c.h.b16 %v164
  %v603 = vunpack.c.l.b16 %v165
  %v604 = vunpack.c.h.b16 %v165
  %v605 = vunpack.c.l.b16 %v166
  %v606 = vunpack.c.h.b16 %v166
  %v607 = vunpack.c.l.b16 %v167
  %v608 = vunpack.c.h.b16 %v167
  %v609 = vunpack.c.l.b16 %v168
  %v610 = vunpack.c.h.b16 %v168
  %v611 = vunpack.c.l.b16 %v169
  %v612 = vunpack.c.h.b16 %v169
  %v613 = vunpack.c.l.b16 %v170
  %v614 = vunpack.c.h.b16 %v170
  %v615 = vunpack.c.l.b16 %v171
  %v616 = vunpack.c.h.b16 %v171
  %v617 = vunpack.c.l.b16 %v172
  %v618 = vunpack.c.h.b16 %v172
  %v619 = vunpack.c.l.b16 %v173
  %v620 = vunpack.c.h.b16 %v173
  %v621 = vunpack.c.l.b16 %v174
  %v622 = vunpack.c.h.b16 %v174
  %v623 = vunpack.c.l.b16 %v175
  %v624 = vunpack.c.h.b16 %v175
  %v625 = vunpack.c.l.b16 %v176
  %v626 = vunpack.c.h.b16 %v176
  %v627 = vunpack.c.l.b16 %v177
  %v628 = vunpack.c.h.b16 %v177
  %v629 = vunpack.c.l.b16 %v178
  %v630 = vunpack.c.h.b16 %v178
  %v631 = vunpack.c.l.b16 %v179
  %v632 = vunpack.c.h.b16 %v179
  %v633 = vunpack.c.l.b16 %v180
  %v634 = vunpack.c.h.b16 %v180
  %v635 = vunpack.c.l.b16 %v181
  %v636 = vunpack.c.h.b16 %v181
  %v637 = vunpack.c.l.b16 %v182
  %v638 = vunpack.c.h.b16 %v182
  %v639 = vunpack.c.l.b16 %v183
  %v640 = vunpack.c.h.b16 %v183
  %v641 = vunpack.c.l.b16 %v184
  %v642 = vunpack.c.h.b16 %v184
  %v643 = vunpack.c.l.b16 %v185
  %v644 = vunpack.c.h.b16 %v185
  %v645 = vunpack.c.l.b16 %v186
  %v646 = vunpack.c.h.b16 %v186
  %v647 = vunpack.c.l.b16 %v187
  %v648 = vunpack.c.h.b16 %v187
  %v649 = vunpack.c.l.b16 %v188
  %v650 = vunpack.c.h.b16 %v188
  %v651 = vunpack.c.l.b16 %v189
  %v652 = vunpack.c.h.b16 %v189
  %v653 = vunpack.c.l.b16 %v190
  %v654 = vunpack.c.h.b16 %v190
  %v655 = vunpack.c.l.b16 %v191
  %v656 = vunpack.c.h.b16 %v191
  %v657 = vunpack.c.l.b16 %v192
  %v658 = vunpack.c.h.b16 %v192
  %v659 = vpack.c.b16 %v411, %v403
  %v660 = vpack.c.b16 %v412, %v404
  %v661 = vpack.c.b16 %v413, %v405
  %v662 = vpack.c.b16 %v414, %v406
  %v663 = vpack.c.b16 %v415, %v407
  %v664 = vpack.c.b16 %v416, %v408
  %v665 = vpack.c.b16 %v417, %v409
  %v666 = vpack.c.b16 %v418, %v410
  %v667 = vpack.c.b16 %v427, %v419
  %v668 = vpack.c.b16 %v428, %v420
  %v669 = vpack.c.b16 %v429, %v421
  %v670 = vpack.c.b16 %v430, %v422
  %v671 = vpack.c.b16 %v431, %v423
  %v672 = vpack.c.b16 %v432, %v424
  %v673 = vpack.c.b16 %v433, %v425
  %v674 = vpack.c.b16 %v434, %v426
  %v675 = vpack.c.b16 %v443, %v435
  %v676 = vpack.c.b16 %v444, %v436
  %v677 = vpack.c.b16 %v445, %v437
  %v678 = vpack.c.b16 %v446, %v438
  %v679 = vpack.c.b16 %v447, %v439
  %v680 = vpack.c.b16 %v448, %v440
  %v681 = vpack.c.b16 %v449, %v441
  %v682 = vpack.c.b16 %v450, %v442
  %v683 = vpack.c.b16 %v459, %v451
  %v684 = vpack.c.b16 %v460, %v452
  %v685 = vpack.c.b16 %v461, %v453
  %v686 = vpack.c.b16 %v462, %v454
  %v687 = vpack.c.b16 %v463, %v455
  %v688 = vpack.c.b16 %v464, %v456
  %v689 = vpack.c.b16 %v465, %v457
  %v690 = vpack.c.b16 %v466, %v458
  %v691 = vpack.c.b16 %v475, %v467
  %v692 = vpack.c.b16 %v476, %v468
  %v693 = vpack.c.b16 %v477, %v469
  %v694 = vpack.c.b16 %v478, %v470
  %v695 = vpack.c.b16 %v479, %v471
  %v696 = vpack.c.b16 %v480, %v472
  %v697 = vpack.c.b16 %v481, %v473
  %v698 = vpack.c.b16 %v482, %v474
  %v699 = vpack.c.b16 %v491, %v483
  %v700 = vpack.c.b16 %v492, %v484
  %v701 = vpack.c.b16 %v493, %v485
  %v702 = vpack.c.b16 %v494, %v486
  %v703 = vpack.c.b16 %v495, %v487
  %v704 = vpack.c.b16 %v496, %v488
  %v705 = vpack.c.b16 %v497, %v489
  %v706 = vpack.c.b16 %v498, %v490
  %v707 = vpack.c.b16 %v507, %v499
  %v708 = vpack.c.b16 %v508, %v500
  %v709 = vpack.c.b16 %v509, %v501
  %v710 = vpack.c.b16 %v510, %v502
  %v711 = vpack.c.b16 %v511, %v503
  %v712 = vpack.c.b16 %v512, %v504
  %v713 = vpack.c.b16 %v513, %v505
  %v714 = vpack.c.b16 %v514, %v506
  %v715 = vpack.c.b16 %v523, %v515
  %v716 = vpack.c.b16 %v524, %v516
  %v717 = vpack.c.b16 %v525, %v517
  %v718 = vpack.c.b16 %v526, %v518
  %v719 = vpack.c.b16 %v527, %v519
  %v720 = vpack.c.b16 %v528, %v520
  %v721 = vpack.c.b16 %v529, %v521
  %v722 = vpack.c.b16 %v530, %v522
  %v723 = vpack.c.b16 %v539, %v531
  %v724 = vpack.c.b16 %v540, %v532
  %v725 = vpack.c.b16 %v541, %v533
  %v726 = vpack.c.b16 %v542, %v534
  %v727 = vpack.c.b16 %v543, %v535
  %v728 = vpack.c.b16 %v544, %v536
  %v729 = vpack.c.b16 %v545, %v537
  %v730 = vpack.c.b16 %v546, %v538
  %v731 = vpack.c.b16 %v555, %v547
  %v732 = vpack.c.b16 %v556, %v548
  %v733 = vpack.c.b16 %v557, %v549
  %v734 = vpack.c.b16 %v558, %v550
  %v735 = vpack.c.b16 %v559, %v551
  %v736 = vpack.c.b16 %v560, %v552
  %v737 = vpack.c.b16 %v561, %v553
  %v738 = vpack.c.b16 %v562, %v554
  %v739 = vpack.c.b16 %v571, %v563
  %v740 = vpack.c.b16 %v572, %v564
  %v741 = vpack.c.b16 %v573, %v565
  %v742 = vpack.c.b16 %v574, %v566
  %v743 = vpack.c.b16 %v575, %v567
  %v744 = vpack.c.b16 %v576, %v568
  %v745 = vpack.c.b16 %v577, %v569
  %v746 = vpack.c.b16 %v578, %v570
  %v747 = vpack.c.b16 %v587, %v579
  %v748 = vpack.c.b16 %v588, %v580
  %v749 = vpack.c.b16 %v589, %v581
  %v750 = vpack.c.b16 %v590, %v582
  %v751 = vpack.c.b16 %v591, %v583
  %v752 = vpack.c.b16 %v592, %v584
  %v753 = vpack.c.b16 %v593, %v585
  %v754 = vpack.c.b16 %v594, %v586
  %v755 = vpack.c.b16 %v603, %v595
  %v756 = vpack.c.b16 %v604, %v596
  %v757 = vpack.c.b16 %v605, %v597
  %v758 = vpack.c.b16 %v606, %v598
  %v759 = vpack.c.b16 %v607, %v599
  %v760 = vpack.c.b16 %v608, %v600
  %v761 = vpack.c.b16 %v609, %v601
  %v762 = vpack.c.b16 %v610, %v602
  %v763 = vpack.c.b16 %v619, %v611
  %v764 = vpack.c.b16 %v620, %v612
  %v765 = vpack.c.b16 %v621, %v613
  %v766 = vpack.c.b16 %v622, %v614
  %v767 = vpack.c.b16 %v623, %v615
  %v768 = vpack.c.b16 %v624, %v616
  %v769 = vpack.c.b16 %v625, %v617
  %v770 = vpack.c.b16 %v626, %v618
  %v771 = vpack.c.b16 %v635, %v627
  %v772 = vpack.c.b16 %v636, %v628
  %v773 = vpack.c.b16 %v637, %v629
  %v774 = vpack.c.b16 %v638, %v630
  %v775 = vpack.c.b16 %v639, %v631
  %v776 = vpack.c.b16 %v640, %v632
  %v777 = vpack.c.b16 %v641, %v633
  %v778 = vpack.c.b16 %v642, %v634
  %v779 = vpack.c.b16 %v651, %v643
  %v780 = vpack.c.b16 %v652, %v644
  %v781 = vpack.c.b16 %v653, %v645
  %v782 = vpack.c.b16 %v654, %v646
  %v783 = vpack.c.b16 %v655, %v647
  %v784 = vpack.c.b16 %v656, %v648
  %v785 = vpack.c.b16 %v657, %v649
  %v786 = vpack.c.b16 %v658, %v650
  %915 = vmatprep.subr.bf16.mxu0 %v660
  %916 = vmatpush1.bf16.msra.mxu0 %v659
  %917 = vmatprep.subr.bf16.mxu0 %v668
  %918 = vmatpush1.bf16.msra.mxu0 %v667
  %919 = vmatprep.subr.bf16.mxu0 %v676
  %920 = vmatpush1.bf16.msra.mxu0 %v675
  %921 = vmatprep.subr.bf16.mxu0 %v684
  %922 = vmatpush1.bf16.msra.mxu0 %v683
  %923 = vmatprep.subr.bf16.mxu0 %v692
  %924 = vmatpush1.bf16.msra.mxu0 %v691
  %925 = vmatprep.subr.bf16.mxu0 %v700
  %926 = vmatpush1.bf16.msra.mxu0 %v699
  %927 = vmatprep.subr.bf16.mxu0 %v708
  %928 = vmatpush1.bf16.msra.mxu0 %v707
  %929 = vmatprep.subr.bf16.mxu0 %v716
  %930 = vmatpush1.bf16.msra.mxu0 %v715
  %931 = vmatprep.subr.bf16.mxu0 %v724
  %932 = vmatpush1.bf16.msra.mxu0 %v723
  %933 = vmatprep.subr.bf16.mxu0 %v732
  %934 = vmatpush1.bf16.msra.mxu0 %v731
  %935 = vmatprep.subr.bf16.mxu0 %v740
  %936 = vmatpush1.bf16.msra.mxu0 %v739
  %937 = vmatprep.subr.bf16.mxu0 %v748
  %938 = vmatpush1.bf16.msra.mxu0 %v747
  %939 = vmatprep.subr.bf16.mxu0 %v756
  %940 = vmatpush1.bf16.msra.mxu0 %v755
  %941 = vmatprep.subr.bf16.mxu0 %v764
  %942 = vmatpush1.bf16.msra.mxu0 %v763
  %943 = vmatprep.subr.bf16.mxu0 %v772
  %944 = vmatpush1.bf16.msra.mxu0 %v771
  %945 = vmatprep.subr.bf16.mxu0 %v780
  %946 = vmatpush1.bf16.msra.mxu0 %v779
  %947 = vmatprep.mubr.bf16.mxu0 %v260
  %948 = vmatmul.mubr.bf16.gmra.mrb[0].mxu0 %v259
  %v949 = vpop.f32.mrb[0].mxu0
  %v950 = vadd.f32 %v198, %v949
  %v951 = vpop.f32.mrb[0].mxu0
  %v952 = vadd.f32 %v202, %v951
  %v953 = vpop.f32.mrb[0].mxu0
  %v954 = vadd.f32 %v198, %v953
  %v955 = vpop.f32.mrb[0].mxu0
  %v956 = vadd.f32 %v202, %v955
  %957 = vmatprep.mubr.bf16.mxu0 %v262
  %958 = vmatmul.mubr.bf16.gmra.mrb[0].mxu0 %v261
  %v959 = vpop.f32.mrb[0].mxu0
  %v960 = vadd.f32 %v198, %v959
  %v961 = vpop.f32.mrb[0].mxu0
  %v962 = vadd.f32 %v202, %v961
  %v963 = vpop.f32.mrb[0].mxu0
  %v964 = vadd.f32 %v198, %v963
  %v965 = vpop.f32.mrb[0].mxu0
  %v966 = vadd.f32 %v202, %v965
  %967 = vmatprep.mubr.bf16.mxu0 %v264
  %968 = vmatmul.mubr.bf16.gmra.mrb[0].mxu0 %v263
  %v969 = vpop.f32.mrb[0].mxu0
  %v970 = vadd.f32 %v198, %v969
  %v971 = vpop.f32.mrb[0].mxu0
  %v972 = vadd.f32 %v202, %v971
  %v973 = vpop.f32.mrb[0].mxu0
  %v974 = vadd.f32 %v198, %v973
  %v975 = vpop.f32.mrb[0].mxu0
  %v976 = vadd.f32 %v202, %v975
  %977 = vmatprep.mubr.bf16.mxu0 %v266
  %978 = vmatmul.mubr.bf16.gmra.mrb[0].mxu0 %v265
  %v979 = vpop.f32.mrb[0].mxu0
  %v980 = vadd.f32 %v198, %v979
  %v981 = vpop.f32.mrb[0].mxu0
  %v982 = vadd.f32 %v202, %v981
  %v983 = vpop.f32.mrb[0].mxu0
  %v984 = vadd.f32 %v198, %v983
  %v985 = vpop.f32.mrb[0].mxu0
  %v986 = vadd.f32 %v202, %v985
  %987 = vdwg.mxu0
  %988 = vmatprep.subr.bf16.mxu0 %v662
  %989 = vmatpush1.bf16.msra.mxu0 %v661
  %990 = vmatprep.subr.bf16.mxu0 %v670
  %991 = vmatpush1.bf16.msra.mxu0 %v669
  %992 = vmatprep.subr.bf16.mxu0 %v678
  %993 = vmatpush1.bf16.msra.mxu0 %v677
  %994 = vmatprep.subr.bf16.mxu0 %v686
  %995 = vmatpush1.bf16.msra.mxu0 %v685
  %996 = vmatprep.subr.bf16.mxu0 %v694
  %997 = vmatpush1.bf16.msra.mxu0 %v693
  %998 = vmatprep.subr.bf16.mxu0 %v702
  %999 = vmatpush1.bf16.msra.mxu0 %v701
  %1000 = vmatprep.subr.bf16.mxu0 %v710
  %1001 = vmatpush1.bf16.msra.mxu0 %v709
  %1002 = vmatprep.subr.bf16.mxu0 %v718
  %1003 = vmatpush1.bf16.msra.mxu0 %v717
  %1004 = vmatprep.subr.bf16.mxu0 %v726
  %1005 = vmatpush1.bf16.msra.mxu0 %v725
  %1006 = vmatprep.subr.bf16.mxu0 %v734
  %1007 = vmatpush1.bf16.msra.mxu0 %v733
  %1008 = vmatprep.subr.bf16.mxu0 %v742
  %1009 = vmatpush1.bf16.msra.mxu0 %v741
  %1010 = vmatprep.subr.bf16.mxu0 %v750
  %1011 = vmatpush1.bf16.msra.mxu0 %v749
  %1012 = vmatprep.subr.bf16.mxu0 %v758
  %1013 = vmatpush1.bf16.msra.mxu0 %v757
  %1014 = vmatprep.subr.bf16.mxu0 %v766
  %1015 = vmatpush1.bf16.msra.mxu0 %v765
  %1016 = vmatprep.subr.bf16.mxu0 %v774
  %1017 = vmatpush1.bf16.msra.mxu0 %v773
  %1018 = vmatprep.subr.bf16.mxu0 %v782
  %1019 = vmatpush1.bf16.msra.mxu0 %v781
  %1020 = vmatprep.mubr.bf16.mxu0 %v260
  %1021 = vmatmul.mubr.bf16.gmra.mrb[0].mxu0 %v259
  %v1022 = vpop.f32.mrb[0].mxu0
  %v1023 = vadd.f32 %v206, %v1022
  %v1024 = vpop.f32.mrb[0].mxu0
  %v1025 = vadd.f32 %v210, %v1024
  %v1026 = vpop.f32.mrb[0].mxu0
  %v1027 = vadd.f32 %v206, %v1026
  %v1028 = vpop.f32.mrb[0].mxu0
  %v1029 = vadd.f32 %v210, %v1028
  %1030 = vmatprep.mubr.bf16.mxu0 %v262
  %1031 = vmatmul.mubr.bf16.gmra.mrb[0].mxu0 %v261
  %v1032 = vpop.f32.mrb[0].mxu0
  %v1033 = vadd.f32 %v206, %v1032
  %v1034 = vpop.f32.mrb[0].mxu0
  %v1035 = vadd.f32 %v210, %v1034
  %v1036 = vpop.f32.mrb[0].mxu0
  %v1037 = vadd.f32 %v206, %v1036
  %v1038 = vpop.f32.mrb[0].mxu0
  %v1039 = vadd.f32 %v210, %v1038
  %1040 = vmatprep.mubr.bf16.mxu0 %v264
  %1041 = vmatmul.mubr.bf16.gmra.mrb[0].mxu0 %v263
  %v1042 = vpop.f32.mrb[0].mxu0
  %v1043 = vadd.f32 %v206, %v1042
  %v1044 = vpop.f32.mrb[0].mxu0
  %v1045 = vadd.f32 %v210, %v1044
  %v1046 = vpop.f32.mrb[0].mxu0
  %v1047 = vadd.f32 %v206, %v1046
  %v1048 = vpop.f32.mrb[0].mxu0
  %v1049 = vadd.f32 %v210, %v1048
  %1050 = vmatprep.mubr.bf16.mxu0 %v266
  %1051 = vmatmul.mubr.bf16.gmra.mrb[0].mxu0 %v265
  %v1052 = vpop.f32.mrb[0].mxu0
  %v1053 = vadd.f32 %v206, %v1052
  %v1054 = vpop.f32.mrb[0].mxu0
  %v1055 = vadd.f32 %v210, %v1054
  %v1056 = vpop.f32.mrb[0].mxu0
  %v1057 = vadd.f32 %v206, %v1056
  %v1058 = vpop.f32.mrb[0].mxu0
  %v1059 = vadd.f32 %v210, %v1058
  %1060 = vdwg.mxu0
  %1061 = vmatprep.subr.bf16.mxu0 %v664
  %1062 = vmatpush1.bf16.msra.mxu0 %v663
  %1063 = vmatprep.subr.bf16.mxu0 %v672
  %1064 = vmatpush1.bf16.msra.mxu0 %v671
  %1065 = vmatprep.subr.bf16.mxu0 %v680
  %1066 = vmatpush1.bf16.msra.mxu0 %v679
  %1067 = vmatprep.subr.bf16.mxu0 %v688
  %1068 = vmatpush1.bf16.msra.mxu0 %v687
  %1069 = vmatprep.subr.bf16.mxu0 %v696
  %1070 = vmatpush1.bf16.msra.mxu0 %v695
  %1071 = vmatprep.subr.bf16.mxu0 %v704
  %1072 = vmatpush1.bf16.msra.mxu0 %v703
  %1073 = vmatprep.subr.bf16.mxu0 %v712
  %1074 = vmatpush1.bf16.msra.mxu0 %v711
  %1075 = vmatprep.subr.bf16.mxu0 %v720
  %1076 = vmatpush1.bf16.msra.mxu0 %v719
  %1077 = vmatprep.subr.bf16.mxu0 %v728
  %1078 = vmatpush1.bf16.msra.mxu0 %v727
  %1079 = vmatprep.subr.bf16.mxu0 %v736
  %1080 = vmatpush1.bf16.msra.mxu0 %v735
  %1081 = vmatprep.subr.bf16.mxu0 %v744
  %1082 = vmatpush1.bf16.msra.mxu0 %v743
  %1083 = vmatprep.subr.bf16.mxu0 %v752
  %1084 = vmatpush1.bf16.msra.mxu0 %v751
  %1085 = vmatprep.subr.bf16.mxu0 %v760
  %1086 = vmatpush1.bf16.msra.mxu0 %v759
  %1087 = vmatprep.subr.bf16.mxu0 %v768
  %1088 = vmatpush1.bf16.msra.mxu0 %v767
  %1089 = vmatprep.subr.bf16.mxu0 %v776
  %1090 = vmatpush1.bf16.msra.mxu0 %v775
  %1091 = vmatprep.subr.bf16.mxu0 %v784
  %1092 = vmatpush1.bf16.msra.mxu0 %v783
  %1093 = vmatprep.mubr.bf16.mxu0 %v260
  %1094 = vmatmul.mubr.bf16.gmra.mrb[0].mxu0 %v259
  %v1095 = vpop.f32.mrb[0].mxu0
  %v1096 = vadd.f32 %v214, %v1095
  %v1097 = vpop.f32.mrb[0].mxu0
  %v1098 = vadd.f32 %v218, %v1097
  %v1099 = vpop.f32.mrb[0].mxu0
  %v1100 = vadd.f32 %v214, %v1099
  %v1101 = vpop.f32.mrb[0].mxu0
  %v1102 = vadd.f32 %v218, %v1101
  %1103 = vmatprep.mubr.bf16.mxu0 %v262
  %1104 = vmatmul.mubr.bf16.gmra.mrb[0].mxu0 %v261
  %v1105 = vpop.f32.mrb[0].mxu0
  %v1106 = vadd.f32 %v214, %v1105
  %v1107 = vpop.f32.mrb[0].mxu0
  %v1108 = vadd.f32 %v218, %v1107
  %v1109 = vpop.f32.mrb[0].mxu0
  %v1110 = vadd.f32 %v214, %v1109
  %v1111 = vpop.f32.mrb[0].mxu0
  %v1112 = vadd.f32 %v218, %v1111
  %1113 = vmatprep.mubr.bf16.mxu0 %v264
  %1114 = vmatmul.mubr.bf16.gmra.mrb[0].mxu0 %v263
  %v1115 = vpop.f32.mrb[0].mxu0
  %v1116 = vadd.f32 %v214, %v1115
  %v1117 = vpop.f32.mrb[0].mxu0
  %v1118 = vadd.f32 %v218, %v1117
  %v1119 = vpop.f32.mrb[0].mxu0
  %v1120 = vadd.f32 %v214, %v1119
  %v1121 = vpop.f32.mrb[0].mxu0
  %v1122 = vadd.f32 %v218, %v1121
  %1123 = vmatprep.mubr.bf16.mxu0 %v266
  %1124 = vmatmul.mubr.bf16.gmra.mrb[0].mxu0 %v265
  %v1125 = vpop.f32.mrb[0].mxu0
  %v1126 = vadd.f32 %v214, %v1125
  %v1127 = vpop.f32.mrb[0].mxu0
  %v1128 = vadd.f32 %v218, %v1127
  %v1129 = vpop.f32.mrb[0].mxu0
  %v1130 = vadd.f32 %v214, %v1129
  %v1131 = vpop.f32.mrb[0].mxu0
  %v1132 = vadd.f32 %v218, %v1131
  %1133 = vdwg.mxu0
  %1134 = vmatprep.subr.bf16.mxu0 %v666
  %1135 = vmatpush1.bf16.msra.mxu0 %v665
  %1136 = vmatprep.subr.bf16.mxu0 %v674
  %1137 = vmatpush1.bf16.msra.mxu0 %v673
  %1138 = vmatprep.subr.bf16.mxu0 %v682
  %1139 = vmatpush1.bf16.msra.mxu0 %v681
  %1140 = vmatprep.subr.bf16.mxu0 %v690
  %1141 = vmatpush1.bf16.msra.mxu0 %v689
  %1142 = vmatprep.subr.bf16.mxu0 %v698
  %1143 = vmatpush1.bf16.msra.mxu0 %v697
  %1144 = vmatprep.subr.bf16.mxu0 %v706
  %1145 = vmatpush1.bf16.msra.mxu0 %v705
  %1146 = vmatprep.subr.bf16.mxu0 %v714
  %1147 = vmatpush1.bf16.msra.mxu0 %v713
  %1148 = vmatprep.subr.bf16.mxu0 %v722
  %1149 = vmatpush1.bf16.msra.mxu0 %v721
  %1150 = vmatprep.subr.bf16.mxu0 %v730
  %1151 = vmatpush1.bf16.msra.mxu0 %v729
  %1152 = vmatprep.subr.bf16.mxu0 %v738
  %1153 = vmatpush1.bf16.msra.mxu0 %v737
  %1154 = vmatprep.subr.bf16.mxu0 %v746
  %1155 = vmatpush1.bf16.msra.mxu0 %v745
  %1156 = vmatprep.subr.bf16.mxu0 %v754
  %1157 = vmatpush1.bf16.msra.mxu0 %v753
  %1158 = vmatprep.subr.bf16.mxu0 %v762
  %1159 = vmatpush1.bf16.msra.mxu0 %v761
  %1160 = vmatprep.subr.bf16.mxu0 %v770
  %1161 = vmatpush1.bf16.msra.mxu0 %v769
  %1162 = vmatprep.subr.bf16.mxu0 %v778
  %1163 = vmatpush1.bf16.msra.mxu0 %v777
  %1164 = vmatprep.subr.bf16.mxu0 %v786
  %1165 = vmatpush1.bf16.msra.mxu0 %v785
  %1166 = vmatprep.mubr.bf16.mxu0 %v260
  %1167 = vmatmul.mubr.bf16.gmra.mrb[0].mxu0 %v259
  %v1168 = vpop.f32.mrb[0].mxu0
  %v1169 = vadd.f32 %v222, %v1168
  %v1170 = vpop.f32.mrb[0].mxu0
  %v1171 = vadd.f32 %v226, %v1170
  %v1172 = vpop.f32.mrb[0].mxu0
  %v1173 = vadd.f32 %v222, %v1172
  %v1174 = vpop.f32.mrb[0].mxu0
  %v1175 = vadd.f32 %v226, %v1174
  %1176 = vmatprep.mubr.bf16.mxu0 %v262
  %1177 = vmatmul.mubr.bf16.gmra.mrb[0].mxu0 %v261
  %v1178 = vpop.f32.mrb[0].mxu0
  %v1179 = vadd.f32 %v222, %v1178
  %v1180 = vpop.f32.mrb[0].mxu0
  %v1181 = vadd.f32 %v226, %v1180
  %v1182 = vpop.f32.mrb[0].mxu0
  %v1183 = vadd.f32 %v222, %v1182
  %v1184 = vpop.f32.mrb[0].mxu0
  %v1185 = vadd.f32 %v226, %v1184
  %1186 = vmatprep.mubr.bf16.mxu0 %v264
  %1187 = vmatmul.mubr.bf16.gmra.mrb[0].mxu0 %v263
  %v1188 = vpop.f32.mrb[0].mxu0
  %v1189 = vadd.f32 %v222, %v1188
  %v1190 = vpop.f32.mrb[0].mxu0
  %v1191 = vadd.f32 %v226, %v1190
  %v1192 = vpop.f32.mrb[0].mxu0
  %v1193 = vadd.f32 %v222, %v1192
  %v1194 = vpop.f32.mrb[0].mxu0
  %v1195 = vadd.f32 %v226, %v1194
  %1196 = vmatprep.mubr.bf16.mxu0 %v266
  %1197 = vmatmul.mubr.bf16.gmra.mrb[0].mxu0 %v265
  %v1198 = vpop.f32.mrb[0].mxu0
  %v1199 = vadd.f32 %v222, %v1198
  %v1200 = vpop.f32.mrb[0].mxu0
  %v1201 = vadd.f32 %v226, %v1200
  %v1202 = vpop.f32.mrb[0].mxu0
  %v1203 = vadd.f32 %v222, %v1202
  %v1204 = vpop.f32.mrb[0].mxu0
  %v1205 = vadd.f32 %v226, %v1204
  %1206 = vdwg.mxu0
  %1207 = vst [vmem:[#allocation2] sm:$0xff] %v950
  %1208 = vst [vmem:[#allocation2 + $0x8] sm:$0xff] %v952
  %1209 = vst [vmem:[#allocation2 + $0x10] sm:$0xff] %v1023
  %1210 = vst [vmem:[#allocation2 + $0x18] sm:$0xff] %v1025
  %1211 = vst [vmem:[#allocation2 + $0x20] sm:$0xff] %v954
  %1212 = vst [vmem:[#allocation2 + $0x28] sm:$0xff] %v956
  %1213 = vst [vmem:[#allocation2 + $0x30] sm:$0xff] %v1027
  %1214 = vst [vmem:[#allocation2 + $0x38] sm:$0xff] %v1029
  %1215 = vst [vmem:[#allocation2 + $0x40] sm:$0xff] %v960
  %1216 = vst [vmem:[#allocation2 + $0x48] sm:$0xff] %v962
  %1217 = vst [vmem:[#allocation2 + $0x50] sm:$0xff] %v1033
  %1218 = vst [vmem:[#allocation2 + $0x58] sm:$0xff] %v1035
  %1219 = vst [vmem:[#allocation2 + $0x60] sm:$0xff] %v964
  %1220 = vst [vmem:[#allocation2 + $0x68] sm:$0xff] %v966
  %1221 = vst [vmem:[#allocation2 + $0x70] sm:$0xff] %v1037
  %1222 = vst [vmem:[#allocation2 + $0x78] sm:$0xff] %v1039
  %1223 = vst [vmem:[#allocation2 + $0x80] sm:$0xff] %v970
  %1224 = vst [vmem:[#allocation2 + $0x88] sm:$0xff] %v972
  %1225 = vst [vmem:[#allocation2 + $0x90] sm:$0xff] %v1043
  %1226 = vst [vmem:[#allocation2 + $0x98] sm:$0xff] %v1045
  %1227 = vst [vmem:[#allocation2 + $0xa0] sm:$0xff] %v974
  %1228 = vst [vmem:[#allocation2 + $0xa8] sm:$0xff] %v976
  %1229 = vst [vmem:[#allocation2 + $0xb0] sm:$0xff] %v1047
  %1230 = vst [vmem:[#allocation2 + $0xb8] sm:$0xff] %v1049
  %1231 = vst [vmem:[#allocation2 + $0xc0] sm:$0xff] %v980
  %1232 = vst [vmem:[#allocation2 + $0xc8] sm:$0xff] %v982
  %1233 = vst [vmem:[#allocation2 + $0xd0] sm:$0xff] %v1053
  %1234 = vst [vmem:[#allocation2 + $0xd8] sm:$0xff] %v1055
  %1235 = vst [vmem:[#allocation2 + $0xe0] sm:$0xff] %v984
  %1236 = vst [vmem:[#allocation2 + $0xe8] sm:$0xff] %v986
  %1237 = vst [vmem:[#allocation2 + $0xf0] sm:$0xff] %v1057
  %1238 = vst [vmem:[#allocation2 + $0xf8] sm:$0xff] %v1059
  %1239 = vst [vmem:[#allocation3] sm:$0xff] %v1096
  %1240 = vst [vmem:[#allocation3 + $0x8] sm:$0xff] %v1098
  %1241 = vst [vmem:[#allocation3 + $0x10] sm:$0xff] %v1169
  %1242 = vst [vmem:[#allocation3 + $0x18] sm:$0xff] %v1171
  %1243 = vst [vmem:[#allocation3 + $0x20] sm:$0xff] %v1100
  %1244 = vst [vmem:[#allocation3 + $0x28] sm:$0xff] %v1102
  %1245 = vst [vmem:[#allocation3 + $0x30] sm:$0xff] %v1173
  %1246 = vst [vmem:[#allocation3 + $0x38] sm:$0xff] %v1175
  %1247 = vst [vmem:[#allocation3 + $0x40] sm:$0xff] %v1106
  %1248 = vst [vmem:[#allocation3 + $0x48] sm:$0xff] %v1108
  %1249 = vst [vmem:[#allocation3 + $0x50] sm:$0xff] %v1179
  %1250 = vst [vmem:[#allocation3 + $0x58] sm:$0xff] %v1181
  %1251 = vst [vmem:[#allocation3 + $0x60] sm:$0xff] %v1110
  %1252 = vst [vmem:[#allocation3 + $0x68] sm:$0xff] %v1112
  %1253 = vst [vmem:[#allocation3 + $0x70] sm:$0xff] %v1183
  %1254 = vst [vmem:[#allocation3 + $0x78] sm:$0xff] %v1185
  %1255 = vst [vmem:[#allocation3 + $0x80] sm:$0xff] %v1116
  %1256 = vst [vmem:[#allocation3 + $0x88] sm:$0xff] %v1118
  %1257 = vst [vmem:[#allocation3 + $0x90] sm:$0xff] %v1189
  %1258 = vst [vmem:[#allocation3 + $0x98] sm:$0xff] %v1191
  %1259 = vst [vmem:[#allocation3 + $0xa0] sm:$0xff] %v1120
  %1260 = vst [vmem:[#allocation3 + $0xa8] sm:$0xff] %v1122
  %1261 = vst [vmem:[#allocation3 + $0xb0] sm:$0xff] %v1193
  %1262 = vst [vmem:[#allocation3 + $0xb8] sm:$0xff] %v1195
  %1263 = vst [vmem:[#allocation3 + $0xc0] sm:$0xff] %v1126
  %1264 = vst [vmem:[#allocation3 + $0xc8] sm:$0xff] %v1128
  %1265 = vst [vmem:[#allocation3 + $0xd0] sm:$0xff] %v1199
  %1266 = vst [vmem:[#allocation3 + $0xd8] sm:$0xff] %v1201
  %1267 = vst [vmem:[#allocation3 + $0xe0] sm:$0xff] %v1130
  %1268 = vst [vmem:[#allocation3 + $0xe8] sm:$0xff] %v1132
  %1269 = vst [vmem:[#allocation3 + $0xf0] sm:$0xff] %v1203
  %1270 = vst [vmem:[#allocation3 + $0xf8] sm:$0xff] %v1205
  %v1271 = vld [vmem:[%s5] sm:$0xff]
  %v1272 = vld [vmem:[%s5 + $0x8] sm:$0xff]
  %v1273 = vld [vmem:[%s5 + $0x10] sm:$0xff]
  %v1274 = vld [vmem:[%s5 + $0x18] sm:$0xff]
  %v1275 = vld [vmem:[%s5 + $0x20] sm:$0xff]
  %v1276 = vld [vmem:[%s5 + $0x28] sm:$0xff]
  %v1277 = vld [vmem:[%s5 + $0x30] sm:$0xff]
  %v1278 = vld [vmem:[%s5 + $0x38] sm:$0xff]
  %v1279 = vld [vmem:[%s5 + $0x40] sm:$0xff]
  %v1280 = vld [vmem:[%s5 + $0x48] sm:$0xff]
  %v1281 = vld [vmem:[%s5 + $0x50] sm:$0xff]
  %v1282 = vld [vmem:[%s5 + $0x58] sm:$0xff]
  %v1283 = vld [vmem:[%s5 + $0x60] sm:$0xff]
  %v1284 = vld [vmem:[%s5 + $0x68] sm:$0xff]
  %v1285 = vld [vmem:[%s5 + $0x70] sm:$0xff]
  %v1286 = vld [vmem:[%s5 + $0x78] sm:$0xff]
  %v1287 = vld [vmem:[%s5 + $0x80] sm:$0xff]
  %v1288 = vld [vmem:[%s5 + $0x88] sm:$0xff]
  %v1289 = vld [vmem:[%s5 + $0x90] sm:$0xff]
  %v1290 = vld [vmem:[%s5 + $0x98] sm:$0xff]
  %v1291 = vld [vmem:[%s5 + $0xa0] sm:$0xff]
  %v1292 = vld [vmem:[%s5 + $0xa8] sm:$0xff]
  %v1293 = vld [vmem:[%s5 + $0xb0] sm:$0xff]
  %v1294 = vld [vmem:[%s5 + $0xb8] sm:$0xff]
  %v1295 = vld [vmem:[%s5 + $0xc0] sm:$0xff]
  %v1296 = vld [vmem:[%s5 + $0xc8] sm:$0xff]
  %v1297 = vld [vmem:[%s5 + $0xd0] sm:$0xff]
  %v1298 = vld [vmem:[%s5 + $0xd8] sm:$0xff]
  %v1299 = vld [vmem:[%s5 + $0xe0] sm:$0xff]
  %v1300 = vld [vmem:[%s5 + $0xe8] sm:$0xff]
  %v1301 = vld [vmem:[%s5 + $0xf0] sm:$0xff]
  %v1302 = vld [vmem:[%s5 + $0xf8] sm:$0xff]
  %v1303 = vld [vmem:[%s6] sm:$0xff]
  %v1304 = vld [vmem:[%s6 + $0x8] sm:$0xff]
  %v1305 = vld [vmem:[%s6 + $0x10] sm:$0xff]
  %v1306 = vld [vmem:[%s6 + $0x18] sm:$0xff]
  %v1307 = vld [vmem:[%s6 + $0x20] sm:$0xff]
  %v1308 = vld [vmem:[%s6 + $0x28] sm:$0xff]
  %v1309 = vld [vmem:[%s6 + $0x30] sm:$0xff]
  %v1310 = vld [vmem:[%s6 + $0x38] sm:$0xff]
  %v1311 = vld [vmem:[%s6 + $0x40] sm:$0xff]
  %v1312 = vld [vmem:[%s6 + $0x48] sm:$0xff]
  %v1313 = vld [vmem:[%s6 + $0x50] sm:$0xff]
  %v1314 = vld [vmem:[%s6 + $0x58] sm:$0xff]
  %v1315 = vld [vmem:[%s6 + $0x60] sm:$0xff]
  %v1316 = vld [vmem:[%s6 + $0x68] sm:$0xff]
  %v1317 = vld [vmem:[%s6 + $0x70] sm:$0xff]
  %v1318 = vld [vmem:[%s6 + $0x78] sm:$0xff]
  %v1319 = vld [vmem:[%s6 + $0x80] sm:$0xff]
  %v1320 = vld [vmem:[%s6 + $0x88] sm:$0xff]
  %v1321 = vld [vmem:[%s6 + $0x90] sm:$0xff]
  %v1322 = vld [vmem:[%s6 + $0x98] sm:$0xff]
  %v1323 = vld [vmem:[%s6 + $0xa0] sm:$0xff]
  %v1324 = vld [vmem:[%s6 + $0xa8] sm:$0xff]
  %v1325 = vld [vmem:[%s6 + $0xb0] sm:$0xff]
  %v1326 = vld [vmem:[%s6 + $0xb8] sm:$0xff]
  %v1327 = vld [vmem:[%s6 + $0xc0] sm:$0xff]
  %v1328 = vld [vmem:[%s6 + $0xc8] sm:$0xff]
  %v1329 = vld [vmem:[%s6 + $0xd0] sm:$0xff]
  %v1330 = vld [vmem:[%s6 + $0xd8] sm:$0xff]
  %v1331 = vld [vmem:[%s6 + $0xe0] sm:$0xff]
  %v1332 = vld [vmem:[%s6 + $0xe8] sm:$0xff]
  %v1333 = vld [vmem:[%s6 + $0xf0] sm:$0xff]
  %v1334 = vld [vmem:[%s6 + $0xf8] sm:$0xff]
  %v1335 = vld [vmem:[#allocation2] sm:$0xff]
  %v1336 = vld [vmem:[#allocation2 + $0x8] sm:$0xff]
  %v1337 = vld [vmem:[#allocation2 + $0x10] sm:$0xff]
  %v1338 = vld [vmem:[#allocation2 + $0x18] sm:$0xff]
  %v1371 = vunpack.c.l.b16 %v1271
  %v1372 = vunpack.c.h.b16 %v1271
  %v1373 = vunpack.c.l.b16 %v1272
  %v1374 = vunpack.c.h.b16 %v1272
  %v1375 = vunpack.c.l.b16 %v1273
  %v1376 = vunpack.c.h.b16 %v1273
  %v1377 = vunpack.c.l.b16 %v1274
  %v1378 = vunpack.c.h.b16 %v1274
  %v1379 = vunpack.c.l.b16 %v1275
  %v1380 = vunpack.c.h.b16 %v1275
  %v1381 = vunpack.c.l.b16 %v1276
  %v1382 = vunpack.c.h.b16 %v1276
  %v1383 = vunpack.c.l.b16 %v1277
  %v1384 = vunpack.c.h.b16 %v1277
  %v1385 = vunpack.c.l.b16 %v1278
  %v1386 = vunpack.c.h.b16 %v1278
  %v1387 = vunpack.c.l.b16 %v1279
  %v1388 = vunpack.c.h.b16 %v1279
  %v1389 = vunpack.c.l.b16 %v1280
  %v1390 = vunpack.c.h.b16 %v1280
  %v1391 = vunpack.c.l.b16 %v1281
  %v1392 = vunpack.c.h.b16 %v1281
  %v1393 = vunpack.c.l.b16 %v1282
  %v1394 = vunpack.c.h.b16 %v1282
  %v1395 = vunpack.c.l.b16 %v1283
  %v1396 = vunpack.c.h.b16 %v1283
  %v1397 = vunpack.c.l.b16 %v1284
  %v1398 = vunpack.c.h.b16 %v1284
  %v1399 = vunpack.c.l.b16 %v1285
  %v1400 = vunpack.c.h.b16 %v1285
  %v1401 = vunpack.c.l.b16 %v1286
  %v1402 = vunpack.c.h.b16 %v1286
  %v1403 = vunpack.c.l.b16 %v1287
  %v1404 = vunpack.c.h.b16 %v1287
  %v1405 = vunpack.c.l.b16 %v1288
  %v1406 = vunpack.c.h.b16 %v1288
  %v1407 = vunpack.c.l.b16 %v1289
  %v1408 = vunpack.c.h.b16 %v1289
  %v1409 = vunpack.c.l.b16 %v1290
  %v1410 = vunpack.c.h.b16 %v1290
  %v1411 = vunpack.c.l.b16 %v1291
  %v1412 = vunpack.c.h.b16 %v1291
  %v1413 = vunpack.c.l.b16 %v1292
  %v1414 = vunpack.c.h.b16 %v1292
  %v1415 = vunpack.c.l.b16 %v1293
  %v1416 = vunpack.c.h.b16 %v1293
  %v1417 = vunpack.c.l.b16 %v1294
  %v1418 = vunpack.c.h.b16 %v1294
  %v1419 = vunpack.c.l.b16 %v1295
  %v1420 = vunpack.c.h.b16 %v1295
  %v1421 = vunpack.c.l.b16 %v1296
  %v1422 = vunpack.c.h.b16 %v1296
  %v1423 = vunpack.c.l.b16 %v1297
  %v1424 = vunpack.c.h.b16 %v1297
  %v1425 = vunpack.c.l.b16 %v1298
  %v1426 = vunpack.c.h.b16 %v1298
  %v1427 = vunpack.c.l.b16 %v1299
  %v1428 = vunpack.c.h.b16 %v1299
  %v1429 = vunpack.c.l.b16 %v1300
  %v1430 = vunpack.c.h.b16 %v1300
  %v1431 = vunpack.c.l.b16 %v1301
  %v1432 = vunpack.c.h.b16 %v1301
  %v1433 = vunpack.c.l.b16 %v1302
  %v1434 = vunpack.c.h.b16 %v1302
  %v1435 = vpack.c.b16 %v1375, %v1371
  %v1436 = vpack.c.b16 %v1376, %v1372
  %v1437 = vpack.c.b16 %v1377, %v1373
  %v1438 = vpack.c.b16 %v1378, %v1374
  %v1439 = vpack.c.b16 %v1383, %v1379
  %v1440 = vpack.c.b16 %v1384, %v1380
  %v1441 = vpack.c.b16 %v1385, %v1381
  %v1442 = vpack.c.b16 %v1386, %v1382
  %v1443 = vpack.c.b16 %v1391, %v1387
  %v1444 = vpack.c.b16 %v1392, %v1388
  %v1445 = vpack.c.b16 %v1393, %v1389
  %v1446 = vpack.c.b16 %v1394, %v1390
  %v1447 = vpack.c.b16 %v1399, %v1395
  %v1448 = vpack.c.b16 %v1400, %v1396
  %v1449 = vpack.c.b16 %v1401, %v1397
  %v1450 = vpack.c.b16 %v1402, %v1398
  %v1451 = vpack.c.b16 %v1407, %v1403
  %v1452 = vpack.c.b16 %v1408, %v1404
  %v1453 = vpack.c.b16 %v1409, %v1405
  %v1454 = vpack.c.b16 %v1410, %v1406
  %v1455 = vpack.c.b16 %v1415, %v1411
  %v1456 = vpack.c.b16 %v1416, %v1412
  %v1457 = vpack.c.b16 %v1417, %v1413
  %v1458 = vpack.c.b16 %v1418, %v1414
  %v1459 = vpack.c.b16 %v1423, %v1419
  %v1460 = vpack.c.b16 %v1424, %v1420
  %v1461 = vpack.c.b16 %v1425, %v1421
  %v1462 = vpack.c.b16 %v1426, %v1422
  %v1463 = vpack.c.b16 %v1431, %v1427
  %v1464 = vpack.c.b16 %v1432, %v1428
  %v1465 = vpack.c.b16 %v1433, %v1429
  %v1466 = vpack.c.b16 %v1434, %v1430
  %1499 = vmatprep.subr.bf16.mxu0 %v1436
  %1500 = vmatpush1.bf16.msra.mxu0 %v1435
  %1501 = vmatprep.subr.bf16.mxu0 %v1440
  %1502 = vmatpush1.bf16.msra.mxu0 %v1439
  %1503 = vmatprep.subr.bf16.mxu0 %v1444
  %1504 = vmatpush1.bf16.msra.mxu0 %v1443
  %1505 = vmatprep.subr.bf16.mxu0 %v1448
  %1506 = vmatpush1.bf16.msra.mxu0 %v1447
  %1507 = vmatprep.subr.bf16.mxu0 %v1452
  %1508 = vmatpush1.bf16.msra.mxu0 %v1451
  %1509 = vmatprep.subr.bf16.mxu0 %v1456
  %1510 = vmatpush1.bf16.msra.mxu0 %v1455
  %1511 = vmatprep.subr.bf16.mxu0 %v1460
  %1512 = vmatpush1.bf16.msra.mxu0 %v1459
  %1513 = vmatprep.subr.bf16.mxu0 %v1464
  %1514 = vmatpush1.bf16.msra.mxu0 %v1463
  %1515 = vmatprep.subr.bf16.mxu0 0
  %1516 = vmatpush1.bf16.msra.mxu0 0
  %1517 = vmatprep.subr.bf16.mxu0 0
  %1518 = vmatpush1.bf16.msra.mxu0 0
  %1519 = vmatprep.subr.bf16.mxu0 0
  %1520 = vmatpush1.bf16.msra.mxu0 0
  %1521 = vmatprep.subr.bf16.mxu0 0
  %1522 = vmatpush1.bf16.msra.mxu0 0
  %1523 = vmatprep.subr.bf16.mxu0 0
  %1524 = vmatpush1.bf16.msra.mxu0 0
  %1525 = vmatprep.subr.bf16.mxu0 0
  %1526 = vmatpush1.bf16.msra.mxu0 0
  %1527 = vmatprep.subr.bf16.mxu0 0
  %1528 = vmatpush1.bf16.msra.mxu0 0
  %1529 = vmatprep.subr.bf16.mxu0 0
  %1530 = vmatpush1.bf16.msra.mxu0 0
  %1531 = vmatprep.mubr.bf16.mxu0 0
  %1532 = vmatmul.mubr.bf16.gmra.mrb[0].mxu0 0
  %v1533 = vpop.f32.mrb[0].mxu0
  %v1534 = vadd.f32 0.0, %v1533
  %v1535 = vpop.f32.mrb[0].mxu0
  %v1536 = vadd.f32 0.0, %v1535
  %v1537 = vpop.f32.mrb[0].mxu0
  %v1538 = vpop.f32.mrb[0].mxu0
  %1539 = vdwg.mxu0
  %1540 = vmatprep.subr.bf16.mxu0 %v1438
  %1541 = vmatpush1.bf16.msra.mxu0 %v1437
  %1542 = vmatprep.subr.bf16.mxu0 %v1442
  %1543 = vmatpush1.bf16.msra.mxu0 %v1441
  %1544 = vmatprep.subr.bf16.mxu0 %v1446
  %1545 = vmatpush1.bf16.msra.mxu0 %v1445
  %1546 = vmatprep.subr.bf16.mxu0 %v1450
  %1547 = vmatpush1.bf16.msra.mxu0 %v1449
  %1548 = vmatprep.subr.bf16.mxu0 %v1454
  %1549 = vmatpush1.bf16.msra.mxu0 %v1453
  %1550 = vmatprep.subr.bf16.mxu0 %v1458
  %1551 = vmatpush1.bf16.msra.mxu0 %v1457
  %1552 = vmatprep.subr.bf16.mxu0 %v1462
  %1553 = vmatpush1.bf16.msra.mxu0 %v1461
  %1554 = vmatprep.subr.bf16.mxu0 %v1466
  %1555 = vmatpush1.bf16.msra.mxu0 %v1465
  %1556 = vmatprep.subr.bf16.mxu0 0
  %1557 = vmatpush1.bf16.msra.mxu0 0
  %1558 = vmatprep.subr.bf16.mxu0 0
  %1559 = vmatpush1.bf16.msra.mxu0 0
  %1560 = vmatprep.subr.bf16.mxu0 0
  %1561 = vmatpush1.bf16.msra.mxu0 0
  %1562 = vmatprep.subr.bf16.mxu0 0
  %1563 = vmatpush1.bf16.msra.mxu0 0
  %1564 = vmatprep.subr.bf16.mxu0 0
  %1565 = vmatpush1.bf16.msra.mxu0 0
  %1566 = vmatprep.subr.bf16.mxu0 0
  %1567 = vmatpush1.bf16.msra.mxu0 0
  %1568 = vmatprep.subr.bf16.mxu0 0
  %1569 = vmatpush1.bf16.msra.mxu0 0
  %1570 = vmatprep.subr.bf16.mxu0 0
  %1571 = vmatpush1.bf16.msra.mxu0 0
  %1572 = vmatprep.mubr.bf16.mxu0 0
  %1573 = vmatmul.mubr.bf16.gmra.mrb[0].mxu0 0
  %v1574 = vpop.f32.mrb[0].mxu0
  %v1575 = vadd.f32 0.0, %v1574
  %v1576 = vpop.f32.mrb[0].mxu0
  %v1577 = vadd.f32 0.0, %v1576
  %v1578 = vpop.f32.mrb[0].mxu0
  %v1579 = vpop.f32.mrb[0].mxu0
  %1580 = vdwg.mxu0
  %v1581 = vadd.f32 %v1335, %v1534
  %v1582 = vadd.f32 %v1336, %v1536
  %v1583 = vadd.f32 %v1337, %v1575
  %v1584 = vadd.f32 %v1338, %v1577
  %s1585 = scalar_lea.vmem [#allocation3], 224
  %v1586 = vld [vmem:[%s1585] sm:$0xff]
  %v1587 = vld [vmem:[%s1585 + $0x8] sm:$0xff]
  %v1588 = vld [vmem:[%s1585 + $0x10] sm:$0xff]
  %v1589 = vld [vmem:[%s1585 + $0x18] sm:$0xff]
  %v1622 = vunpack.c.l.b16 %v1303
  %v1623 = vunpack.c.h.b16 %v1303
  %v1624 = vunpack.c.l.b16 %v1304
  %v1625 = vunpack.c.h.b16 %v1304
  %v1626 = vunpack.c.l.b16 %v1305
  %v1627 = vunpack.c.h.b16 %v1305
  %v1628 = vunpack.c.l.b16 %v1306
  %v1629 = vunpack.c.h.b16 %v1306
  %v1630 = vunpack.c.l.b16 %v1307
  %v1631 = vunpack.c.h.b16 %v1307
  %v1632 = vunpack.c.l.b16 %v1308
  %v1633 = vunpack.c.h.b16 %v1308
  %v1634 = vunpack.c.l.b16 %v1309
  %v1635 = vunpack.c.h.b16 %v1309
  %v1636 = vunpack.c.l.b16 %v1310
  %v1637 = vunpack.c.h.b16 %v1310
  %v1638 = vunpack.c.l.b16 %v1311
  %v1639 = vunpack.c.h.b16 %v1311
  %v1640 = vunpack.c.l.b16 %v1312
  %v1641 = vunpack.c.h.b16 %v1312
  %v1642 = vunpack.c.l.b16 %v1313
  %v1643 = vunpack.c.h.b16 %v1313
  %v1644 = vunpack.c.l.b16 %v1314
  %v1645 = vunpack.c.h.b16 %v1314
  %v1646 = vunpack.c.l.b16 %v1315
  %v1647 = vunpack.c.h.b16 %v1315
  %v1648 = vunpack.c.l.b16 %v1316
  %v1649 = vunpack.c.h.b16 %v1316
  %v1650 = vunpack.c.l.b16 %v1317
  %v1651 = vunpack.c.h.b16 %v1317
  %v1652 = vunpack.c.l.b16 %v1318
  %v1653 = vunpack.c.h.b16 %v1318
  %v1654 = vunpack.c.l.b16 %v1319
  %v1655 = vunpack.c.h.b16 %v1319
  %v1656 = vunpack.c.l.b16 %v1320
  %v1657 = vunpack.c.h.b16 %v1320
  %v1658 = vunpack.c.l.b16 %v1321
  %v1659 = vunpack.c.h.b16 %v1321
  %v1660 = vunpack.c.l.b16 %v1322
  %v1661 = vunpack.c.h.b16 %v1322
  %v1662 = vunpack.c.l.b16 %v1323
  %v1663 = vunpack.c.h.b16 %v1323
  %v1664 = vunpack.c.l.b16 %v1324
  %v1665 = vunpack.c.h.b16 %v1324
  %v1666 = vunpack.c.l.b16 %v1325
  %v1667 = vunpack.c.h.b16 %v1325
  %v1668 = vunpack.c.l.b16 %v1326
  %v1669 = vunpack.c.h.b16 %v1326
  %v1670 = vunpack.c.l.b16 %v1327
  %v1671 = vunpack.c.h.b16 %v1327
  %v1672 = vunpack.c.l.b16 %v1328
  %v1673 = vunpack.c.h.b16 %v1328
  %v1674 = vunpack.c.l.b16 %v1329
  %v1675 = vunpack.c.h.b16 %v1329
  %v1676 = vunpack.c.l.b16 %v1330
  %v1677 = vunpack.c.h.b16 %v1330
  %v1678 = vunpack.c.l.b16 %v1331
  %v1679 = vunpack.c.h.b16 %v1331
  %v1680 = vunpack.c.l.b16 %v1332
  %v1681 = vunpack.c.h.b16 %v1332
  %v1682 = vunpack.c.l.b16 %v1333
  %v1683 = vunpack.c.h.b16 %v1333
  %v1684 = vunpack.c.l.b16 %v1334
  %v1685 = vunpack.c.h.b16 %v1334
  %v1686 = vpack.c.b16 %v1626, %v1622
  %v1687 = vpack.c.b16 %v1627, %v1623
  %v1688 = vpack.c.b16 %v1628, %v1624
  %v1689 = vpack.c.b16 %v1629, %v1625
  %v1690 = vpack.c.b16 %v1634, %v1630
  %v1691 = vpack.c.b16 %v1635, %v1631
  %v1692 = vpack.c.b16 %v1636, %v1632
  %v1693 = vpack.c.b16 %v1637, %v1633
  %v1694 = vpack.c.b16 %v1642, %v1638
  %v1695 = vpack.c.b16 %v1643, %v1639
  %v1696 = vpack.c.b16 %v1644, %v1640
  %v1697 = vpack.c.b16 %v1645, %v1641
  %v1698 = vpack.c.b16 %v1650, %v1646
  %v1699 = vpack.c.b16 %v1651, %v1647
  %v1700 = vpack.c.b16 %v1652, %v1648
  %v1701 = vpack.c.b16 %v1653, %v1649
  %v1702 = vpack.c.b16 %v1658, %v1654
  %v1703 = vpack.c.b16 %v1659, %v1655
  %v1704 = vpack.c.b16 %v1660, %v1656
  %v1705 = vpack.c.b16 %v1661, %v1657
  %v1706 = vpack.c.b16 %v1666, %v1662
  %v1707 = vpack.c.b16 %v1667, %v1663
  %v1708 = vpack.c.b16 %v1668, %v1664
  %v1709 = vpack.c.b16 %v1669, %v1665
  %v1710 = vpack.c.b16 %v1674, %v1670
  %v1711 = vpack.c.b16 %v1675, %v1671
  %v1712 = vpack.c.b16 %v1676, %v1672
  %v1713 = vpack.c.b16 %v1677, %v1673
  %v1714 = vpack.c.b16 %v1682, %v1678
  %v1715 = vpack.c.b16 %v1683, %v1679
  %v1716 = vpack.c.b16 %v1684, %v1680
  %v1717 = vpack.c.b16 %v1685, %v1681
  %1750 = vmatprep.subr.bf16.mxu0 %v1687
  %1751 = vmatpush1.bf16.msra.mxu0 %v1686
  %1752 = vmatprep.subr.bf16.mxu0 %v1691
  %1753 = vmatpush1.bf16.msra.mxu0 %v1690
  %1754 = vmatprep.subr.bf16.mxu0 %v1695
  %1755 = vmatpush1.bf16.msra.mxu0 %v1694
  %1756 = vmatprep.subr.bf16.mxu0 %v1699
  %1757 = vmatpush1.bf16.msra.mxu0 %v1698
  %1758 = vmatprep.subr.bf16.mxu0 %v1703
  %1759 = vmatpush1.bf16.msra.mxu0 %v1702
  %1760 = vmatprep.subr.bf16.mxu0 %v1707
  %1761 = vmatpush1.bf16.msra.mxu0 %v1706
  %1762 = vmatprep.subr.bf16.mxu0 %v1711
  %1763 = vmatpush1.bf16.msra.mxu0 %v1710
  %1764 = vmatprep.subr.bf16.mxu0 %v1715
  %1765 = vmatpush1.bf16.msra.mxu0 %v1714
  %1766 = vmatprep.subr.bf16.mxu0 0
  %1767 = vmatpush1.bf16.msra.mxu0 0
  %1768 = vmatprep.subr.bf16.mxu0 0
  %1769 = vmatpush1.bf16.msra.mxu0 0
  %1770 = vmatprep.subr.bf16.mxu0 0
  %1771 = vmatpush1.bf16.msra.mxu0 0
  %1772 = vmatprep.subr.bf16.mxu0 0
  %1773 = vmatpush1.bf16.msra.mxu0 0
  %1774 = vmatprep.subr.bf16.mxu0 0
  %1775 = vmatpush1.bf16.msra.mxu0 0
  %1776 = vmatprep.subr.bf16.mxu0 0
  %1777 = vmatpush1.bf16.msra.mxu0 0
  %1778 = vmatprep.subr.bf16.mxu0 0
  %1779 = vmatpush1.bf16.msra.mxu0 0
  %1780 = vmatprep.subr.bf16.mxu0 0
  %1781 = vmatpush1.bf16.msra.mxu0 0
  %1782 = vmatprep.mubr.bf16.mxu0 0
  %1783 = vmatmul.mubr.bf16.gmra.mrb[0].mxu0 0
  %v1784 = vpop.f32.mrb[0].mxu0
  %v1785 = vadd.f32 0.0, %v1784
  %v1786 = vpop.f32.mrb[0].mxu0
  %v1787 = vadd.f32 0.0, %v1786
  %v1788 = vpop.f32.mrb[0].mxu0
  %v1789 = vpop.f32.mrb[0].mxu0
  %1790 = vdwg.mxu0
  %1791 = vmatprep.subr.bf16.mxu0 %v1689
  %1792 = vmatpush1.bf16.msra.mxu0 %v1688
  %1793 = vmatprep.subr.bf16.mxu0 %v1693
  %1794 = vmatpush1.bf16.msra.mxu0 %v1692
  %1795 = vmatprep.subr.bf16.mxu0 %v1697
  %1796 = vmatpush1.bf16.msra.mxu0 %v1696
  %1797 = vmatprep.subr.bf16.mxu0 %v1701
  %1798 = vmatpush1.bf16.msra.mxu0 %v1700
  %1799 = vmatprep.subr.bf16.mxu0 %v1705
  %1800 = vmatpush1.bf16.msra.mxu0 %v1704
  %1801 = vmatprep.subr.bf16.mxu0 %v1709
  %1802 = vmatpush1.bf16.msra.mxu0 %v1708
  %1803 = vmatprep.subr.bf16.mxu0 %v1713
  %1804 = vmatpush1.bf16.msra.mxu0 %v1712
  %1805 = vmatprep.subr.bf16.mxu0 %v1717
  %1806 = vmatpush1.bf16.msra.mxu0 %v1716
  %1807 = vmatprep.subr.bf16.mxu0 0
  %1808 = vmatpush1.bf16.msra.mxu0 0
  %1809 = vmatprep.subr.bf16.mxu0 0
  %1810 = vmatpush1.bf16.msra.mxu0 0
  %1811 = vmatprep.subr.bf16.mxu0 0
  %1812 = vmatpush1.bf16.msra.mxu0 0
  %1813 = vmatprep.subr.bf16.mxu0 0
  %1814 = vmatpush1.bf16.msra.mxu0 0
  %1815 = vmatprep.subr.bf16.mxu0 0
  %1816 = vmatpush1.bf16.msra.mxu0 0
  %1817 = vmatprep.subr.bf16.mxu0 0
  %1818 = vmatpush1.bf16.msra.mxu0 0
  %1819 = vmatprep.subr.bf16.mxu0 0
  %1820 = vmatpush1.bf16.msra.mxu0 0
  %1821 = vmatprep.subr.bf16.mxu0 0
  %1822 = vmatpush1.bf16.msra.mxu0 0
  %1823 = vmatprep.mubr.bf16.mxu0 0
  %1824 = vmatmul.mubr.bf16.gmra.mrb[0].mxu0 0
  %v1825 = vpop.f32.mrb[0].mxu0
  %v1826 = vadd.f32 0.0, %v1825
  %v1827 = vpop.f32.mrb[0].mxu0
  %v1828 = vadd.f32 0.0, %v1827
  %v1829 = vpop.f32.mrb[0].mxu0
  %v1830 = vpop.f32.mrb[0].mxu0
  %1831 = vdwg.mxu0
  %v1832 = vadd.f32 %v1586, %v1785
  %v1833 = vadd.f32 %v1587, %v1787
  %v1834 = vadd.f32 %v1588, %v1826
  %v1835 = vadd.f32 %v1589, %v1828
  %v1836 = vxor.u32 %v1581, 2147483648
  %v1837 = vmul.f32 %v1836, 1.442695
  %v1838 = vpow.pop %v1837
  %v1839 = vadd.f32 %v1838, 1.0
  %v1840 = vrcp.pop %v1839
  %v1841 = vmul.f32 1.0, %v1840
  %v1842 = vxor.u32 %v1582, 2147483648
  %v1843 = vmul.f32 %v1842, 1.442695
  %v1844 = vpow.pop %v1843
  %v1845 = vadd.f32 %v1844, 1.0
  %v1846 = vrcp.pop %v1845
  %v1847 = vmul.f32 1.0, %v1846
  %v1848 = vtanh.pop %v1583
  %v1849 = vxor.u32 %v1584, 2147483648
  %v1850 = vmul.f32 %v1849, 1.442695
  %v1851 = vpow.pop %v1850
  %v1852 = vadd.f32 %v1851, 1.0
  %v1853 = vrcp.pop %v1852
  %v1854 = vmul.f32 1.0, %v1853
  %v1855 = vmul.f32 %v1847, 0.0
  %v1856 = vmul.f32 %v1841, %v1848
  %v1857 = vadd.f32 %v1855, %v1856
  %v1858 = vtanh.pop %v1857
  %v1859 = vmul.f32 %v1854, %v1858
  %v1860 = vxor.u32 %v1832, 2147483648
  %v1861 = vmul.f32 %v1860, 1.442695
  %v1862 = vpow.pop %v1861
  %v1863 = vadd.f32 %v1862, 1.0
  %v1864 = vrcp.pop %v1863
  %v1865 = vmul.f32 1.0, %v1864
  %v1866 = vxor.u32 %v1833, 2147483648
  %v1867 = vmul.f32 %v1866, 1.442695
  %v1868 = vpow.pop %v1867
  %v1869 = vadd.f32 %v1868, 1.0
  %v1870 = vrcp.pop %v1869
  %v1871 = vmul.f32 1.0, %v1870
  %v1872 = vtanh.pop %v1834
  %v1873 = vxor.u32 %v1835, 2147483648
  %v1874 = vmul.f32 %v1873, 1.442695
  %v1875 = vpow.pop %v1874
  %v1876 = vadd.f32 %v1875, 1.0
  %v1877 = vrcp.pop %v1876
  %v1878 = vmul.f32 1.0, %v1877
  %v1879 = vmul.f32 %v1871, 0.0
  %v1880 = vmul.f32 %v1865, %v1872
  %v1881 = vadd.f32 %v1879, %v1880
  %v1882 = vtanh.pop %v1881
  %v1883 = vmul.f32 %v1878, %v1882
  %vm1884 = vcmp.gt.s32.totalorder %v56, 0
  %vm1885 = vcmp.gt.s32.totalorder %v56, 7
  %v1886 = vsel %vm1884, 1, 0
  %1887 = vset.pattern.permute.xlu0 0
  %1888 = vperm.xlu0 %1887, %v1886
  %v1889 = vpop.permute.xlu0 %1888
  %vm1890 = vcmp.eq.s32.totalorder %v1889, 1
  %v1891 = vsel %vm1890, %v1859, 0.0
  %1892 = vst [vmem:[#allocation4] sm:$0xff] %v1891
  %v1893 = vsel %vm1885, 1, 0
  %1894 = vset.pattern.permute.xlu0 0
  %1895 = vperm.xlu0 %1894, %v1893
  %v1896 = vpop.permute.xlu0 %1895
  %vm1897 = vcmp.eq.s32.totalorder %v1896, 1
  %v1898 = vsel %vm1897, %v1883, 0.0
  %s1899 = scalar_lea.vmem [#allocation5], 56
  %1900 = vst [vmem:[%s1899] sm:$0xff] %v1898
  %v1901 = vsel %vm1890, %v1857, 0.0
  %v1902 = vsel %vm1897, %v1881, 0.0
  %s1903 = scalar_lea.vmem [#allocation2], 32
  %v1904 = vld [vmem:[%s1903] sm:$0xff]
  %v1905 = vld [vmem:[%s1903 + $0x8] sm:$0xff]
  %v1906 = vld [vmem:[%s1903 + $0x10] sm:$0xff]
  %v1907 = vld [vmem:[%s1903 + $0x18] sm:$0xff]
  %v1908 = vpack.c.bf16 %v1891, %v1891
  %1909 = vmatprep.subr.bf16.mxu0 %v1436
  %1910 = vmatpush1.bf16.msra.mxu0 %v1435
  %1911 = vmatprep.subr.bf16.mxu0 %v1440
  %1912 = vmatpush1.bf16.msra.mxu0 %v1439
  %1913 = vmatprep.subr.bf16.mxu0 %v1444
  %1914 = vmatpush1.bf16.msra.mxu0 %v1443
  %1915 = vmatprep.subr.bf16.mxu0 %v1448
  %1916 = vmatpush1.bf16.msra.mxu0 %v1447
  %1917 = vmatprep.subr.bf16.mxu0 %v1452
  %1918 = vmatpush1.bf16.msra.mxu0 %v1451
  %1919 = vmatprep.subr.bf16.mxu0 %v1456
  %1920 = vmatpush1.bf16.msra.mxu0 %v1455
  %1921 = vmatprep.subr.bf16.mxu0 %v1460
  %1922 = vmatpush1.bf16.msra.mxu0 %v1459
  %1923 = vmatprep.subr.bf16.mxu0 %v1464
  %1924 = vmatpush1.bf16.msra.mxu0 %v1463
  %1925 = vmatprep.subr.bf16.mxu0 0
  %1926 = vmatpush1.bf16.msra.mxu0 0
  %1927 = vmatprep.subr.bf16.mxu0 0
  %1928 = vmatpush1.bf16.msra.mxu0 0
  %1929 = vmatprep.subr.bf16.mxu0 0
  %1930 = vmatpush1.bf16.msra.mxu0 0
  %1931 = vmatprep.subr.bf16.mxu0 0
  %1932 = vmatpush1.bf16.msra.mxu0 0
  %1933 = vmatprep.subr.bf16.mxu0 0
  %1934 = vmatpush1.bf16.msra.mxu0 0
  %1935 = vmatprep.subr.bf16.mxu0 0
  %1936 = vmatpush1.bf16.msra.mxu0 0
  %1937 = vmatprep.subr.bf16.mxu0 0
  %1938 = vmatpush1.bf16.msra.mxu0 0
  %1939 = vmatprep.subr.bf16.mxu0 0
  %1940 = vmatpush1.bf16.msra.mxu0 0
  %1941 = vmatprep.mubr.bf16.mxu0 0
  %1942 = vmatmul.mubr.bf16.gmra.mrb[0].mxu0 %v1908
  %v1943 = vpop.f32.mrb[0].mxu0
  %v1944 = vadd.f32 0.0, %v1943
  %v1945 = vpop.f32.mrb[0].mxu0
  %v1946 = vadd.f32 0.0, %v1945
  %v1947 = vpop.f32.mrb[0].mxu0
  %v1948 = vpop.f32.mrb[0].mxu0
  %1949 = vdwg.mxu0
  %1950 = vmatprep.subr.bf16.mxu0 %v1438
  %1951 = vmatpush1.bf16.msra.mxu0 %v1437
  %1952 = vmatprep.subr.bf16.mxu0 %v1442
  %1953 = vmatpush1.bf16.msra.mxu0 %v1441
  %1954 = vmatprep.subr.bf16.mxu0 %v1446
  %1955 = vmatpush1.bf16.msra.mxu0 %v1445
  %1956 = vmatprep.subr.bf16.mxu0 %v1450
  %1957 = vmatpush1.bf16.msra.mxu0 %v1449
  %1958 = vmatprep.subr.bf16.mxu0 %v1454
  %1959 = vmatpush1.bf16.msra.mxu0 %v1453
  %1960 = vmatprep.subr.bf16.mxu0 %v1458
  %1961 = vmatpush1.bf16.msra.mxu0 %v1457
  %1962 = vmatprep.subr.bf16.mxu0 %v1462
  %1963 = vmatpush1.bf16.msra.mxu0 %v1461
  %1964 = vmatprep.subr.bf16.mxu0 %v1466
  %1965 = vmatpush1.bf16.msra.mxu0 %v1465
  %1966 = vmatprep.subr.bf16.mxu0 0
  %1967 = vmatpush1.bf16.msra.mxu0 0
  %1968 = vmatprep.subr.bf16.mxu0 0
  %1969 = vmatpush1.bf16.msra.mxu0 0
  %1970 = vmatprep.subr.bf16.mxu0 0
  %1971 = vmatpush1.bf16.msra.mxu0 0
  %1972 = vmatprep.subr.bf16.mxu0 0
  %1973 = vmatpush1.bf16.msra.mxu0 0
  %1974 = vmatprep.subr.bf16.mxu0 0
  %1975 = vmatpush1.bf16.msra.mxu0 0
  %1976 = vmatprep.subr.bf16.mxu0 0
  %1977 = vmatpush1.bf16.msra.mxu0 0
  %1978 = vmatprep.subr.bf16.mxu0 0
  %1979 = vmatpush1.bf16.msra.mxu0 0
  %1980 = vmatprep.subr.bf16.mxu0 0
  %1981 = vmatpush1.bf16.msra.mxu0 0
  %1982 = vmatprep.mubr.bf16.mxu0 0
  %1983 = vmatmul.mubr.bf16.gmra.mrb[0].mxu0 %v1908
  %v1984 = vpop.f32.mrb[0].mxu0
  %v1985 = vadd.f32 0.0, %v1984
  %v1986 = vpop.f32.mrb[0].mxu0
  %v1987 = vadd.f32 0.0, %v1986
  %v1988 = vpop.f32.mrb[0].mxu0
  %v1989 = vpop.f32.mrb[0].mxu0
  %1990 = vdwg.mxu0
  %v1991 = vadd.f32 %v1904, %v1944
  %v1992 = vadd.f32 %v1905, %v1946
  %v1993 = vadd.f32 %v1906, %v1985
  %v1994 = vadd.f32 %v1907, %v1987
  %s1995 = scalar_lea.vmem [#allocation3], 192
  %v1996 = vld [vmem:[%s1995] sm:$0xff]
  %v1997 = vld [vmem:[%s1995 + $0x8] sm:$0xff]
  %v1998 = vld [vmem:[%s1995 + $0x10] sm:$0xff]
  %v1999 = vld [vmem:[%s1995 + $0x18] sm:$0xff]
  %v2000 = vpack.c.bf16 %v1898, %v1898
  %2001 = vmatprep.subr.bf16.mxu0 %v1687
  %2002 = vmatpush1.bf16.msra.mxu0 %v1686
  %2003 = vmatprep.subr.bf16.mxu0 %v1691
  %2004 = vmatpush1.bf16.msra.mxu0 %v1690
  %2005 = vmatprep.subr.bf16.mxu0 %v1695
  %2006 = vmatpush1.bf16.msra.mxu0 %v1694
  %2007 = vmatprep.subr.bf16.mxu0 %v1699
  %2008 = vmatpush1.bf16.msra.mxu0 %v1698
  %2009 = vmatprep.subr.bf16.mxu0 %v1703
  %2010 = vmatpush1.bf16.msra.mxu0 %v1702
  %2011 = vmatprep.subr.bf16.mxu0 %v1707
  %2012 = vmatpush1.bf16.msra.mxu0 %v1706
  %2013 = vmatprep.subr.bf16.mxu0 %v1711
  %2014 = vmatpush1.bf16.msra.mxu0 %v1710
  %2015 = vmatprep.subr.bf16.mxu0 %v1715
  %2016 = vmatpush1.bf16.msra.mxu0 %v1714
  %2017 = vmatprep.subr.bf16.mxu0 0
  %2018 = vmatpush1.bf16.msra.mxu0 0
  %2019 = vmatprep.subr.bf16.mxu0 0
  %2020 = vmatpush1.bf16.msra.mxu0 0
  %2021 = vmatprep.subr.bf16.mxu0 0
  %2022 = vmatpush1.bf16.msra.mxu0 0
  %2023 = vmatprep.subr.bf16.mxu0 0
  %2024 = vmatpush1.bf16.msra.mxu0 0
  %2025 = vmatprep.subr.bf16.mxu0 0
  %2026 = vmatpush1.bf16.msra.mxu0 0
  %2027 = vmatprep.subr.bf16.mxu0 0
  %2028 = vmatpush1.bf16.msra.mxu0 0
  %2029 = vmatprep.subr.bf16.mxu0 0
  %2030 = vmatpush1.bf16.msra.mxu0 0
  %2031 = vmatprep.subr.bf16.mxu0 0
  %2032 = vmatpush1.bf16.msra.mxu0 0
  %2033 = vmatprep.mubr.bf16.mxu0 0
  %2034 = vmatmul.mubr.bf16.gmra.mrb[0].mxu0 %v2000
  %v2035 = vpop.f32.mrb[0].mxu0
  %v2036 = vadd.f32 0.0, %v2035
  %v2037 = vpop.f32.mrb[0].mxu0
  %v2038 = vadd.f32 0.0, %v2037
  %v2039 = vpop.f32.mrb[0].mxu0
  %v2040 = vpop.f32.mrb[0].mxu0
  %2041 = vdwg.mxu0
  %2042 = vmatprep.subr.bf16.mxu0 %v1689
  %2043 = vmatpush1.bf16.msra.mxu0 %v1688
  %2044 = vmatprep.subr.bf16.mxu0 %v1693
  %2045 = vmatpush1.bf16.msra.mxu0 %v1692
  %2046 = vmatprep.subr.bf16.mxu0 %v1697
  %2047 = vmatpush1.bf16.msra.mxu0 %v1696
  %2048 = vmatprep.subr.bf16.mxu0 %v1701
  %2049 = vmatpush1.bf16.msra.mxu0 %v1700
  %2050 = vmatprep.subr.bf16.mxu0 %v1705
  %2051 = vmatpush1.bf16.msra.mxu0 %v1704
  %2052 = vmatprep.subr.bf16.mxu0 %v1709
  %2053 = vmatpush1.bf16.msra.mxu0 %v1708
  %2054 = vmatprep.subr.bf16.mxu0 %v1713
  %2055 = vmatpush1.bf16.msra.mxu0 %v1712
  %2056 = vmatprep.subr.bf16.mxu0 %v1717
  %2057 = vmatpush1.bf16.msra.mxu0 %v1716
  %2058 = vmatprep.subr.bf16.mxu0 0
  %2059 = vmatpush1.bf16.msra.mxu0 0
  %2060 = vmatprep.subr.bf16.mxu0 0
  %2061 = vmatpush1.bf16.msra.mxu0 0
  %2062 = vmatprep.subr.bf16.mxu0 0
  %2063 = vmatpush1.bf16.msra.mxu0 0
  %2064 = vmatprep.subr.bf16.mxu0 0
  %2065 = vmatpush1.bf16.msra.mxu0 0
  %2066 = vmatprep.subr.bf16.mxu0 0
  %2067 = vmatpush1.bf16.msra.mxu0 0
  %2068 = vmatprep.subr.bf16.mxu0 0
  %2069 = vmatpush1.bf16.msra.mxu0 0
  %2070 = vmatprep.subr.bf16.mxu0 0
  %2071 = vmatpush1.bf16.msra.mxu0 0
  %2072 = vmatprep.subr.bf16.mxu0 0
  %2073 = vmatpush1.bf16.msra.mxu0 0
  %2074 = vmatprep.mubr.bf16.mxu0 0
  %2075 = vmatmul.mubr.bf16.gmra.mrb[0].mxu0 %v2000
  %v2076 = vpop.f32.mrb[0].mxu0
  %v2077 = vadd.f32 0.0, %v2076
  %v2078 = vpop.f32.mrb[0].mxu0
  %v2079 = vadd.f32 0.0, %v2078
  %v2080 = vpop.f32.mrb[0].mxu0
  %v2081 = vpop.f32.mrb[0].mxu0
  %2082 = vdwg.mxu0
  %v2083 = vadd.f32 %v1996, %v2036
  %v2084 = vadd.f32 %v1997, %v2038
  %v2085 = vadd.f32 %v1998, %v2077
  %v2086 = vadd.f32 %v1999, %v2079
  %v2087 = vxor.u32 %v1991, 2147483648
  %v2088 = vmul.f32 %v2087, 1.442695
  %v2089 = vpow.pop %v2088
  %v2090 = vadd.f32 %v2089, 1.0
  %v2091 = vrcp.pop %v2090
  %v2092 = vmul.f32 1.0, %v2091
  %v2093 = vxor.u32 %v1992, 2147483648
  %v2094 = vmul.f32 %v2093, 1.442695
  %v2095 = vpow.pop %v2094
  %v2096 = vadd.f32 %v2095, 1.0
  %v2097 = vrcp.pop %v2096
  %v2098 = vmul.f32 1.0, %v2097
  %v2099 = vtanh.pop %v1993
  %v2100 = vxor.u32 %v1994, 2147483648
  %v2101 = vmul.f32 %v2100, 1.442695
  %v2102 = vpow.pop %v2101
  %v2103 = vadd.f32 %v2102, 1.0
  %v2104 = vrcp.pop %v2103
  %v2105 = vmul.f32 1.0, %v2104
  %v2106 = vmul.f32 %v2098, %v1901
  %v2107 = vmul.f32 %v2092, %v2099
  %v2108 = vadd.f32 %v2106, %v2107
  %v2109 = vtanh.pop %v2108
  %v2110 = vmul.f32 %v2105, %v2109
  %v2111 = vxor.u32 %v2083, 2147483648
  %v2112 = vmul.f32 %v2111, 1.442695
  %v2113 = vpow.pop %v2112
  %v2114 = vadd.f32 %v2113, 1.0
  %v2115 = vrcp.pop %v2114
  %v2116 = vmul.f32 1.0, %v2115
  %v2117 = vxor.u32 %v2084, 2147483648
  %v2118 = vmul.f32 %v2117, 1.442695
  %v2119 = vpow.pop %v2118
  %v2120 = vadd.f32 %v2119, 1.0
  %v2121 = vrcp.pop %v2120
  %v2122 = vmul.f32 1.0, %v2121
  %v2123 = vtanh.pop %v2085
  %v2124 = vxor.u32 %v2086, 2147483648
  %v2125 = vmul.f32 %v2124, 1.442695
  %v2126 = vpow.pop %v2125
  %v2127 = vadd.f32 %v2126, 1.0
  %v2128 = vrcp.pop %v2127
  %v2129 = vmul.f32 1.0, %v2128
  %v2130 = vmul.f32 %v2122, %v1902
  %v2131 = vmul.f32 %v2116, %v2123
  %v2132 = vadd.f32 %v2130, %v2131
  %v2133 = vtanh.pop %v2132
  %v2134 = vmul.f32 %v2129, %v2133
  %vm2135 = vcmp.gt.s32.totalorder %v56, 1
  %vm2136 = vcmp.gt.s32.totalorder %v56, 6
  %v2137 = vsel %vm2135, 1, 0
  %2138 = vset.pattern.permute.xlu0 0
  %2139 = vperm.xlu0 %2138, %v2137
  %v2140 = vpop.permute.xlu0 %2139
  %vm2141 = vcmp.eq.s32.totalorder %v2140, 1
  %v2142 = vsel %vm2141, %v2110, 0.0
  %s2143 = scalar_lea.vmem [#allocation4], 8
  %2144 = vst [vmem:[%s2143] sm:$0xff] %v2142
  %v2145 = vsel %vm2136, 1, 0
  %2146 = vset.pattern.permute.xlu0 0
  %2147 = vperm.xlu0 %2146, %v2145
  %v2148 = vpop.permute.xlu0 %2147
  %vm2149 = vcmp.eq.s32.totalorder %v2148, 1
  %v2150 = vsel %vm2149, %v2134, 0.0
  %s2151 = scalar_lea.vmem [#allocation5], 48
  %2152 = vst [vmem:[%s2151] sm:$0xff] %v2150
  %v2153 = vsel %vm2141, %v2110, %v1891
  %v2154 = vsel %vm2141, %v2108, %v1901
  %v2155 = vsel %vm2149, %v2134, %v1898
  %v2156 = vsel %vm2149, %v2132, %v1902
  %s2157 = scalar_lea.vmem [#allocation2], 64
  %v2158 = vld [vmem:[%s2157] sm:$0xff]
  %v2159 = vld [vmem:[%s2157 + $0x8] sm:$0xff]
  %v2160 = vld [vmem:[%s2157 + $0x10] sm:$0xff]
  %v2161 = vld [vmem:[%s2157 + $0x18] sm:$0xff]
  %v2162 = vpack.c.bf16 %v2153, %v2153
  %2163 = vmatprep.subr.bf16.mxu0 %v1436
  %2164 = vmatpush1.bf16.msra.mxu0 %v1435
  %2165 = vmatprep.subr.bf16.mxu0 %v1440
  %2166 = vmatpush1.bf16.msra.mxu0 %v1439
  %2167 = vmatprep.subr.bf16.mxu0 %v1444
  %2168 = vmatpush1.bf16.msra.mxu0 %v1443
  %2169 = vmatprep.subr.bf16.mxu0 %v1448
  %2170 = vmatpush1.bf16.msra.mxu0 %v1447
  %2171 = vmatprep.subr.bf16.mxu0 %v1452
  %2172 = vmatpush1.bf16.msra.mxu0 %v1451
  %2173 = vmatprep.subr.bf16.mxu0 %v1456
  %2174 = vmatpush1.bf16.msra.mxu0 %v1455
  %2175 = vmatprep.subr.bf16.mxu0 %v1460
  %2176 = vmatpush1.bf16.msra.mxu0 %v1459
  %2177 = vmatprep.subr.bf16.mxu0 %v1464
  %2178 = vmatpush1.bf16.msra.mxu0 %v1463
  %2179 = vmatprep.subr.bf16.mxu0 0
  %2180 = vmatpush1.bf16.msra.mxu0 0
  %2181 = vmatprep.subr.bf16.mxu0 0
  %2182 = vmatpush1.bf16.msra.mxu0 0
  %2183 = vmatprep.subr.bf16.mxu0 0
  %2184 = vmatpush1.bf16.msra.mxu0 0
  %2185 = vmatprep.subr.bf16.mxu0 0
  %2186 = vmatpush1.bf16.msra.mxu0 0
  %2187 = vmatprep.subr.bf16.mxu0 0
  %2188 = vmatpush1.bf16.msra.mxu0 0
  %2189 = vmatprep.subr.bf16.mxu0 0
  %2190 = vmatpush1.bf16.msra.mxu0 0
  %2191 = vmatprep.subr.bf16.mxu0 0
  %2192 = vmatpush1.bf16.msra.mxu0 0
  %2193 = vmatprep.subr.bf16.mxu0 0
  %2194 = vmatpush1.bf16.msra.mxu0 0
  %2195 = vmatprep.mubr.bf16.mxu0 0
  %2196 = vmatmul.mubr.bf16.gmra.mrb[0].mxu0 %v2162
  %v2197 = vpop.f32.mrb[0].mxu0
  %v2198 = vadd.f32 0.0, %v2197
  %v2199 = vpop.f32.mrb[0].mxu0
  %v2200 = vadd.f32 0.0, %v2199
  %v2201 = vpop.f32.mrb[0].mxu0
  %v2202 = vpop.f32.mrb[0].mxu0
  %2203 = vdwg.mxu0
  %2204 = vmatprep.subr.bf16.mxu0 %v1438
  %2205 = vmatpush1.bf16.msra.mxu0 %v1437
  %2206 = vmatprep.subr.bf16.mxu0 %v1442
  %2207 = vmatpush1.bf16.msra.mxu0 %v1441
  %2208 = vmatprep.subr.bf16.mxu0 %v1446
  %2209 = vmatpush1.bf16.msra.mxu0 %v1445
  %2210 = vmatprep.subr.bf16.mxu0 %v1450
  %2211 = vmatpush1.bf16.msra.mxu0 %v1449
  %2212 = vmatprep.subr.bf16.mxu0 %v1454
  %2213 = vmatpush1.bf16.msra.mxu0 %v1453
  %2214 = vmatprep.subr.bf16.mxu0 %v1458
  %2215 = vmatpush1.bf16.msra.mxu0 %v1457
  %2216 = vmatprep.subr.bf16.mxu0 %v1462
  %2217 = vmatpush1.bf16.msra.mxu0 %v1461
  %2218 = vmatprep.subr.bf16.mxu0 %v1466
  %2219 = vmatpush1.bf16.msra.mxu0 %v1465
  %2220 = vmatprep.subr.bf16.mxu0 0
  %2221 = vmatpush1.bf16.msra.mxu0 0
  %2222 = vmatprep.subr.bf16.mxu0 0
  %2223 = vmatpush1.bf16.msra.mxu0 0
  %2224 = vmatprep.subr.bf16.mxu0 0
  %2225 = vmatpush1.bf16.msra.mxu0 0
  %2226 = vmatprep.subr.bf16.mxu0 0
  %2227 = vmatpush1.bf16.msra.mxu0 0
  %2228 = vmatprep.subr.bf16.mxu0 0
  %2229 = vmatpush1.bf16.msra.mxu0 0
  %2230 = vmatprep.subr.bf16.mxu0 0
  %2231 = vmatpush1.bf16.msra.mxu0 0
  %2232 = vmatprep.subr.bf16.mxu0 0
  %2233 = vmatpush1.bf16.msra.mxu0 0
  %2234 = vmatprep.subr.bf16.mxu0 0
  %2235 = vmatpush1.bf16.msra.mxu0 0
  %2236 = vmatprep.mubr.bf16.mxu0 0
  %2237 = vmatmul.mubr.bf16.gmra.mrb[0].mxu0 %v2162
  %v2238 = vpop.f32.mrb[0].mxu0
  %v2239 = vadd.f32 0.0, %v2238
  %v2240 = vpop.f32.mrb[0].mxu0
  %v2241 = vadd.f32 0.0, %v2240
  %v2242 = vpop.f32.mrb[0].mxu0
  %v2243 = vpop.f32.mrb[0].mxu0
  %2244 = vdwg.mxu0
  %v2245 = vadd.f32 %v2158, %v2198
  %v2246 = vadd.f32 %v2159, %v2200
  %v2247 = vadd.f32 %v2160, %v2239
  %v2248 = vadd.f32 %v2161, %v2241
  %s2249 = scalar_lea.vmem [#allocation3], 160
  %v2250 = vld [vmem:[%s2249] sm:$0xff]
  %v2251 = vld [vmem:[%s2249 + $0x8] sm:$0xff]
  %v2252 = vld [vmem:[%s2249 + $0x10] sm:$0xff]
  %v2253 = vld [vmem:[%s2249 + $0x18] sm:$0xff]
  %v2254 = vpack.c.bf16 %v2155, %v2155
  %2255 = vmatprep.subr.bf16.mxu0 %v1687
  %2256 = vmatpush1.bf16.msra.mxu0 %v1686
  %2257 = vmatprep.subr.bf16.mxu0 %v1691
  %2258 = vmatpush1.bf16.msra.mxu0 %v1690
  %2259 = vmatprep.subr.bf16.mxu0 %v1695
  %2260 = vmatpush1.bf16.msra.mxu0 %v1694
  %2261 = vmatprep.subr.bf16.mxu0 %v1699
  %2262 = vmatpush1.bf16.msra.mxu0 %v1698
  %2263 = vmatprep.subr.bf16.mxu0 %v1703
  %2264 = vmatpush1.bf16.msra.mxu0 %v1702
  %2265 = vmatprep.subr.bf16.mxu0 %v1707
  %2266 = vmatpush1.bf16.msra.mxu0 %v1706
  %2267 = vmatprep.subr.bf16.mxu0 %v1711
  %2268 = vmatpush1.bf16.msra.mxu0 %v1710
  %2269 = vmatprep.subr.bf16.mxu0 %v1715
  %2270 = vmatpush1.bf16.msra.mxu0 %v1714
  %2271 = vmatprep.subr.bf16.mxu0 0
  %2272 = vmatpush1.bf16.msra.mxu0 0
  %2273 = vmatprep.subr.bf16.mxu0 0
  %2274 = vmatpush1.bf16.msra.mxu0 0
  %2275 = vmatprep.subr.bf16.mxu0 0
  %2276 = vmatpush1.bf16.msra.mxu0 0
  %2277 = vmatprep.subr.bf16.mxu0 0
  %2278 = vmatpush1.bf16.msra.mxu0 0
  %2279 = vmatprep.subr.bf16.mxu0 0
  %2280 = vmatpush1.bf16.msra.mxu0 0
  %2281 = vmatprep.subr.bf16.mxu0 0
  %2282 = vmatpush1.bf16.msra.mxu0 0
  %2283 = vmatprep.subr.bf16.mxu0 0
  %2284 = vmatpush1.bf16.msra.mxu0 0
  %2285 = vmatprep.subr.bf16.mxu0 0
  %2286 = vmatpush1.bf16.msra.mxu0 0
  %2287 = vmatprep.mubr.bf16.mxu0 0
  %2288 = vmatmul.mubr.bf16.gmra.mrb[0].mxu0 %v2254
  %v2289 = vpop.f32.mrb[0].mxu0
  %v2290 = vadd.f32 0.0, %v2289
  %v2291 = vpop.f32.mrb[0].mxu0
  %v2292 = vadd.f32 0.0, %v2291
  %v2293 = vpop.f32.mrb[0].mxu0
  %v2294 = vpop.f32.mrb[0].mxu0
  %2295 = vdwg.mxu0
  %2296 = vmatprep.subr.bf16.mxu0 %v1689
  %2297 = vmatpush1.bf16.msra.mxu0 %v1688
  %2298 = vmatprep.subr.bf16.mxu0 %v1693
  %2299 = vmatpush1.bf16.msra.mxu0 %v1692
  %2300 = vmatprep.subr.bf16.mxu0 %v1697
  %2301 = vmatpush1.bf16.msra.mxu0 %v1696
  %2302 = vmatprep.subr.bf16.mxu0 %v1701
  %2303 = vmatpush1.bf16.msra.mxu0 %v1700
  %2304 = vmatprep.subr.bf16.mxu0 %v1705
  %2305 = vmatpush1.bf16.msra.mxu0 %v1704
  %2306 = vmatprep.subr.bf16.mxu0 %v1709
  %2307 = vmatpush1.bf16.msra.mxu0 %v1708
  %2308 = vmatprep.subr.bf16.mxu0 %v1713
  %2309 = vmatpush1.bf16.msra.mxu0 %v1712
  %2310 = vmatprep.subr.bf16.mxu0 %v1717
  %2311 = vmatpush1.bf16.msra.mxu0 %v1716
  %2312 = vmatprep.subr.bf16.mxu0 0
  %2313 = vmatpush1.bf16.msra.mxu0 0
  %2314 = vmatprep.subr.bf16.mxu0 0
  %2315 = vmatpush1.bf16.msra.mxu0 0
  %2316 = vmatprep.subr.bf16.mxu0 0
  %2317 = vmatpush1.bf16.msra.mxu0 0
  %2318 = vmatprep.subr.bf16.mxu0 0
  %2319 = vmatpush1.bf16.msra.mxu0 0
  %2320 = vmatprep.subr.bf16.mxu0 0
  %2321 = vmatpush1.bf16.msra.mxu0 0
  %2322 = vmatprep.subr.bf16.mxu0 0
  %2323 = vmatpush1.bf16.msra.mxu0 0
  %2324 = vmatprep.subr.bf16.mxu0 0
  %2325 = vmatpush1.bf16.msra.mxu0 0
  %2326 = vmatprep.subr.bf16.mxu0 0
  %2327 = vmatpush1.bf16.msra.mxu0 0
  %2328 = vmatprep.mubr.bf16.mxu0 0
  %2329 = vmatmul.mubr.bf16.gmra.mrb[0].mxu0 %v2254
  %v2330 = vpop.f32.mrb[0].mxu0
  %v2331 = vadd.f32 0.0, %v2330
  %v2332 = vpop.f32.mrb[0].mxu0
  %v2333 = vadd.f32 0.0, %v2332
  %v2334 = vpop.f32.mrb[0].mxu0
  %v2335 = vpop.f32.mrb[0].mxu0
  %2336 = vdwg.mxu0
  %v2337 = vadd.f32 %v2250, %v2290
  %v2338 = vadd.f32 %v2251, %v2292
  %v2339 = vadd.f32 %v2252, %v2331
  %v2340 = vadd.f32 %v2253, %v2333
  %v2341 = vxor.u32 %v2245, 2147483648
  %v2342 = vmul.f32 %v2341, 1.442695
  %v2343 = vpow.pop %v2342
  %v2344 = vadd.f32 %v2343, 1.0
  %v2345 = vrcp.pop %v2344
  %v2346 = vmul.f32 1.0, %v2345
  %v2347 = vxor.u32 %v2246, 2147483648
  %v2348 = vmul.f32 %v2347, 1.442695
  %v2349 = vpow.pop %v2348
  %v2350 = vadd.f32 %v2349, 1.0
  %v2351 = vrcp.pop %v2350
  %v2352 = vmul.f32 1.0, %v2351
  %v2353 = vtanh.pop %v2247
  %v2354 = vxor.u32 %v2248, 2147483648
  %v2355 = vmul.f32 %v2354, 1.442695
  %v2356 = vpow.pop %v2355
  %v2357 = vadd.f32 %v2356, 1.0
  %v2358 = vrcp.pop %v2357
  %v2359 = vmul.f32 1.0, %v2358
  %v2360 = vmul.f32 %v2352, %v2154
  %v2361 = vmul.f32 %v2346, %v2353
  %v2362 = vadd.f32 %v2360, %v2361
  %v2363 = vtanh.pop %v2362
  %v2364 = vmul.f32 %v2359, %v2363
  %v2365 = vxor.u32 %v2337, 2147483648
  %v2366 = vmul.f32 %v2365, 1.442695
  %v2367 = vpow.pop %v2366
  %v2368 = vadd.f32 %v2367, 1.0
  %v2369 = vrcp.pop %v2368
  %v2370 = vmul.f32 1.0, %v2369
  %v2371 = vxor.u32 %v2338, 2147483648
  %v2372 = vmul.f32 %v2371, 1.442695
  %v2373 = vpow.pop %v2372
  %v2374 = vadd.f32 %v2373, 1.0
  %v2375 = vrcp.pop %v2374
  %v2376 = vmul.f32 1.0, %v2375
  %v2377 = vtanh.pop %v2339
  %v2378 = vxor.u32 %v2340, 2147483648
  %v2379 = vmul.f32 %v2378, 1.442695
  %v2380 = vpow.pop %v2379
  %v2381 = vadd.f32 %v2380, 1.0
  %v2382 = vrcp.pop %v2381
  %v2383 = vmul.f32 1.0, %v2382
  %v2384 = vmul.f32 %v2376, %v2156
  %v2385 = vmul.f32 %v2370, %v2377
  %v2386 = vadd.f32 %v2384, %v2385
  %v2387 = vtanh.pop %v2386
  %v2388 = vmul.f32 %v2383, %v2387
  %vm2389 = vcmp.gt.s32.totalorder %v56, 2
  %vm2390 = vcmp.gt.s32.totalorder %v56, 5
  %v2391 = vsel %vm2389, 1, 0
  %2392 = vset.pattern.permute.xlu0 0
  %2393 = vperm.xlu0 %2392, %v2391
  %v2394 = vpop.permute.xlu0 %2393
  %vm2395 = vcmp.eq.s32.totalorder %v2394, 1
  %v2396 = vsel %vm2395, %v2364, 0.0
  %s2397 = scalar_lea.vmem [#allocation4], 16
  %2398 = vst [vmem:[%s2397] sm:$0xff] %v2396
  %v2399 = vsel %vm2390, 1, 0
  %2400 = vset.pattern.permute.xlu0 0
  %2401 = vperm.xlu0 %2400, %v2399
  %v2402 = vpop.permute.xlu0 %2401
  %vm2403 = vcmp.eq.s32.totalorder %v2402, 1
  %v2404 = vsel %vm2403, %v2388, 0.0
  %s2405 = scalar_lea.vmem [#allocation5], 40
  %2406 = vst [vmem:[%s2405] sm:$0xff] %v2404
  %v2407 = vsel %vm2395, %v2364, %v2153
  %v2408 = vsel %vm2395, %v2362, %v2154
  %v2409 = vsel %vm2403, %v2388, %v2155
  %v2410 = vsel %vm2403, %v2386, %v2156
  %s2411 = scalar_lea.vmem [#allocation2], 96
  %v2412 = vld [vmem:[%s2411] sm:$0xff]
  %v2413 = vld [vmem:[%s2411 + $0x8] sm:$0xff]
  %v2414 = vld [vmem:[%s2411 + $0x10] sm:$0xff]
  %v2415 = vld [vmem:[%s2411 + $0x18] sm:$0xff]
  %v2416 = vpack.c.bf16 %v2407, %v2407
  %2417 = vmatprep.subr.bf16.mxu0 %v1436
  %2418 = vmatpush1.bf16.msra.mxu0 %v1435
  %2419 = vmatprep.subr.bf16.mxu0 %v1440
  %2420 = vmatpush1.bf16.msra.mxu0 %v1439
  %2421 = vmatprep.subr.bf16.mxu0 %v1444
  %2422 = vmatpush1.bf16.msra.mxu0 %v1443
  %2423 = vmatprep.subr.bf16.mxu0 %v1448
  %2424 = vmatpush1.bf16.msra.mxu0 %v1447
  %2425 = vmatprep.subr.bf16.mxu0 %v1452
  %2426 = vmatpush1.bf16.msra.mxu0 %v1451
  %2427 = vmatprep.subr.bf16.mxu0 %v1456
  %2428 = vmatpush1.bf16.msra.mxu0 %v1455
  %2429 = vmatprep.subr.bf16.mxu0 %v1460
  %2430 = vmatpush1.bf16.msra.mxu0 %v1459
  %2431 = vmatprep.subr.bf16.mxu0 %v1464
  %2432 = vmatpush1.bf16.msra.mxu0 %v1463
  %2433 = vmatprep.subr.bf16.mxu0 0
  %2434 = vmatpush1.bf16.msra.mxu0 0
  %2435 = vmatprep.subr.bf16.mxu0 0
  %2436 = vmatpush1.bf16.msra.mxu0 0
  %2437 = vmatprep.subr.bf16.mxu0 0
  %2438 = vmatpush1.bf16.msra.mxu0 0
  %2439 = vmatprep.subr.bf16.mxu0 0
  %2440 = vmatpush1.bf16.msra.mxu0 0
  %2441 = vmatprep.subr.bf16.mxu0 0
  %2442 = vmatpush1.bf16.msra.mxu0 0
  %2443 = vmatprep.subr.bf16.mxu0 0
  %2444 = vmatpush1.bf16.msra.mxu0 0
  %2445 = vmatprep.subr.bf16.mxu0 0
  %2446 = vmatpush1.bf16.msra.mxu0 0
  %2447 = vmatprep.subr.bf16.mxu0 0
  %2448 = vmatpush1.bf16.msra.mxu0 0
  %2449 = vmatprep.mubr.bf16.mxu0 0
  %2450 = vmatmul.mubr.bf16.gmra.mrb[0].mxu0 %v2416
  %v2451 = vpop.f32.mrb[0].mxu0
  %v2452 = vadd.f32 0.0, %v2451
  %v2453 = vpop.f32.mrb[0].mxu0
  %v2454 = vadd.f32 0.0, %v2453
  %v2455 = vpop.f32.mrb[0].mxu0
  %v2456 = vpop.f32.mrb[0].mxu0
  %2457 = vdwg.mxu0
  %2458 = vmatprep.subr.bf16.mxu0 %v1438
  %2459 = vmatpush1.bf16.msra.mxu0 %v1437
  %2460 = vmatprep.subr.bf16.mxu0 %v1442
  %2461 = vmatpush1.bf16.msra.mxu0 %v1441
  %2462 = vmatprep.subr.bf16.mxu0 %v1446
  %2463 = vmatpush1.bf16.msra.mxu0 %v1445
  %2464 = vmatprep.subr.bf16.mxu0 %v1450
  %2465 = vmatpush1.bf16.msra.mxu0 %v1449
  %2466 = vmatprep.subr.bf16.mxu0 %v1454
  %2467 = vmatpush1.bf16.msra.mxu0 %v1453
  %2468 = vmatprep.subr.bf16.mxu0 %v1458
  %2469 = vmatpush1.bf16.msra.mxu0 %v1457
  %2470 = vmatprep.subr.bf16.mxu0 %v1462
  %2471 = vmatpush1.bf16.msra.mxu0 %v1461
  %2472 = vmatprep.subr.bf16.mxu0 %v1466
  %2473 = vmatpush1.bf16.msra.mxu0 %v1465
  %2474 = vmatprep.subr.bf16.mxu0 0
  %2475 = vmatpush1.bf16.msra.mxu0 0
  %2476 = vmatprep.subr.bf16.mxu0 0
  %2477 = vmatpush1.bf16.msra.mxu0 0
  %2478 = vmatprep.subr.bf16.mxu0 0
  %2479 = vmatpush1.bf16.msra.mxu0 0
  %2480 = vmatprep.subr.bf16.mxu0 0
  %2481 = vmatpush1.bf16.msra.mxu0 0
  %2482 = vmatprep.subr.bf16.mxu0 0
  %2483 = vmatpush1.bf16.msra.mxu0 0
  %2484 = vmatprep.subr.bf16.mxu0 0
  %2485 = vmatpush1.bf16.msra.mxu0 0
  %2486 = vmatprep.subr.bf16.mxu0 0
  %2487 = vmatpush1.bf16.msra.mxu0 0
  %2488 = vmatprep.subr.bf16.mxu0 0
  %2489 = vmatpush1.bf16.msra.mxu0 0
  %2490 = vmatprep.mubr.bf16.mxu0 0
  %2491 = vmatmul.mubr.bf16.gmra.mrb[0].mxu0 %v2416
  %v2492 = vpop.f32.mrb[0].mxu0
  %v2493 = vadd.f32 0.0, %v2492
  %v2494 = vpop.f32.mrb[0].mxu0
  %v2495 = vadd.f32 0.0, %v2494
  %v2496 = vpop.f32.mrb[0].mxu0
  %v2497 = vpop.f32.mrb[0].mxu0
  %2498 = vdwg.mxu0
  %v2499 = vadd.f32 %v2412, %v2452
  %v2500 = vadd.f32 %v2413, %v2454
  %v2501 = vadd.f32 %v2414, %v2493
  %v2502 = vadd.f32 %v2415, %v2495
  %s2503 = scalar_lea.vmem [#allocation3], 128
  %v2504 = vld [vmem:[%s2503] sm:$0xff]
  %v2505 = vld [vmem:[%s2503 + $0x8] sm:$0xff]
  %v2506 = vld [vmem:[%s2503 + $0x10] sm:$0xff]
  %v2507 = vld [vmem:[%s2503 + $0x18] sm:$0xff]
  %v2508 = vpack.c.bf16 %v2409, %v2409
  %2509 = vmatprep.subr.bf16.mxu0 %v1687
  %2510 = vmatpush1.bf16.msra.mxu0 %v1686
  %2511 = vmatprep.subr.bf16.mxu0 %v1691
  %2512 = vmatpush1.bf16.msra.mxu0 %v1690
  %2513 = vmatprep.subr.bf16.mxu0 %v1695
  %2514 = vmatpush1.bf16.msra.mxu0 %v1694
  %2515 = vmatprep.subr.bf16.mxu0 %v1699
  %2516 = vmatpush1.bf16.msra.mxu0 %v1698
  %2517 = vmatprep.subr.bf16.mxu0 %v1703
  %2518 = vmatpush1.bf16.msra.mxu0 %v1702
  %2519 = vmatprep.subr.bf16.mxu0 %v1707
  %2520 = vmatpush1.bf16.msra.mxu0 %v1706
  %2521 = vmatprep.subr.bf16.mxu0 %v1711
  %2522 = vmatpush1.bf16.msra.mxu0 %v1710
  %2523 = vmatprep.subr.bf16.mxu0 %v1715
  %2524 = vmatpush1.bf16.msra.mxu0 %v1714
  %2525 = vmatprep.subr.bf16.mxu0 0
  %2526 = vmatpush1.bf16.msra.mxu0 0
  %2527 = vmatprep.subr.bf16.mxu0 0
  %2528 = vmatpush1.bf16.msra.mxu0 0
  %2529 = vmatprep.subr.bf16.mxu0 0
  %2530 = vmatpush1.bf16.msra.mxu0 0
  %2531 = vmatprep.subr.bf16.mxu0 0
  %2532 = vmatpush1.bf16.msra.mxu0 0
  %2533 = vmatprep.subr.bf16.mxu0 0
  %2534 = vmatpush1.bf16.msra.mxu0 0
  %2535 = vmatprep.subr.bf16.mxu0 0
  %2536 = vmatpush1.bf16.msra.mxu0 0
  %2537 = vmatprep.subr.bf16.mxu0 0
  %2538 = vmatpush1.bf16.msra.mxu0 0
  %2539 = vmatprep.subr.bf16.mxu0 0
  %2540 = vmatpush1.bf16.msra.mxu0 0
  %2541 = vmatprep.mubr.bf16.mxu0 0
  %2542 = vmatmul.mubr.bf16.gmra.mrb[0].mxu0 %v2508
  %v2543 = vpop.f32.mrb[0].mxu0
  %v2544 = vadd.f32 0.0, %v2543
  %v2545 = vpop.f32.mrb[0].mxu0
  %v2546 = vadd.f32 0.0, %v2545
  %v2547 = vpop.f32.mrb[0].mxu0
  %v2548 = vpop.f32.mrb[0].mxu0
  %2549 = vdwg.mxu0
  %2550 = vmatprep.subr.bf16.mxu0 %v1689
  %2551 = vmatpush1.bf16.msra.mxu0 %v1688
  %2552 = vmatprep.subr.bf16.mxu0 %v1693
  %2553 = vmatpush1.bf16.msra.mxu0 %v1692
  %2554 = vmatprep.subr.bf16.mxu0 %v1697
  %2555 = vmatpush1.bf16.msra.mxu0 %v1696
  %2556 = vmatprep.subr.bf16.mxu0 %v1701
  %2557 = vmatpush1.bf16.msra.mxu0 %v1700
  %2558 = vmatprep.subr.bf16.mxu0 %v1705
  %2559 = vmatpush1.bf16.msra.mxu0 %v1704
  %2560 = vmatprep.subr.bf16.mxu0 %v1709
  %2561 = vmatpush1.bf16.msra.mxu0 %v1708
  %2562 = vmatprep.subr.bf16.mxu0 %v1713
  %2563 = vmatpush1.bf16.msra.mxu0 %v1712
  %2564 = vmatprep.subr.bf16.mxu0 %v1717
  %2565 = vmatpush1.bf16.msra.mxu0 %v1716
  %2566 = vmatprep.subr.bf16.mxu0 0
  %2567 = vmatpush1.bf16.msra.mxu0 0
  %2568 = vmatprep.subr.bf16.mxu0 0
  %2569 = vmatpush1.bf16.msra.mxu0 0
  %2570 = vmatprep.subr.bf16.mxu0 0
  %2571 = vmatpush1.bf16.msra.mxu0 0
  %2572 = vmatprep.subr.bf16.mxu0 0
  %2573 = vmatpush1.bf16.msra.mxu0 0
  %2574 = vmatprep.subr.bf16.mxu0 0
  %2575 = vmatpush1.bf16.msra.mxu0 0
  %2576 = vmatprep.subr.bf16.mxu0 0
  %2577 = vmatpush1.bf16.msra.mxu0 0
  %2578 = vmatprep.subr.bf16.mxu0 0
  %2579 = vmatpush1.bf16.msra.mxu0 0
  %2580 = vmatprep.subr.bf16.mxu0 0
  %2581 = vmatpush1.bf16.msra.mxu0 0
  %2582 = vmatprep.mubr.bf16.mxu0 0
  %2583 = vmatmul.mubr.bf16.gmra.mrb[0].mxu0 %v2508
  %v2584 = vpop.f32.mrb[0].mxu0
  %v2585 = vadd.f32 0.0, %v2584
  %v2586 = vpop.f32.mrb[0].mxu0
  %v2587 = vadd.f32 0.0, %v2586
  %v2588 = vpop.f32.mrb[0].mxu0
  %v2589 = vpop.f32.mrb[0].mxu0
  %2590 = vdwg.mxu0
  %v2591 = vadd.f32 %v2504, %v2544
  %v2592 = vadd.f32 %v2505, %v2546
  %v2593 = vadd.f32 %v2506, %v2585
  %v2594 = vadd.f32 %v2507, %v2587
  %v2595 = vxor.u32 %v2499, 2147483648
  %v2596 = vmul.f32 %v2595, 1.442695
  %v2597 = vpow.pop %v2596
  %v2598 = vadd.f32 %v2597, 1.0
  %v2599 = vrcp.pop %v2598
  %v2600 = vmul.f32 1.0, %v2599
  %v2601 = vxor.u32 %v2500, 2147483648
  %v2602 = vmul.f32 %v2601, 1.442695
  %v2603 = vpow.pop %v2602
  %v2604 = vadd.f32 %v2603, 1.0
  %v2605 = vrcp.pop %v2604
  %v2606 = vmul.f32 1.0, %v2605
  %v2607 = vtanh.pop %v2501
  %v2608 = vxor.u32 %v2502, 2147483648
  %v2609 = vmul.f32 %v2608, 1.442695
  %v2610 = vpow.pop %v2609
  %v2611 = vadd.f32 %v2610, 1.0
  %v2612 = vrcp.pop %v2611
  %v2613 = vmul.f32 1.0, %v2612
  %v2614 = vmul.f32 %v2606, %v2408
  %v2615 = vmul.f32 %v2600, %v2607
  %v2616 = vadd.f32 %v2614, %v2615
  %v2617 = vtanh.pop %v2616
  %v2618 = vmul.f32 %v2613, %v2617
  %v2619 = vxor.u32 %v2591, 2147483648
  %v2620 = vmul.f32 %v2619, 1.442695
  %v2621 = vpow.pop %v2620
  %v2622 = vadd.f32 %v2621, 1.0
  %v2623 = vrcp.pop %v2622
  %v2624 = vmul.f32 1.0, %v2623
  %v2625 = vxor.u32 %v2592, 2147483648
  %v2626 = vmul.f32 %v2625, 1.442695
  %v2627 = vpow.pop %v2626
  %v2628 = vadd.f32 %v2627, 1.0
  %v2629 = vrcp.pop %v2628
  %v2630 = vmul.f32 1.0, %v2629
  %v2631 = vtanh.pop %v2593
  %v2632 = vxor.u32 %v2594, 2147483648
  %v2633 = vmul.f32 %v2632, 1.442695
  %v2634 = vpow.pop %v2633
  %v2635 = vadd.f32 %v2634, 1.0
  %v2636 = vrcp.pop %v2635
  %v2637 = vmul.f32 1.0, %v2636
  %v2638 = vmul.f32 %v2630, %v2410
  %v2639 = vmul.f32 %v2624, %v2631
  %v2640 = vadd.f32 %v2638, %v2639
  %v2641 = vtanh.pop %v2640
  %v2642 = vmul.f32 %v2637, %v2641
  %vm2643 = vcmp.gt.s32.totalorder %v56, 3
  %vm2644 = vcmp.gt.s32.totalorder %v56, 4
  %v2645 = vsel %vm2643, 1, 0
  %2646 = vset.pattern.permute.xlu0 0
  %2647 = vperm.xlu0 %2646, %v2645
  %v2648 = vpop.permute.xlu0 %2647
  %vm2649 = vcmp.eq.s32.totalorder %v2648, 1
  %v2650 = vsel %vm2649, %v2618, 0.0
  %s2651 = scalar_lea.vmem [#allocation4], 24
  %2652 = vst [vmem:[%s2651] sm:$0xff] %v2650
  %v2653 = vsel %vm2644, 1, 0
  %2654 = vset.pattern.permute.xlu0 0
  %2655 = vperm.xlu0 %2654, %v2653
  %v2656 = vpop.permute.xlu0 %2655
  %vm2657 = vcmp.eq.s32.totalorder %v2656, 1
  %v2658 = vsel %vm2657, %v2642, 0.0
  %s2659 = scalar_lea.vmem [#allocation5], 32
  %2660 = vst [vmem:[%s2659] sm:$0xff] %v2658
  %v2661 = vsel %vm2649, %v2618, %v2407
  %v2662 = vsel %vm2649, %v2616, %v2408
  %v2663 = vsel %vm2657, %v2642, %v2409
  %v2664 = vsel %vm2657, %v2640, %v2410
  %s2665 = scalar_lea.vmem [#allocation2], 128
  %v2666 = vld [vmem:[%s2665] sm:$0xff]
  %v2667 = vld [vmem:[%s2665 + $0x8] sm:$0xff]
  %v2668 = vld [vmem:[%s2665 + $0x10] sm:$0xff]
  %v2669 = vld [vmem:[%s2665 + $0x18] sm:$0xff]
  %v2670 = vpack.c.bf16 %v2661, %v2661
  %2671 = vmatprep.subr.bf16.mxu0 %v1436
  %2672 = vmatpush1.bf16.msra.mxu0 %v1435
  %2673 = vmatprep.subr.bf16.mxu0 %v1440
  %2674 = vmatpush1.bf16.msra.mxu0 %v1439
  %2675 = vmatprep.subr.bf16.mxu0 %v1444
  %2676 = vmatpush1.bf16.msra.mxu0 %v1443
  %2677 = vmatprep.subr.bf16.mxu0 %v1448
  %2678 = vmatpush1.bf16.msra.mxu0 %v1447
  %2679 = vmatprep.subr.bf16.mxu0 %v1452
  %2680 = vmatpush1.bf16.msra.mxu0 %v1451
  %2681 = vmatprep.subr.bf16.mxu0 %v1456
  %2682 = vmatpush1.bf16.msra.mxu0 %v1455
  %2683 = vmatprep.subr.bf16.mxu0 %v1460
  %2684 = vmatpush1.bf16.msra.mxu0 %v1459
  %2685 = vmatprep.subr.bf16.mxu0 %v1464
  %2686 = vmatpush1.bf16.msra.mxu0 %v1463
  %2687 = vmatprep.subr.bf16.mxu0 0
  %2688 = vmatpush1.bf16.msra.mxu0 0
  %2689 = vmatprep.subr.bf16.mxu0 0
  %2690 = vmatpush1.bf16.msra.mxu0 0
  %2691 = vmatprep.subr.bf16.mxu0 0
  %2692 = vmatpush1.bf16.msra.mxu0 0
  %2693 = vmatprep.subr.bf16.mxu0 0
  %2694 = vmatpush1.bf16.msra.mxu0 0
  %2695 = vmatprep.subr.bf16.mxu0 0
  %2696 = vmatpush1.bf16.msra.mxu0 0
  %2697 = vmatprep.subr.bf16.mxu0 0
  %2698 = vmatpush1.bf16.msra.mxu0 0
  %2699 = vmatprep.subr.bf16.mxu0 0
  %2700 = vmatpush1.bf16.msra.mxu0 0
  %2701 = vmatprep.subr.bf16.mxu0 0
  %2702 = vmatpush1.bf16.msra.mxu0 0
  %2703 = vmatprep.mubr.bf16.mxu0 0
  %2704 = vmatmul.mubr.bf16.gmra.mrb[0].mxu0 %v2670
  %v2705 = vpop.f32.mrb[0].mxu0
  %v2706 = vadd.f32 0.0, %v2705
  %v2707 = vpop.f32.mrb[0].mxu0
  %v2708 = vadd.f32 0.0, %v2707
  %v2709 = vpop.f32.mrb[0].mxu0
  %v2710 = vpop.f32.mrb[0].mxu0
  %2711 = vdwg.mxu0
  %2712 = vmatprep.subr.bf16.mxu0 %v1438
  %2713 = vmatpush1.bf16.msra.mxu0 %v1437
  %2714 = vmatprep.subr.bf16.mxu0 %v1442
  %2715 = vmatpush1.bf16.msra.mxu0 %v1441
  %2716 = vmatprep.subr.bf16.mxu0 %v1446
  %2717 = vmatpush1.bf16.msra.mxu0 %v1445
  %2718 = vmatprep.subr.bf16.mxu0 %v1450
  %2719 = vmatpush1.bf16.msra.mxu0 %v1449
  %2720 = vmatprep.subr.bf16.mxu0 %v1454
  %2721 = vmatpush1.bf16.msra.mxu0 %v1453
  %2722 = vmatprep.subr.bf16.mxu0 %v1458
  %2723 = vmatpush1.bf16.msra.mxu0 %v1457
  %2724 = vmatprep.subr.bf16.mxu0 %v1462
  %2725 = vmatpush1.bf16.msra.mxu0 %v1461
  %2726 = vmatprep.subr.bf16.mxu0 %v1466
  %2727 = vmatpush1.bf16.msra.mxu0 %v1465
  %2728 = vmatprep.subr.bf16.mxu0 0
  %2729 = vmatpush1.bf16.msra.mxu0 0
  %2730 = vmatprep.subr.bf16.mxu0 0
  %2731 = vmatpush1.bf16.msra.mxu0 0
  %2732 = vmatprep.subr.bf16.mxu0 0
  %2733 = vmatpush1.bf16.msra.mxu0 0
  %2734 = vmatprep.subr.bf16.mxu0 0
  %2735 = vmatpush1.bf16.msra.mxu0 0
  %2736 = vmatprep.subr.bf16.mxu0 0
  %2737 = vmatpush1.bf16.msra.mxu0 0
  %2738 = vmatprep.subr.bf16.mxu0 0
  %2739 = vmatpush1.bf16.msra.mxu0 0
  %2740 = vmatprep.subr.bf16.mxu0 0
  %2741 = vmatpush1.bf16.msra.mxu0 0
  %2742 = vmatprep.subr.bf16.mxu0 0
  %2743 = vmatpush1.bf16.msra.mxu0 0
  %2744 = vmatprep.mubr.bf16.mxu0 0
  %2745 = vmatmul.mubr.bf16.gmra.mrb[0].mxu0 %v2670
  %v2746 = vpop.f32.mrb[0].mxu0
  %v2747 = vadd.f32 0.0, %v2746
  %v2748 = vpop.f32.mrb[0].mxu0
  %v2749 = vadd.f32 0.0, %v2748
  %v2750 = vpop.f32.mrb[0].mxu0
  %v2751 = vpop.f32.mrb[0].mxu0
  %2752 = vdwg.mxu0
  %v2753 = vadd.f32 %v2666, %v2706
  %v2754 = vadd.f32 %v2667, %v2708
  %v2755 = vadd.f32 %v2668, %v2747
  %v2756 = vadd.f32 %v2669, %v2749
  %s2757 = scalar_lea.vmem [#allocation3], 96
  %v2758 = vld [vmem:[%s2757] sm:$0xff]
  %v2759 = vld [vmem:[%s2757 + $0x8] sm:$0xff]
  %v2760 = vld [vmem:[%s2757 + $0x10] sm:$0xff]
  %v2761 = vld [vmem:[%s2757 + $0x18] sm:$0xff]
  %v2762 = vpack.c.bf16 %v2663, %v2663
  %2763 = vmatprep.subr.bf16.mxu0 %v1687
  %2764 = vmatpush1.bf16.msra.mxu0 %v1686
  %2765 = vmatprep.subr.bf16.mxu0 %v1691
  %2766 = vmatpush1.bf16.msra.mxu0 %v1690
  %2767 = vmatprep.subr.bf16.mxu0 %v1695
  %2768 = vmatpush1.bf16.msra.mxu0 %v1694
  %2769 = vmatprep.subr.bf16.mxu0 %v1699
  %2770 = vmatpush1.bf16.msra.mxu0 %v1698
  %2771 = vmatprep.subr.bf16.mxu0 %v1703
  %2772 = vmatpush1.bf16.msra.mxu0 %v1702
  %2773 = vmatprep.subr.bf16.mxu0 %v1707
  %2774 = vmatpush1.bf16.msra.mxu0 %v1706
  %2775 = vmatprep.subr.bf16.mxu0 %v1711
  %2776 = vmatpush1.bf16.msra.mxu0 %v1710
  %2777 = vmatprep.subr.bf16.mxu0 %v1715
  %2778 = vmatpush1.bf16.msra.mxu0 %v1714
  %2779 = vmatprep.subr.bf16.mxu0 0
  %2780 = vmatpush1.bf16.msra.mxu0 0
  %2781 = vmatprep.subr.bf16.mxu0 0
  %2782 = vmatpush1.bf16.msra.mxu0 0
  %2783 = vmatprep.subr.bf16.mxu0 0
  %2784 = vmatpush1.bf16.msra.mxu0 0
  %2785 = vmatprep.subr.bf16.mxu0 0
  %2786 = vmatpush1.bf16.msra.mxu0 0
  %2787 = vmatprep.subr.bf16.mxu0 0
  %2788 = vmatpush1.bf16.msra.mxu0 0
  %2789 = vmatprep.subr.bf16.mxu0 0
  %2790 = vmatpush1.bf16.msra.mxu0 0
  %2791 = vmatprep.subr.bf16.mxu0 0
  %2792 = vmatpush1.bf16.msra.mxu0 0
  %2793 = vmatprep.subr.bf16.mxu0 0
  %2794 = vmatpush1.bf16.msra.mxu0 0
  %2795 = vmatprep.mubr.bf16.mxu0 0
  %2796 = vmatmul.mubr.bf16.gmra.mrb[0].mxu0 %v2762
  %v2797 = vpop.f32.mrb[0].mxu0
  %v2798 = vadd.f32 0.0, %v2797
  %v2799 = vpop.f32.mrb[0].mxu0
  %v2800 = vadd.f32 0.0, %v2799
  %v2801 = vpop.f32.mrb[0].mxu0
  %v2802 = vpop.f32.mrb[0].mxu0
  %2803 = vdwg.mxu0
  %2804 = vmatprep.subr.bf16.mxu0 %v1689
  %2805 = vmatpush1.bf16.msra.mxu0 %v1688
  %2806 = vmatprep.subr.bf16.mxu0 %v1693
  %2807 = vmatpush1.bf16.msra.mxu0 %v1692
  %2808 = vmatprep.subr.bf16.mxu0 %v1697
  %2809 = vmatpush1.bf16.msra.mxu0 %v1696
  %2810 = vmatprep.subr.bf16.mxu0 %v1701
  %2811 = vmatpush1.bf16.msra.mxu0 %v1700
  %2812 = vmatprep.subr.bf16.mxu0 %v1705
  %2813 = vmatpush1.bf16.msra.mxu0 %v1704
  %2814 = vmatprep.subr.bf16.mxu0 %v1709
  %2815 = vmatpush1.bf16.msra.mxu0 %v1708
  %2816 = vmatprep.subr.bf16.mxu0 %v1713
  %2817 = vmatpush1.bf16.msra.mxu0 %v1712
  %2818 = vmatprep.subr.bf16.mxu0 %v1717
  %2819 = vmatpush1.bf16.msra.mxu0 %v1716
  %2820 = vmatprep.subr.bf16.mxu0 0
  %2821 = vmatpush1.bf16.msra.mxu0 0
  %2822 = vmatprep.subr.bf16.mxu0 0
  %2823 = vmatpush1.bf16.msra.mxu0 0
  %2824 = vmatprep.subr.bf16.mxu0 0
  %2825 = vmatpush1.bf16.msra.mxu0 0
  %2826 = vmatprep.subr.bf16.mxu0 0
  %2827 = vmatpush1.bf16.msra.mxu0 0
  %2828 = vmatprep.subr.bf16.mxu0 0
  %2829 = vmatpush1.bf16.msra.mxu0 0
  %2830 = vmatprep.subr.bf16.mxu0 0
  %2831 = vmatpush1.bf16.msra.mxu0 0
  %2832 = vmatprep.subr.bf16.mxu0 0
  %2833 = vmatpush1.bf16.msra.mxu0 0
  %2834 = vmatprep.subr.bf16.mxu0 0
  %2835 = vmatpush1.bf16.msra.mxu0 0
  %2836 = vmatprep.mubr.bf16.mxu0 0
  %2837 = vmatmul.mubr.bf16.gmra.mrb[0].mxu0 %v2762
  %v2838 = vpop.f32.mrb[0].mxu0
  %v2839 = vadd.f32 0.0, %v2838
  %v2840 = vpop.f32.mrb[0].mxu0
  %v2841 = vadd.f32 0.0, %v2840
  %v2842 = vpop.f32.mrb[0].mxu0
  %v2843 = vpop.f32.mrb[0].mxu0
  %2844 = vdwg.mxu0
  %v2845 = vadd.f32 %v2758, %v2798
  %v2846 = vadd.f32 %v2759, %v2800
  %v2847 = vadd.f32 %v2760, %v2839
  %v2848 = vadd.f32 %v2761, %v2841
  %v2849 = vxor.u32 %v2753, 2147483648
  %v2850 = vmul.f32 %v2849, 1.442695
  %v2851 = vpow.pop %v2850
  %v2852 = vadd.f32 %v2851, 1.0
  %v2853 = vrcp.pop %v2852
  %v2854 = vmul.f32 1.0, %v2853
  %v2855 = vxor.u32 %v2754, 2147483648
  %v2856 = vmul.f32 %v2855, 1.442695
  %v2857 = vpow.pop %v2856
  %v2858 = vadd.f32 %v2857, 1.0
  %v2859 = vrcp.pop %v2858
  %v2860 = vmul.f32 1.0, %v2859
  %v2861 = vtanh.pop %v2755
  %v2862 = vxor.u32 %v2756, 2147483648
  %v2863 = vmul.f32 %v2862, 1.442695
  %v2864 = vpow.pop %v2863
  %v2865 = vadd.f32 %v2864, 1.0
  %v2866 = vrcp.pop %v2865
  %v2867 = vmul.f32 1.0, %v2866
  %v2868 = vmul.f32 %v2860, %v2662
  %v2869 = vmul.f32 %v2854, %v2861
  %v2870 = vadd.f32 %v2868, %v2869
  %v2871 = vtanh.pop %v2870
  %v2872 = vmul.f32 %v2867, %v2871
  %v2873 = vxor.u32 %v2845, 2147483648
  %v2874 = vmul.f32 %v2873, 1.442695
  %v2875 = vpow.pop %v2874
  %v2876 = vadd.f32 %v2875, 1.0
  %v2877 = vrcp.pop %v2876
  %v2878 = vmul.f32 1.0, %v2877
  %v2879 = vxor.u32 %v2846, 2147483648
  %v2880 = vmul.f32 %v2879, 1.442695
  %v2881 = vpow.pop %v2880
  %v2882 = vadd.f32 %v2881, 1.0
  %v2883 = vrcp.pop %v2882
  %v2884 = vmul.f32 1.0, %v2883
  %v2885 = vtanh.pop %v2847
  %v2886 = vxor.u32 %v2848, 2147483648
  %v2887 = vmul.f32 %v2886, 1.442695
  %v2888 = vpow.pop %v2887
  %v2889 = vadd.f32 %v2888, 1.0
  %v2890 = vrcp.pop %v2889
  %v2891 = vmul.f32 1.0, %v2890
  %v2892 = vmul.f32 %v2884, %v2664
  %v2893 = vmul.f32 %v2878, %v2885
  %v2894 = vadd.f32 %v2892, %v2893
  %v2895 = vtanh.pop %v2894
  %v2896 = vmul.f32 %v2891, %v2895
  %v2897 = vsel %vm2657, %v2872, 0.0
  %s2898 = scalar_lea.vmem [#allocation4], 32
  %2899 = vst [vmem:[%s2898] sm:$0xff] %v2897
  %v2900 = vsel %vm2649, %v2896, 0.0
  %s2901 = scalar_lea.vmem [#allocation5], 24
  %2902 = vst [vmem:[%s2901] sm:$0xff] %v2900
  %v2903 = vsel %vm2657, %v2872, %v2661
  %v2904 = vsel %vm2657, %v2870, %v2662
  %v2905 = vsel %vm2649, %v2896, %v2663
  %v2906 = vsel %vm2649, %v2894, %v2664
  %s2907 = scalar_lea.vmem [#allocation2], 160
  %v2908 = vld [vmem:[%s2907] sm:$0xff]
  %v2909 = vld [vmem:[%s2907 + $0x8] sm:$0xff]
  %v2910 = vld [vmem:[%s2907 + $0x10] sm:$0xff]
  %v2911 = vld [vmem:[%s2907 + $0x18] sm:$0xff]
  %v2912 = vpack.c.bf16 %v2903, %v2903
  %2913 = vmatprep.subr.bf16.mxu0 %v1436
  %2914 = vmatpush1.bf16.msra.mxu0 %v1435
  %2915 = vmatprep.subr.bf16.mxu0 %v1440
  %2916 = vmatpush1.bf16.msra.mxu0 %v1439
  %2917 = vmatprep.subr.bf16.mxu0 %v1444
  %2918 = vmatpush1.bf16.msra.mxu0 %v1443
  %2919 = vmatprep.subr.bf16.mxu0 %v1448
  %2920 = vmatpush1.bf16.msra.mxu0 %v1447
  %2921 = vmatprep.subr.bf16.mxu0 %v1452
  %2922 = vmatpush1.bf16.msra.mxu0 %v1451
  %2923 = vmatprep.subr.bf16.mxu0 %v1456
  %2924 = vmatpush1.bf16.msra.mxu0 %v1455
  %2925 = vmatprep.subr.bf16.mxu0 %v1460
  %2926 = vmatpush1.bf16.msra.mxu0 %v1459
  %2927 = vmatprep.subr.bf16.mxu0 %v1464
  %2928 = vmatpush1.bf16.msra.mxu0 %v1463
  %2929 = vmatprep.subr.bf16.mxu0 0
  %2930 = vmatpush1.bf16.msra.mxu0 0
  %2931 = vmatprep.subr.bf16.mxu0 0
  %2932 = vmatpush1.bf16.msra.mxu0 0
  %2933 = vmatprep.subr.bf16.mxu0 0
  %2934 = vmatpush1.bf16.msra.mxu0 0
  %2935 = vmatprep.subr.bf16.mxu0 0
  %2936 = vmatpush1.bf16.msra.mxu0 0
  %2937 = vmatprep.subr.bf16.mxu0 0
  %2938 = vmatpush1.bf16.msra.mxu0 0
  %2939 = vmatprep.subr.bf16.mxu0 0
  %2940 = vmatpush1.bf16.msra.mxu0 0
  %2941 = vmatprep.subr.bf16.mxu0 0
  %2942 = vmatpush1.bf16.msra.mxu0 0
  %2943 = vmatprep.subr.bf16.mxu0 0
  %2944 = vmatpush1.bf16.msra.mxu0 0
  %2945 = vmatprep.mubr.bf16.mxu0 0
  %2946 = vmatmul.mubr.bf16.gmra.mrb[0].mxu0 %v2912
  %v2947 = vpop.f32.mrb[0].mxu0
  %v2948 = vadd.f32 0.0, %v2947
  %v2949 = vpop.f32.mrb[0].mxu0
  %v2950 = vadd.f32 0.0, %v2949
  %v2951 = vpop.f32.mrb[0].mxu0
  %v2952 = vpop.f32.mrb[0].mxu0
  %2953 = vdwg.mxu0
  %2954 = vmatprep.subr.bf16.mxu0 %v1438
  %2955 = vmatpush1.bf16.msra.mxu0 %v1437
  %2956 = vmatprep.subr.bf16.mxu0 %v1442
  %2957 = vmatpush1.bf16.msra.mxu0 %v1441
  %2958 = vmatprep.subr.bf16.mxu0 %v1446
  %2959 = vmatpush1.bf16.msra.mxu0 %v1445
  %2960 = vmatprep.subr.bf16.mxu0 %v1450
  %2961 = vmatpush1.bf16.msra.mxu0 %v1449
  %2962 = vmatprep.subr.bf16.mxu0 %v1454
  %2963 = vmatpush1.bf16.msra.mxu0 %v1453
  %2964 = vmatprep.subr.bf16.mxu0 %v1458
  %2965 = vmatpush1.bf16.msra.mxu0 %v1457
  %2966 = vmatprep.subr.bf16.mxu0 %v1462
  %2967 = vmatpush1.bf16.msra.mxu0 %v1461
  %2968 = vmatprep.subr.bf16.mxu0 %v1466
  %2969 = vmatpush1.bf16.msra.mxu0 %v1465
  %2970 = vmatprep.subr.bf16.mxu0 0
  %2971 = vmatpush1.bf16.msra.mxu0 0
  %2972 = vmatprep.subr.bf16.mxu0 0
  %2973 = vmatpush1.bf16.msra.mxu0 0
  %2974 = vmatprep.subr.bf16.mxu0 0
  %2975 = vmatpush1.bf16.msra.mxu0 0
  %2976 = vmatprep.subr.bf16.mxu0 0
  %2977 = vmatpush1.bf16.msra.mxu0 0
  %2978 = vmatprep.subr.bf16.mxu0 0
  %2979 = vmatpush1.bf16.msra.mxu0 0
  %2980 = vmatprep.subr.bf16.mxu0 0
  %2981 = vmatpush1.bf16.msra.mxu0 0
  %2982 = vmatprep.subr.bf16.mxu0 0
  %2983 = vmatpush1.bf16.msra.mxu0 0
  %2984 = vmatprep.subr.bf16.mxu0 0
  %2985 = vmatpush1.bf16.msra.mxu0 0
  %2986 = vmatprep.mubr.bf16.mxu0 0
  %2987 = vmatmul.mubr.bf16.gmra.mrb[0].mxu0 %v2912
  %v2988 = vpop.f32.mrb[0].mxu0
  %v2989 = vadd.f32 0.0, %v2988
  %v2990 = vpop.f32.mrb[0].mxu0
  %v2991 = vadd.f32 0.0, %v2990
  %v2992 = vpop.f32.mrb[0].mxu0
  %v2993 = vpop.f32.mrb[0].mxu0
  %2994 = vdwg.mxu0
  %v2995 = vadd.f32 %v2908, %v2948
  %v2996 = vadd.f32 %v2909, %v2950
  %v2997 = vadd.f32 %v2910, %v2989
  %v2998 = vadd.f32 %v2911, %v2991
  %s2999 = scalar_lea.vmem [#allocation3], 64
  %v3000 = vld [vmem:[%s2999] sm:$0xff]
  %v3001 = vld [vmem:[%s2999 + $0x8] sm:$0xff]
  %v3002 = vld [vmem:[%s2999 + $0x10] sm:$0xff]
  %v3003 = vld [vmem:[%s2999 + $0x18] sm:$0xff]
  %v3004 = vpack.c.bf16 %v2905, %v2905
  %3005 = vmatprep.subr.bf16.mxu0 %v1687
  %3006 = vmatpush1.bf16.msra.mxu0 %v1686
  %3007 = vmatprep.subr.bf16.mxu0 %v1691
  %3008 = vmatpush1.bf16.msra.mxu0 %v1690
  %3009 = vmatprep.subr.bf16.mxu0 %v1695
  %3010 = vmatpush1.bf16.msra.mxu0 %v1694
  %3011 = vmatprep.subr.bf16.mxu0 %v1699
  %3012 = vmatpush1.bf16.msra.mxu0 %v1698
  %3013 = vmatprep.subr.bf16.mxu0 %v1703
  %3014 = vmatpush1.bf16.msra.mxu0 %v1702
  %3015 = vmatprep.subr.bf16.mxu0 %v1707
  %3016 = vmatpush1.bf16.msra.mxu0 %v1706
  %3017 = vmatprep.subr.bf16.mxu0 %v1711
  %3018 = vmatpush1.bf16.msra.mxu0 %v1710
  %3019 = vmatprep.subr.bf16.mxu0 %v1715
  %3020 = vmatpush1.bf16.msra.mxu0 %v1714
  %3021 = vmatprep.subr.bf16.mxu0 0
  %3022 = vmatpush1.bf16.msra.mxu0 0
  %3023 = vmatprep.subr.bf16.mxu0 0
  %3024 = vmatpush1.bf16.msra.mxu0 0
  %3025 = vmatprep.subr.bf16.mxu0 0
  %3026 = vmatpush1.bf16.msra.mxu0 0
  %3027 = vmatprep.subr.bf16.mxu0 0
  %3028 = vmatpush1.bf16.msra.mxu0 0
  %3029 = vmatprep.subr.bf16.mxu0 0
  %3030 = vmatpush1.bf16.msra.mxu0 0
  %3031 = vmatprep.subr.bf16.mxu0 0
  %3032 = vmatpush1.bf16.msra.mxu0 0
  %3033 = vmatprep.subr.bf16.mxu0 0
  %3034 = vmatpush1.bf16.msra.mxu0 0
  %3035 = vmatprep.subr.bf16.mxu0 0
  %3036 = vmatpush1.bf16.msra.mxu0 0
  %3037 = vmatprep.mubr.bf16.mxu0 0
  %3038 = vmatmul.mubr.bf16.gmra.mrb[0].mxu0 %v3004
  %v3039 = vpop.f32.mrb[0].mxu0
  %v3040 = vadd.f32 0.0, %v3039
  %v3041 = vpop.f32.mrb[0].mxu0
  %v3042 = vadd.f32 0.0, %v3041
  %v3043 = vpop.f32.mrb[0].mxu0
  %v3044 = vpop.f32.mrb[0].mxu0
  %3045 = vdwg.mxu0
  %3046 = vmatprep.subr.bf16.mxu0 %v1689
  %3047 = vmatpush1.bf16.msra.mxu0 %v1688
  %3048 = vmatprep.subr.bf16.mxu0 %v1693
  %3049 = vmatpush1.bf16.msra.mxu0 %v1692
  %3050 = vmatprep.subr.bf16.mxu0 %v1697
  %3051 = vmatpush1.bf16.msra.mxu0 %v1696
  %3052 = vmatprep.subr.bf16.mxu0 %v1701
  %3053 = vmatpush1.bf16.msra.mxu0 %v1700
  %3054 = vmatprep.subr.bf16.mxu0 %v1705
  %3055 = vmatpush1.bf16.msra.mxu0 %v1704
  %3056 = vmatprep.subr.bf16.mxu0 %v1709
  %3057 = vmatpush1.bf16.msra.mxu0 %v1708
  %3058 = vmatprep.subr.bf16.mxu0 %v1713
  %3059 = vmatpush1.bf16.msra.mxu0 %v1712
  %3060 = vmatprep.subr.bf16.mxu0 %v1717
  %3061 = vmatpush1.bf16.msra.mxu0 %v1716
  %3062 = vmatprep.subr.bf16.mxu0 0
  %3063 = vmatpush1.bf16.msra.mxu0 0
  %3064 = vmatprep.subr.bf16.mxu0 0
  %3065 = vmatpush1.bf16.msra.mxu0 0
  %3066 = vmatprep.subr.bf16.mxu0 0
  %3067 = vmatpush1.bf16.msra.mxu0 0
  %3068 = vmatprep.subr.bf16.mxu0 0
  %3069 = vmatpush1.bf16.msra.mxu0 0
  %3070 = vmatprep.subr.bf16.mxu0 0
  %3071 = vmatpush1.bf16.msra.mxu0 0
  %3072 = vmatprep.subr.bf16.mxu0 0
  %3073 = vmatpush1.bf16.msra.mxu0 0
  %3074 = vmatprep.subr.bf16.mxu0 0
  %3075 = vmatpush1.bf16.msra.mxu0 0
  %3076 = vmatprep.subr.bf16.mxu0 0
  %3077 = vmatpush1.bf16.msra.mxu0 0
  %3078 = vmatprep.mubr.bf16.mxu0 0
  %3079 = vmatmul.mubr.bf16.gmra.mrb[0].mxu0 %v3004
  %v3080 = vpop.f32.mrb[0].mxu0
  %v3081 = vadd.f32 0.0, %v3080
  %v3082 = vpop.f32.mrb[0].mxu0
  %v3083 = vadd.f32 0.0, %v3082
  %v3084 = vpop.f32.mrb[0].mxu0
  %v3085 = vpop.f32.mrb[0].mxu0
  %3086 = vdwg.mxu0
  %v3087 = vadd.f32 %v3000, %v3040
  %v3088 = vadd.f32 %v3001, %v3042
  %v3089 = vadd.f32 %v3002, %v3081
  %v3090 = vadd.f32 %v3003, %v3083
  %v3091 = vxor.u32 %v2995, 2147483648
  %v3092 = vmul.f32 %v3091, 1.442695
  %v3093 = vpow.pop %v3092
  %v3094 = vadd.f32 %v3093, 1.0
  %v3095 = vrcp.pop %v3094
  %v3096 = vmul.f32 1.0, %v3095
  %v3097 = vxor.u32 %v2996, 2147483648
  %v3098 = vmul.f32 %v3097, 1.442695
  %v3099 = vpow.pop %v3098
  %v3100 = vadd.f32 %v3099, 1.0
  %v3101 = vrcp.pop %v3100
  %v3102 = vmul.f32 1.0, %v3101
  %v3103 = vtanh.pop %v2997
  %v3104 = vxor.u32 %v2998, 2147483648
  %v3105 = vmul.f32 %v3104, 1.442695
  %v3106 = vpow.pop %v3105
  %v3107 = vadd.f32 %v3106, 1.0
  %v3108 = vrcp.pop %v3107
  %v3109 = vmul.f32 1.0, %v3108
  %v3110 = vmul.f32 %v3102, %v2904
  %v3111 = vmul.f32 %v3096, %v3103
  %v3112 = vadd.f32 %v3110, %v3111
  %v3113 = vtanh.pop %v3112
  %v3114 = vmul.f32 %v3109, %v3113
  %v3115 = vxor.u32 %v3087, 2147483648
  %v3116 = vmul.f32 %v3115, 1.442695
  %v3117 = vpow.pop %v3116
  %v3118 = vadd.f32 %v3117, 1.0
  %v3119 = vrcp.pop %v3118
  %v3120 = vmul.f32 1.0, %v3119
  %v3121 = vxor.u32 %v3088, 2147483648
  %v3122 = vmul.f32 %v3121, 1.442695
  %v3123 = vpow.pop %v3122
  %v3124 = vadd.f32 %v3123, 1.0
  %v3125 = vrcp.pop %v3124
  %v3126 = vmul.f32 1.0, %v3125
  %v3127 = vtanh.pop %v3089
  %v3128 = vxor.u32 %v3090, 2147483648
  %v3129 = vmul.f32 %v3128, 1.442695
  %v3130 = vpow.pop %v3129
  %v3131 = vadd.f32 %v3130, 1.0
  %v3132 = vrcp.pop %v3131
  %v3133 = vmul.f32 1.0, %v3132
  %v3134 = vmul.f32 %v3126, %v2906
  %v3135 = vmul.f32 %v3120, %v3127
  %v3136 = vadd.f32 %v3134, %v3135
  %v3137 = vtanh.pop %v3136
  %v3138 = vmul.f32 %v3133, %v3137
  %v3139 = vsel %vm2403, %v3114, 0.0
  %s3140 = scalar_lea.vmem [#allocation4], 40
  %3141 = vst [vmem:[%s3140] sm:$0xff] %v3139
  %v3142 = vsel %vm2395, %v3138, 0.0
  %s3143 = scalar_lea.vmem [#allocation5], 16
  %3144 = vst [vmem:[%s3143] sm:$0xff] %v3142
  %v3145 = vsel %vm2403, %v3114, %v2903
  %v3146 = vsel %vm2403, %v3112, %v2904
  %v3147 = vsel %vm2395, %v3138, %v2905
  %v3148 = vsel %vm2395, %v3136, %v2906
  %s3149 = scalar_lea.vmem [#allocation2], 192
  %v3150 = vld [vmem:[%s3149] sm:$0xff]
  %v3151 = vld [vmem:[%s3149 + $0x8] sm:$0xff]
  %v3152 = vld [vmem:[%s3149 + $0x10] sm:$0xff]
  %v3153 = vld [vmem:[%s3149 + $0x18] sm:$0xff]
  %v3154 = vpack.c.bf16 %v3145, %v3145
  %3155 = vmatprep.subr.bf16.mxu0 %v1436
  %3156 = vmatpush1.bf16.msra.mxu0 %v1435
  %3157 = vmatprep.subr.bf16.mxu0 %v1440
  %3158 = vmatpush1.bf16.msra.mxu0 %v1439
  %3159 = vmatprep.subr.bf16.mxu0 %v1444
  %3160 = vmatpush1.bf16.msra.mxu0 %v1443
  %3161 = vmatprep.subr.bf16.mxu0 %v1448
  %3162 = vmatpush1.bf16.msra.mxu0 %v1447
  %3163 = vmatprep.subr.bf16.mxu0 %v1452
  %3164 = vmatpush1.bf16.msra.mxu0 %v1451
  %3165 = vmatprep.subr.bf16.mxu0 %v1456
  %3166 = vmatpush1.bf16.msra.mxu0 %v1455
  %3167 = vmatprep.subr.bf16.mxu0 %v1460
  %3168 = vmatpush1.bf16.msra.mxu0 %v1459
  %3169 = vmatprep.subr.bf16.mxu0 %v1464
  %3170 = vmatpush1.bf16.msra.mxu0 %v1463
  %3171 = vmatprep.subr.bf16.mxu0 0
  %3172 = vmatpush1.bf16.msra.mxu0 0
  %3173 = vmatprep.subr.bf16.mxu0 0
  %3174 = vmatpush1.bf16.msra.mxu0 0
  %3175 = vmatprep.subr.bf16.mxu0 0
  %3176 = vmatpush1.bf16.msra.mxu0 0
  %3177 = vmatprep.subr.bf16.mxu0 0
  %3178 = vmatpush1.bf16.msra.mxu0 0
  %3179 = vmatprep.subr.bf16.mxu0 0
  %3180 = vmatpush1.bf16.msra.mxu0 0
  %3181 = vmatprep.subr.bf16.mxu0 0
  %3182 = vmatpush1.bf16.msra.mxu0 0
  %3183 = vmatprep.subr.bf16.mxu0 0
  %3184 = vmatpush1.bf16.msra.mxu0 0
  %3185 = vmatprep.subr.bf16.mxu0 0
  %3186 = vmatpush1.bf16.msra.mxu0 0
  %3187 = vmatprep.mubr.bf16.mxu0 0
  %3188 = vmatmul.mubr.bf16.gmra.mrb[0].mxu0 %v3154
  %v3189 = vpop.f32.mrb[0].mxu0
  %v3190 = vadd.f32 0.0, %v3189
  %v3191 = vpop.f32.mrb[0].mxu0
  %v3192 = vadd.f32 0.0, %v3191
  %v3193 = vpop.f32.mrb[0].mxu0
  %v3194 = vpop.f32.mrb[0].mxu0
  %3195 = vdwg.mxu0
  %3196 = vmatprep.subr.bf16.mxu0 %v1438
  %3197 = vmatpush1.bf16.msra.mxu0 %v1437
  %3198 = vmatprep.subr.bf16.mxu0 %v1442
  %3199 = vmatpush1.bf16.msra.mxu0 %v1441
  %3200 = vmatprep.subr.bf16.mxu0 %v1446
  %3201 = vmatpush1.bf16.msra.mxu0 %v1445
  %3202 = vmatprep.subr.bf16.mxu0 %v1450
  %3203 = vmatpush1.bf16.msra.mxu0 %v1449
  %3204 = vmatprep.subr.bf16.mxu0 %v1454
  %3205 = vmatpush1.bf16.msra.mxu0 %v1453
  %3206 = vmatprep.subr.bf16.mxu0 %v1458
  %3207 = vmatpush1.bf16.msra.mxu0 %v1457
  %3208 = vmatprep.subr.bf16.mxu0 %v1462
  %3209 = vmatpush1.bf16.msra.mxu0 %v1461
  %3210 = vmatprep.subr.bf16.mxu0 %v1466
  %3211 = vmatpush1.bf16.msra.mxu0 %v1465
  %3212 = vmatprep.subr.bf16.mxu0 0
  %3213 = vmatpush1.bf16.msra.mxu0 0
  %3214 = vmatprep.subr.bf16.mxu0 0
  %3215 = vmatpush1.bf16.msra.mxu0 0
  %3216 = vmatprep.subr.bf16.mxu0 0
  %3217 = vmatpush1.bf16.msra.mxu0 0
  %3218 = vmatprep.subr.bf16.mxu0 0
  %3219 = vmatpush1.bf16.msra.mxu0 0
  %3220 = vmatprep.subr.bf16.mxu0 0
  %3221 = vmatpush1.bf16.msra.mxu0 0
  %3222 = vmatprep.subr.bf16.mxu0 0
  %3223 = vmatpush1.bf16.msra.mxu0 0
  %3224 = vmatprep.subr.bf16.mxu0 0
  %3225 = vmatpush1.bf16.msra.mxu0 0
  %3226 = vmatprep.subr.bf16.mxu0 0
  %3227 = vmatpush1.bf16.msra.mxu0 0
  %3228 = vmatprep.mubr.bf16.mxu0 0
  %3229 = vmatmul.mubr.bf16.gmra.mrb[0].mxu0 %v3154
  %v3230 = vpop.f32.mrb[0].mxu0
  %v3231 = vadd.f32 0.0, %v3230
  %v3232 = vpop.f32.mrb[0].mxu0
  %v3233 = vadd.f32 0.0, %v3232
  %v3234 = vpop.f32.mrb[0].mxu0
  %v3235 = vpop.f32.mrb[0].mxu0
  %3236 = vdwg.mxu0
  %v3237 = vadd.f32 %v3150, %v3190
  %v3238 = vadd.f32 %v3151, %v3192
  %v3239 = vadd.f32 %v3152, %v3231
  %v3240 = vadd.f32 %v3153, %v3233
  %s3241 = scalar_lea.vmem [#allocation3], 32
  %v3242 = vld [vmem:[%s3241] sm:$0xff]
  %v3243 = vld [vmem:[%s3241 + $0x8] sm:$0xff]
  %v3244 = vld [vmem:[%s3241 + $0x10] sm:$0xff]
  %v3245 = vld [vmem:[%s3241 + $0x18] sm:$0xff]
  %v3246 = vpack.c.bf16 %v3147, %v3147
  %3247 = vmatprep.subr.bf16.mxu0 %v1687
  %3248 = vmatpush1.bf16.msra.mxu0 %v1686
  %3249 = vmatprep.subr.bf16.mxu0 %v1691
  %3250 = vmatpush1.bf16.msra.mxu0 %v1690
  %3251 = vmatprep.subr.bf16.mxu0 %v1695
  %3252 = vmatpush1.bf16.msra.mxu0 %v1694
  %3253 = vmatprep.subr.bf16.mxu0 %v1699
  %3254 = vmatpush1.bf16.msra.mxu0 %v1698
  %3255 = vmatprep.subr.bf16.mxu0 %v1703
  %3256 = vmatpush1.bf16.msra.mxu0 %v1702
  %3257 = vmatprep.subr.bf16.mxu0 %v1707
  %3258 = vmatpush1.bf16.msra.mxu0 %v1706
  %3259 = vmatprep.subr.bf16.mxu0 %v1711
  %3260 = vmatpush1.bf16.msra.mxu0 %v1710
  %3261 = vmatprep.subr.bf16.mxu0 %v1715
  %3262 = vmatpush1.bf16.msra.mxu0 %v1714
  %3263 = vmatprep.subr.bf16.mxu0 0
  %3264 = vmatpush1.bf16.msra.mxu0 0
  %3265 = vmatprep.subr.bf16.mxu0 0
  %3266 = vmatpush1.bf16.msra.mxu0 0
  %3267 = vmatprep.subr.bf16.mxu0 0
  %3268 = vmatpush1.bf16.msra.mxu0 0
  %3269 = vmatprep.subr.bf16.mxu0 0
  %3270 = vmatpush1.bf16.msra.mxu0 0
  %3271 = vmatprep.subr.bf16.mxu0 0
  %3272 = vmatpush1.bf16.msra.mxu0 0
  %3273 = vmatprep.subr.bf16.mxu0 0
  %3274 = vmatpush1.bf16.msra.mxu0 0
  %3275 = vmatprep.subr.bf16.mxu0 0
  %3276 = vmatpush1.bf16.msra.mxu0 0
  %3277 = vmatprep.subr.bf16.mxu0 0
  %3278 = vmatpush1.bf16.msra.mxu0 0
  %3279 = vmatprep.mubr.bf16.mxu0 0
  %3280 = vmatmul.mubr.bf16.gmra.mrb[0].mxu0 %v3246
  %v3281 = vpop.f32.mrb[0].mxu0
  %v3282 = vadd.f32 0.0, %v3281
  %v3283 = vpop.f32.mrb[0].mxu0
  %v3284 = vadd.f32 0.0, %v3283
  %v3285 = vpop.f32.mrb[0].mxu0
  %v3286 = vpop.f32.mrb[0].mxu0
  %3287 = vdwg.mxu0
  %3288 = vmatprep.subr.bf16.mxu0 %v1689
  %3289 = vmatpush1.bf16.msra.mxu0 %v1688
  %3290 = vmatprep.subr.bf16.mxu0 %v1693
  %3291 = vmatpush1.bf16.msra.mxu0 %v1692
  %3292 = vmatprep.subr.bf16.mxu0 %v1697
  %3293 = vmatpush1.bf16.msra.mxu0 %v1696
  %3294 = vmatprep.subr.bf16.mxu0 %v1701
  %3295 = vmatpush1.bf16.msra.mxu0 %v1700
  %3296 = vmatprep.subr.bf16.mxu0 %v1705
  %3297 = vmatpush1.bf16.msra.mxu0 %v1704
  %3298 = vmatprep.subr.bf16.mxu0 %v1709
  %3299 = vmatpush1.bf16.msra.mxu0 %v1708
  %3300 = vmatprep.subr.bf16.mxu0 %v1713
  %3301 = vmatpush1.bf16.msra.mxu0 %v1712
  %3302 = vmatprep.subr.bf16.mxu0 %v1717
  %3303 = vmatpush1.bf16.msra.mxu0 %v1716
  %3304 = vmatprep.subr.bf16.mxu0 0
  %3305 = vmatpush1.bf16.msra.mxu0 0
  %3306 = vmatprep.subr.bf16.mxu0 0
  %3307 = vmatpush1.bf16.msra.mxu0 0
  %3308 = vmatprep.subr.bf16.mxu0 0
  %3309 = vmatpush1.bf16.msra.mxu0 0
  %3310 = vmatprep.subr.bf16.mxu0 0
  %3311 = vmatpush1.bf16.msra.mxu0 0
  %3312 = vmatprep.subr.bf16.mxu0 0
  %3313 = vmatpush1.bf16.msra.mxu0 0
  %3314 = vmatprep.subr.bf16.mxu0 0
  %3315 = vmatpush1.bf16.msra.mxu0 0
  %3316 = vmatprep.subr.bf16.mxu0 0
  %3317 = vmatpush1.bf16.msra.mxu0 0
  %3318 = vmatprep.subr.bf16.mxu0 0
  %3319 = vmatpush1.bf16.msra.mxu0 0
  %3320 = vmatprep.mubr.bf16.mxu0 0
  %3321 = vmatmul.mubr.bf16.gmra.mrb[0].mxu0 %v3246
  %v3322 = vpop.f32.mrb[0].mxu0
  %v3323 = vadd.f32 0.0, %v3322
  %v3324 = vpop.f32.mrb[0].mxu0
  %v3325 = vadd.f32 0.0, %v3324
  %v3326 = vpop.f32.mrb[0].mxu0
  %v3327 = vpop.f32.mrb[0].mxu0
  %3328 = vdwg.mxu0
  %v3329 = vadd.f32 %v3242, %v3282
  %v3330 = vadd.f32 %v3243, %v3284
  %v3331 = vadd.f32 %v3244, %v3323
  %v3332 = vadd.f32 %v3245, %v3325
  %v3333 = vxor.u32 %v3237, 2147483648
  %v3334 = vmul.f32 %v3333, 1.442695
  %v3335 = vpow.pop %v3334
  %v3336 = vadd.f32 %v3335, 1.0
  %v3337 = vrcp.pop %v3336
  %v3338 = vmul.f32 1.0, %v3337
  %v3339 = vxor.u32 %v3238, 2147483648
  %v3340 = vmul.f32 %v3339, 1.442695
  %v3341 = vpow.pop %v3340
  %v3342 = vadd.f32 %v3341, 1.0
  %v3343 = vrcp.pop %v3342
  %v3344 = vmul.f32 1.0, %v3343
  %v3345 = vtanh.pop %v3239
  %v3346 = vxor.u32 %v3240, 2147483648
  %v3347 = vmul.f32 %v3346, 1.442695
  %v3348 = vpow.pop %v3347
  %v3349 = vadd.f32 %v3348, 1.0
  %v3350 = vrcp.pop %v3349
  %v3351 = vmul.f32 1.0, %v3350
  %v3352 = vmul.f32 %v3344, %v3146
  %v3353 = vmul.f32 %v3338, %v3345
  %v3354 = vadd.f32 %v3352, %v3353
  %v3355 = vtanh.pop %v3354
  %v3356 = vmul.f32 %v3351, %v3355
  %v3357 = vxor.u32 %v3329, 2147483648
  %v3358 = vmul.f32 %v3357, 1.442695
  %v3359 = vpow.pop %v3358
  %v3360 = vadd.f32 %v3359, 1.0
  %v3361 = vrcp.pop %v3360
  %v3362 = vmul.f32 1.0, %v3361
  %v3363 = vxor.u32 %v3330, 2147483648
  %v3364 = vmul.f32 %v3363, 1.442695
  %v3365 = vpow.pop %v3364
  %v3366 = vadd.f32 %v3365, 1.0
  %v3367 = vrcp.pop %v3366
  %v3368 = vmul.f32 1.0, %v3367
  %v3369 = vtanh.pop %v3331
  %v3370 = vxor.u32 %v3332, 2147483648
  %v3371 = vmul.f32 %v3370, 1.442695
  %v3372 = vpow.pop %v3371
  %v3373 = vadd.f32 %v3372, 1.0
  %v3374 = vrcp.pop %v3373
  %v3375 = vmul.f32 1.0, %v3374
  %v3376 = vmul.f32 %v3368, %v3148
  %v3377 = vmul.f32 %v3362, %v3369
  %v3378 = vadd.f32 %v3376, %v3377
  %v3379 = vtanh.pop %v3378
  %v3380 = vmul.f32 %v3375, %v3379
  %v3381 = vsel %vm2149, %v3356, 0.0
  %s3382 = scalar_lea.vmem [#allocation4], 48
  %3383 = vst [vmem:[%s3382] sm:$0xff] %v3381
  %v3384 = vsel %vm2141, %v3380, 0.0
  %s3385 = scalar_lea.vmem [#allocation5], 8
  %3386 = vst [vmem:[%s3385] sm:$0xff] %v3384
  %v3387 = vsel %vm2149, %v3356, %v3145
  %v3388 = vsel %vm2149, %v3354, %v3146
  %v3389 = vsel %vm2141, %v3380, %v3147
  %v3390 = vsel %vm2141, %v3378, %v3148
  %s3391 = scalar_lea.vmem [#allocation2], 224
  %v3392 = vld [vmem:[%s3391] sm:$0xff]
  %v3393 = vld [vmem:[%s3391 + $0x8] sm:$0xff]
  %v3394 = vld [vmem:[%s3391 + $0x10] sm:$0xff]
  %v3395 = vld [vmem:[%s3391 + $0x18] sm:$0xff]
  %v3396 = vpack.c.bf16 %v3387, %v3387
  %3397 = vmatprep.subr.bf16.mxu0 %v1436
  %3398 = vmatpush1.bf16.msra.mxu0 %v1435
  %3399 = vmatprep.subr.bf16.mxu0 %v1440
  %3400 = vmatpush1.bf16.msra.mxu0 %v1439
  %3401 = vmatprep.subr.bf16.mxu0 %v1444
  %3402 = vmatpush1.bf16.msra.mxu0 %v1443
  %3403 = vmatprep.subr.bf16.mxu0 %v1448
  %3404 = vmatpush1.bf16.msra.mxu0 %v1447
  %3405 = vmatprep.subr.bf16.mxu0 %v1452
  %3406 = vmatpush1.bf16.msra.mxu0 %v1451
  %3407 = vmatprep.subr.bf16.mxu0 %v1456
  %3408 = vmatpush1.bf16.msra.mxu0 %v1455
  %3409 = vmatprep.subr.bf16.mxu0 %v1460
  %3410 = vmatpush1.bf16.msra.mxu0 %v1459
  %3411 = vmatprep.subr.bf16.mxu0 %v1464
  %3412 = vmatpush1.bf16.msra.mxu0 %v1463
  %3413 = vmatprep.subr.bf16.mxu0 0
  %3414 = vmatpush1.bf16.msra.mxu0 0
  %3415 = vmatprep.subr.bf16.mxu0 0
  %3416 = vmatpush1.bf16.msra.mxu0 0
  %3417 = vmatprep.subr.bf16.mxu0 0
  %3418 = vmatpush1.bf16.msra.mxu0 0
  %3419 = vmatprep.subr.bf16.mxu0 0
  %3420 = vmatpush1.bf16.msra.mxu0 0
  %3421 = vmatprep.subr.bf16.mxu0 0
  %3422 = vmatpush1.bf16.msra.mxu0 0
  %3423 = vmatprep.subr.bf16.mxu0 0
  %3424 = vmatpush1.bf16.msra.mxu0 0
  %3425 = vmatprep.subr.bf16.mxu0 0
  %3426 = vmatpush1.bf16.msra.mxu0 0
  %3427 = vmatprep.subr.bf16.mxu0 0
  %3428 = vmatpush1.bf16.msra.mxu0 0
  %3429 = vmatprep.mubr.bf16.mxu0 0
  %3430 = vmatmul.mubr.bf16.gmra.mrb[0].mxu0 %v3396
  %v3431 = vpop.f32.mrb[0].mxu0
  %v3432 = vadd.f32 0.0, %v3431
  %v3433 = vpop.f32.mrb[0].mxu0
  %v3434 = vadd.f32 0.0, %v3433
  %v3435 = vpop.f32.mrb[0].mxu0
  %v3436 = vpop.f32.mrb[0].mxu0
  %3437 = vdwg.mxu0
  %3438 = vmatprep.subr.bf16.mxu0 %v1438
  %3439 = vmatpush1.bf16.msra.mxu0 %v1437
  %3440 = vmatprep.subr.bf16.mxu0 %v1442
  %3441 = vmatpush1.bf16.msra.mxu0 %v1441
  %3442 = vmatprep.subr.bf16.mxu0 %v1446
  %3443 = vmatpush1.bf16.msra.mxu0 %v1445
  %3444 = vmatprep.subr.bf16.mxu0 %v1450
  %3445 = vmatpush1.bf16.msra.mxu0 %v1449
  %3446 = vmatprep.subr.bf16.mxu0 %v1454
  %3447 = vmatpush1.bf16.msra.mxu0 %v1453
  %3448 = vmatprep.subr.bf16.mxu0 %v1458
  %3449 = vmatpush1.bf16.msra.mxu0 %v1457
  %3450 = vmatprep.subr.bf16.mxu0 %v1462
  %3451 = vmatpush1.bf16.msra.mxu0 %v1461
  %3452 = vmatprep.subr.bf16.mxu0 %v1466
  %3453 = vmatpush1.bf16.msra.mxu0 %v1465
  %3454 = vmatprep.subr.bf16.mxu0 0
  %3455 = vmatpush1.bf16.msra.mxu0 0
  %3456 = vmatprep.subr.bf16.mxu0 0
  %3457 = vmatpush1.bf16.msra.mxu0 0
  %3458 = vmatprep.subr.bf16.mxu0 0
  %3459 = vmatpush1.bf16.msra.mxu0 0
  %3460 = vmatprep.subr.bf16.mxu0 0
  %3461 = vmatpush1.bf16.msra.mxu0 0
  %3462 = vmatprep.subr.bf16.mxu0 0
  %3463 = vmatpush1.bf16.msra.mxu0 0
  %3464 = vmatprep.subr.bf16.mxu0 0
  %3465 = vmatpush1.bf16.msra.mxu0 0
  %3466 = vmatprep.subr.bf16.mxu0 0
  %3467 = vmatpush1.bf16.msra.mxu0 0
  %3468 = vmatprep.subr.bf16.mxu0 0
  %3469 = vmatpush1.bf16.msra.mxu0 0
  %3470 = vmatprep.mubr.bf16.mxu0 0
  %3471 = vmatmul.mubr.bf16.gmra.mrb[0].mxu0 %v3396
  %v3472 = vpop.f32.mrb[0].mxu0
  %v3473 = vadd.f32 0.0, %v3472
  %v3474 = vpop.f32.mrb[0].mxu0
  %v3475 = vadd.f32 0.0, %v3474
  %v3476 = vpop.f32.mrb[0].mxu0
  %v3477 = vpop.f32.mrb[0].mxu0
  %3478 = vdwg.mxu0
  %v3479 = vadd.f32 %v3392, %v3432
  %v3480 = vadd.f32 %v3393, %v3434
  %v3481 = vadd.f32 %v3394, %v3473
  %v3482 = vadd.f32 %v3395, %v3475
  %v3483 = vld [vmem:[#allocation3] sm:$0xff]
  %v3484 = vld [vmem:[#allocation3 + $0x8] sm:$0xff]
  %v3485 = vld [vmem:[#allocation3 + $0x10] sm:$0xff]
  %v3486 = vld [vmem:[#allocation3 + $0x18] sm:$0xff]
  %v3487 = vpack.c.bf16 %v3389, %v3389
  %3488 = vmatprep.subr.bf16.mxu0 %v1687
  %3489 = vmatpush1.bf16.msra.mxu0 %v1686
  %3490 = vmatprep.subr.bf16.mxu0 %v1691
  %3491 = vmatpush1.bf16.msra.mxu0 %v1690
  %3492 = vmatprep.subr.bf16.mxu0 %v1695
  %3493 = vmatpush1.bf16.msra.mxu0 %v1694
  %3494 = vmatprep.subr.bf16.mxu0 %v1699
  %3495 = vmatpush1.bf16.msra.mxu0 %v1698
  %3496 = vmatprep.subr.bf16.mxu0 %v1703
  %3497 = vmatpush1.bf16.msra.mxu0 %v1702
  %3498 = vmatprep.subr.bf16.mxu0 %v1707
  %3499 = vmatpush1.bf16.msra.mxu0 %v1706
  %3500 = vmatprep.subr.bf16.mxu0 %v1711
  %3501 = vmatpush1.bf16.msra.mxu0 %v1710
  %3502 = vmatprep.subr.bf16.mxu0 %v1715
  %3503 = vmatpush1.bf16.msra.mxu0 %v1714
  %3504 = vmatprep.subr.bf16.mxu0 0
  %3505 = vmatpush1.bf16.msra.mxu0 0
  %3506 = vmatprep.subr.bf16.mxu0 0
  %3507 = vmatpush1.bf16.msra.mxu0 0
  %3508 = vmatprep.subr.bf16.mxu0 0
  %3509 = vmatpush1.bf16.msra.mxu0 0
  %3510 = vmatprep.subr.bf16.mxu0 0
  %3511 = vmatpush1.bf16.msra.mxu0 0
  %3512 = vmatprep.subr.bf16.mxu0 0
  %3513 = vmatpush1.bf16.msra.mxu0 0
  %3514 = vmatprep.subr.bf16.mxu0 0
  %3515 = vmatpush1.bf16.msra.mxu0 0
  %3516 = vmatprep.subr.bf16.mxu0 0
  %3517 = vmatpush1.bf16.msra.mxu0 0
  %3518 = vmatprep.subr.bf16.mxu0 0
  %3519 = vmatpush1.bf16.msra.mxu0 0
  %3520 = vmatprep.mubr.bf16.mxu0 0
  %3521 = vmatmul.mubr.bf16.gmra.mrb[0].mxu0 %v3487
  %v3522 = vpop.f32.mrb[0].mxu0
  %v3523 = vadd.f32 0.0, %v3522
  %v3524 = vpop.f32.mrb[0].mxu0
  %v3525 = vadd.f32 0.0, %v3524
  %v3526 = vpop.f32.mrb[0].mxu0
  %v3527 = vpop.f32.mrb[0].mxu0
  %3528 = vdwg.mxu0
  %3529 = vmatprep.subr.bf16.mxu0 %v1689
  %3530 = vmatpush1.bf16.msra.mxu0 %v1688
  %3531 = vmatprep.subr.bf16.mxu0 %v1693
  %3532 = vmatpush1.bf16.msra.mxu0 %v1692
  %3533 = vmatprep.subr.bf16.mxu0 %v1697
  %3534 = vmatpush1.bf16.msra.mxu0 %v1696
  %3535 = vmatprep.subr.bf16.mxu0 %v1701
  %3536 = vmatpush1.bf16.msra.mxu0 %v1700
  %3537 = vmatprep.subr.bf16.mxu0 %v1705
  %3538 = vmatpush1.bf16.msra.mxu0 %v1704
  %3539 = vmatprep.subr.bf16.mxu0 %v1709
  %3540 = vmatpush1.bf16.msra.mxu0 %v1708
  %3541 = vmatprep.subr.bf16.mxu0 %v1713
  %3542 = vmatpush1.bf16.msra.mxu0 %v1712
  %3543 = vmatprep.subr.bf16.mxu0 %v1717
  %3544 = vmatpush1.bf16.msra.mxu0 %v1716
  %3545 = vmatprep.subr.bf16.mxu0 0
  %3546 = vmatpush1.bf16.msra.mxu0 0
  %3547 = vmatprep.subr.bf16.mxu0 0
  %3548 = vmatpush1.bf16.msra.mxu0 0
  %3549 = vmatprep.subr.bf16.mxu0 0
  %3550 = vmatpush1.bf16.msra.mxu0 0
  %3551 = vmatprep.subr.bf16.mxu0 0
  %3552 = vmatpush1.bf16.msra.mxu0 0
  %3553 = vmatprep.subr.bf16.mxu0 0
  %3554 = vmatpush1.bf16.msra.mxu0 0
  %3555 = vmatprep.subr.bf16.mxu0 0
  %3556 = vmatpush1.bf16.msra.mxu0 0
  %3557 = vmatprep.subr.bf16.mxu0 0
  %3558 = vmatpush1.bf16.msra.mxu0 0
  %3559 = vmatprep.subr.bf16.mxu0 0
  %3560 = vmatpush1.bf16.msra.mxu0 0
  %3561 = vmatprep.mubr.bf16.mxu0 0
  %3562 = vmatmul.mubr.bf16.gmra.mrb[0].mxu0 %v3487
  %v3563 = vpop.f32.mrb[0].mxu0
  %v3564 = vadd.f32 0.0, %v3563
  %v3565 = vpop.f32.mrb[0].mxu0
  %v3566 = vadd.f32 0.0, %v3565
  %v3567 = vpop.f32.mrb[0].mxu0
  %v3568 = vpop.f32.mrb[0].mxu0
  %3569 = vdwg.mxu0
  %v3570 = vadd.f32 %v3483, %v3523
  %v3571 = vadd.f32 %v3484, %v3525
  %v3572 = vadd.f32 %v3485, %v3564
  %v3573 = vadd.f32 %v3486, %v3566
  %v3574 = vxor.u32 %v3479, 2147483648
  %v3575 = vmul.f32 %v3574, 1.442695
  %v3576 = vpow.pop %v3575
  %v3577 = vadd.f32 %v3576, 1.0
  %v3578 = vrcp.pop %v3577
  %v3579 = vmul.f32 1.0, %v3578
  %v3580 = vxor.u32 %v3480, 2147483648
  %v3581 = vmul.f32 %v3580, 1.442695
  %v3582 = vpow.pop %v3581
  %v3583 = vadd.f32 %v3582, 1.0
  %v3584 = vrcp.pop %v3583
  %v3585 = vmul.f32 1.0, %v3584
  %v3586 = vtanh.pop %v3481
  %v3587 = vxor.u32 %v3482, 2147483648
  %v3588 = vmul.f32 %v3587, 1.442695
  %v3589 = vpow.pop %v3588
  %v3590 = vadd.f32 %v3589, 1.0
  %v3591 = vrcp.pop %v3590
  %v3592 = vmul.f32 1.0, %v3591
  %v3593 = vmul.f32 %v3585, %v3388
  %v3594 = vmul.f32 %v3579, %v3586
  %v3595 = vadd.f32 %v3593, %v3594
  %v3596 = vtanh.pop %v3595
  %v3597 = vmul.f32 %v3592, %v3596
  %v3598 = vxor.u32 %v3570, 2147483648
  %v3599 = vmul.f32 %v3598, 1.442695
  %v3600 = vpow.pop %v3599
  %v3601 = vadd.f32 %v3600, 1.0
  %v3602 = vrcp.pop %v3601
  %v3603 = vmul.f32 1.0, %v3602
  %v3604 = vxor.u32 %v3571, 2147483648
  %v3605 = vmul.f32 %v3604, 1.442695
  %v3606 = vpow.pop %v3605
  %v3607 = vadd.f32 %v3606, 1.0
  %v3608 = vrcp.pop %v3607
  %v3609 = vmul.f32 1.0, %v3608
  %v3610 = vtanh.pop %v3572
  %v3611 = vxor.u32 %v3573, 2147483648
  %v3612 = vmul.f32 %v3611, 1.442695
  %v3613 = vpow.pop %v3612
  %v3614 = vadd.f32 %v3613, 1.0
  %v3615 = vrcp.pop %v3614
  %v3616 = vmul.f32 1.0, %v3615
  %v3617 = vmul.f32 %v3609, %v3390
  %v3618 = vmul.f32 %v3603, %v3610
  %v3619 = vadd.f32 %v3617, %v3618
  %v3620 = vtanh.pop %v3619
  %v3621 = vmul.f32 %v3616, %v3620
  %v3622 = vsel %vm1897, %v3597, 0.0
  %s3623 = scalar_lea.vmem [#allocation4], 56
  %3624 = vst [vmem:[%s3623] sm:$0xff] %v3622
  %v3625 = vsel %vm1890, %v3621, 0.0
  %3626 = vst [vmem:[#allocation5] sm:$0xff] %v3625
  %v3627 = vld [vmem:[#allocation4] sm:$0xff]
  %v3628 = vld [vmem:[#allocation4 + $0x8] sm:$0xff]
  %v3629 = vld [vmem:[#allocation4 + $0x10] sm:$0xff]
  %v3630 = vld [vmem:[#allocation4 + $0x18] sm:$0xff]
  %v3631 = vld [vmem:[#allocation4 + $0x20] sm:$0xff]
  %v3632 = vld [vmem:[#allocation4 + $0x28] sm:$0xff]
  %v3633 = vld [vmem:[#allocation4 + $0x30] sm:$0xff]
  %v3634 = vld [vmem:[#allocation4 + $0x38] sm:$0xff]
  %v3635 = vld [vmem:[#allocation5] sm:$0xff]
  %v3636 = vld [vmem:[#allocation5 + $0x8] sm:$0xff]
  %v3637 = vld [vmem:[#allocation5 + $0x10] sm:$0xff]
  %v3638 = vld [vmem:[#allocation5 + $0x18] sm:$0xff]
  %v3639 = vld [vmem:[#allocation5 + $0x20] sm:$0xff]
  %v3640 = vld [vmem:[#allocation5 + $0x28] sm:$0xff]
  %v3641 = vld [vmem:[#allocation5 + $0x30] sm:$0xff]
  %v3642 = vld [vmem:[#allocation5 + $0x38] sm:$0xff]
  %v3643 = vpack.c.bf16 %v3628, %v3627
  %v3644 = vpack.c.bf16 %v3636, %v3635
  %v3645 = vpack.c.bf16 %v3630, %v3629
  %v3646 = vpack.c.bf16 %v3638, %v3637
  %v3647 = vpack.c.bf16 %v3632, %v3631
  %v3648 = vpack.c.bf16 %v3640, %v3639
  %v3649 = vpack.c.bf16 %v3634, %v3633
  %v3650 = vpack.c.bf16 %v3642, %v3641
  %v3651 = vld [vmem:[%s8] sm:$0xff]
  %v3652 = vld [vmem:[%s8 + $0x8] sm:$0xff]
  %v3653 = vld [vmem:[%s8 + $0x10] sm:$0xff]
  %v3654 = vld [vmem:[%s8 + $0x18] sm:$0xff]
  %v3655 = vld [vmem:[%s8 + $0x20] sm:$0xff]
  %v3656 = vld [vmem:[%s8 + $0x28] sm:$0xff]
  %v3657 = vld [vmem:[%s8 + $0x30] sm:$0xff]
  %v3658 = vld [vmem:[%s8 + $0x38] sm:$0xff]
  %v3659 = vld [vmem:[%s8 + $0x40] sm:$0xff]
  %v3660 = vld [vmem:[%s8 + $0x48] sm:$0xff]
  %v3661 = vld [vmem:[%s8 + $0x50] sm:$0xff]
  %v3662 = vld [vmem:[%s8 + $0x58] sm:$0xff]
  %v3663 = vld [vmem:[%s8 + $0x60] sm:$0xff]
  %v3664 = vld [vmem:[%s8 + $0x68] sm:$0xff]
  %v3665 = vld [vmem:[%s8 + $0x70] sm:$0xff]
  %v3666 = vld [vmem:[%s8 + $0x78] sm:$0xff]
  %v3667 = vld [vmem:[%s8 + $0x80] sm:$0xff]
  %v3668 = vld [vmem:[%s8 + $0x88] sm:$0xff]
  %v3669 = vld [vmem:[%s8 + $0x90] sm:$0xff]
  %v3670 = vld [vmem:[%s8 + $0x98] sm:$0xff]
  %v3671 = vld [vmem:[%s8 + $0xa0] sm:$0xff]
  %v3672 = vld [vmem:[%s8 + $0xa8] sm:$0xff]
  %v3673 = vld [vmem:[%s8 + $0xb0] sm:$0xff]
  %v3674 = vld [vmem:[%s8 + $0xb8] sm:$0xff]
  %v3675 = vld [vmem:[%s8 + $0xc0] sm:$0xff]
  %v3676 = vld [vmem:[%s8 + $0xc8] sm:$0xff]
  %v3677 = vld [vmem:[%s8 + $0xd0] sm:$0xff]
  %v3678 = vld [vmem:[%s8 + $0xd8] sm:$0xff]
  %v3679 = vld [vmem:[%s8 + $0xe0] sm:$0xff]
  %v3680 = vld [vmem:[%s8 + $0xe8] sm:$0xff]
  %v3681 = vld [vmem:[%s8 + $0xf0] sm:$0xff]
  %v3682 = vld [vmem:[%s8 + $0xf8] sm:$0xff]
  %v3715 = vunpack.c.l.b16 %v3651
  %v3716 = vunpack.c.h.b16 %v3651
  %v3717 = vunpack.c.l.b16 %v3652
  %v3718 = vunpack.c.h.b16 %v3652
  %v3719 = vunpack.c.l.b16 %v3653
  %v3720 = vunpack.c.h.b16 %v3653
  %v3721 = vunpack.c.l.b16 %v3654
  %v3722 = vunpack.c.h.b16 %v3654
  %v3723 = vunpack.c.l.b16 %v3655
  %v3724 = vunpack.c.h.b16 %v3655
  %v3725 = vunpack.c.l.b16 %v3656
  %v3726 = vunpack.c.h.b16 %v3656
  %v3727 = vunpack.c.l.b16 %v3657
  %v3728 = vunpack.c.h.b16 %v3657
  %v3729 = vunpack.c.l.b16 %v3658
  %v3730 = vunpack.c.h.b16 %v3658
  %v3731 = vunpack.c.l.b16 %v3659
  %v3732 = vunpack.c.h.b16 %v3659
  %v3733 = vunpack.c.l.b16 %v3660
  %v3734 = vunpack.c.h.b16 %v3660
  %v3735 = vunpack.c.l.b16 %v3661
  %v3736 = vunpack.c.h.b16 %v3661
  %v3737 = vunpack.c.l.b16 %v3662
  %v3738 = vunpack.c.h.b16 %v3662
  %v3739 = vunpack.c.l.b16 %v3663
  %v3740 = vunpack.c.h.b16 %v3663
  %v3741 = vunpack.c.l.b16 %v3664
  %v3742 = vunpack.c.h.b16 %v3664
  %v3743 = vunpack.c.l.b16 %v3665
  %v3744 = vunpack.c.h.b16 %v3665
  %v3745 = vunpack.c.l.b16 %v3666
  %v3746 = vunpack.c.h.b16 %v3666
  %v3747 = vunpack.c.l.b16 %v3667
  %v3748 = vunpack.c.h.b16 %v3667
  %v3749 = vunpack.c.l.b16 %v3668
  %v3750 = vunpack.c.h.b16 %v3668
  %v3751 = vunpack.c.l.b16 %v3669
  %v3752 = vunpack.c.h.b16 %v3669
  %v3753 = vunpack.c.l.b16 %v3670
  %v3754 = vunpack.c.h.b16 %v3670
  %v3755 = vunpack.c.l.b16 %v3671
  %v3756 = vunpack.c.h.b16 %v3671
  %v3757 = vunpack.c.l.b16 %v3672
  %v3758 = vunpack.c.h.b16 %v3672
  %v3759 = vunpack.c.l.b16 %v3673
  %v3760 = vunpack.c.h.b16 %v3673
  %v3761 = vunpack.c.l.b16 %v3674
  %v3762 = vunpack.c.h.b16 %v3674
  %v3763 = vunpack.c.l.b16 %v3675
  %v3764 = vunpack.c.h.b16 %v3675
  %v3765 = vunpack.c.l.b16 %v3676
  %v3766 = vunpack.c.h.b16 %v3676
  %v3767 = vunpack.c.l.b16 %v3677
  %v3768 = vunpack.c.h.b16 %v3677
  %v3769 = vunpack.c.l.b16 %v3678
  %v3770 = vunpack.c.h.b16 %v3678
  %v3771 = vunpack.c.l.b16 %v3679
  %v3772 = vunpack.c.h.b16 %v3679
  %v3773 = vunpack.c.l.b16 %v3680
  %v3774 = vunpack.c.h.b16 %v3680
  %v3775 = vunpack.c.l.b16 %v3681
  %v3776 = vunpack.c.h.b16 %v3681
  %v3777 = vunpack.c.l.b16 %v3682
  %v3778 = vunpack.c.h.b16 %v3682
  %v3779 = vpack.c.b16 %v3717, %v3715
  %v3780 = vpack.c.b16 %v3718, %v3716
  %v3781 = vpack.c.b16 %v3721, %v3719
  %v3782 = vpack.c.b16 %v3722, %v3720
  %v3783 = vpack.c.b16 %v3725, %v3723
  %v3784 = vpack.c.b16 %v3726, %v3724
  %v3785 = vpack.c.b16 %v3729, %v3727
  %v3786 = vpack.c.b16 %v3730, %v3728
  %v3787 = vpack.c.b16 %v3733, %v3731
  %v3788 = vpack.c.b16 %v3734, %v3732
  %v3789 = vpack.c.b16 %v3737, %v3735
  %v3790 = vpack.c.b16 %v3738, %v3736
  %v3791 = vpack.c.b16 %v3741, %v3739
  %v3792 = vpack.c.b16 %v3742, %v3740
  %v3793 = vpack.c.b16 %v3745, %v3743
  %v3794 = vpack.c.b16 %v3746, %v3744
  %v3795 = vpack.c.b16 %v3749, %v3747
  %v3796 = vpack.c.b16 %v3750, %v3748
  %v3797 = vpack.c.b16 %v3753, %v3751
  %v3798 = vpack.c.b16 %v3754, %v3752
  %v3799 = vpack.c.b16 %v3757, %v3755
  %v3800 = vpack.c.b16 %v3758, %v3756
  %v3801 = vpack.c.b16 %v3761, %v3759
  %v3802 = vpack.c.b16 %v3762, %v3760
  %v3803 = vpack.c.b16 %v3765, %v3763
  %v3804 = vpack.c.b16 %v3766, %v3764
  %v3805 = vpack.c.b16 %v3769, %v3767
  %v3806 = vpack.c.b16 %v3770, %v3768
  %v3807 = vpack.c.b16 %v3773, %v3771
  %v3808 = vpack.c.b16 %v3774, %v3772
  %v3809 = vpack.c.b16 %v3777, %v3775
  %v3810 = vpack.c.b16 %v3778, %v3776
  %3843 = vmatprep.subr.bf16.mxu0 %v3780
  %3844 = vmatpush1.bf16.msra.mxu0 %v3779
  %3845 = vmatprep.subr.bf16.mxu0 %v3782
  %3846 = vmatpush1.bf16.msra.mxu0 %v3781
  %3847 = vmatprep.subr.bf16.mxu0 %v3784
  %3848 = vmatpush1.bf16.msra.mxu0 %v3783
  %3849 = vmatprep.subr.bf16.mxu0 %v3786
  %3850 = vmatpush1.bf16.msra.mxu0 %v3785
  %3851 = vmatprep.subr.bf16.mxu0 %v3788
  %3852 = vmatpush1.bf16.msra.mxu0 %v3787
  %3853 = vmatprep.subr.bf16.mxu0 %v3790
  %3854 = vmatpush1.bf16.msra.mxu0 %v3789
  %3855 = vmatprep.subr.bf16.mxu0 %v3792
  %3856 = vmatpush1.bf16.msra.mxu0 %v3791
  %3857 = vmatprep.subr.bf16.mxu0 %v3794
  %3858 = vmatpush1.bf16.msra.mxu0 %v3793
  %3859 = vmatprep.subr.bf16.mxu0 %v3796
  %3860 = vmatpush1.bf16.msra.mxu0 %v3795
  %3861 = vmatprep.subr.bf16.mxu0 %v3798
  %3862 = vmatpush1.bf16.msra.mxu0 %v3797
  %3863 = vmatprep.subr.bf16.mxu0 %v3800
  %3864 = vmatpush1.bf16.msra.mxu0 %v3799
  %3865 = vmatprep.subr.bf16.mxu0 %v3802
  %3866 = vmatpush1.bf16.msra.mxu0 %v3801
  %3867 = vmatprep.subr.bf16.mxu0 %v3804
  %3868 = vmatpush1.bf16.msra.mxu0 %v3803
  %3869 = vmatprep.subr.bf16.mxu0 %v3806
  %3870 = vmatpush1.bf16.msra.mxu0 %v3805
  %3871 = vmatprep.subr.bf16.mxu0 %v3808
  %3872 = vmatpush1.bf16.msra.mxu0 %v3807
  %3873 = vmatprep.subr.bf16.mxu0 %v3810
  %3874 = vmatpush1.bf16.msra.mxu0 %v3809
  %3875 = vmatprep.mubr.bf16.mxu0 %v3644
  %3876 = vmatmul.mubr.bf16.gmra.mrb[0].mxu0 %v3643
  %v3877 = vpop.f32.mrb[0].mxu0
  %v3878 = vadd.f32 0.0, %v3877
  %v3879 = vpop.f32.mrb[0].mxu0
  %v3880 = vadd.f32 0.0, %v3879
  %v3881 = vpop.f32.mrb[0].mxu0
  %v3882 = vadd.f32 0.0, %v3881
  %v3883 = vpop.f32.mrb[0].mxu0
  %v3884 = vadd.f32 0.0, %v3883
  %3885 = vmatprep.mubr.bf16.mxu0 %v3646
  %3886 = vmatmul.mubr.bf16.gmra.mrb[0].mxu0 %v3645
  %v3887 = vpop.f32.mrb[0].mxu0
  %v3888 = vadd.f32 0.0, %v3887
  %v3889 = vpop.f32.mrb[0].mxu0
  %v3890 = vadd.f32 0.0, %v3889
  %v3891 = vpop.f32.mrb[0].mxu0
  %v3892 = vadd.f32 0.0, %v3891
  %v3893 = vpop.f32.mrb[0].mxu0
  %v3894 = vadd.f32 0.0, %v3893
  %3895 = vmatprep.mubr.bf16.mxu0 %v3648
  %3896 = vmatmul.mubr.bf16.gmra.mrb[0].mxu0 %v3647
  %v3897 = vpop.f32.mrb[0].mxu0
  %v3898 = vadd.f32 0.0, %v3897
  %v3899 = vpop.f32.mrb[0].mxu0
  %v3900 = vadd.f32 0.0, %v3899
  %v3901 = vpop.f32.mrb[0].mxu0
  %v3902 = vadd.f32 0.0, %v3901
  %v3903 = vpop.f32.mrb[0].mxu0
  %v3904 = vadd.f32 0.0, %v3903
  %3905 = vmatprep.mubr.bf16.mxu0 %v3650
  %3906 = vmatmul.mubr.bf16.gmra.mrb[0].mxu0 %v3649
  %v3907 = vpop.f32.mrb[0].mxu0
  %v3908 = vadd.f32 0.0, %v3907
  %v3909 = vpop.f32.mrb[0].mxu0
  %v3910 = vadd.f32 0.0, %v3909
  %v3911 = vpop.f32.mrb[0].mxu0
  %v3912 = vadd.f32 0.0, %v3911
  %v3913 = vpop.f32.mrb[0].mxu0
  %v3914 = vadd.f32 0.0, %v3913
  %3915 = vdwg.mxu0
  %v3916 = vld [vmem:[%s1] sm:$0xff]
  %v3917 = vld [vmem:[%s9] sm:$0xff]
  %v3918 = vld [vmem:[%s9 + $0x8] sm:$0xff]
  %v3919 = vld [vmem:[%s9 + $0x10] sm:$0xff]
  %v3920 = vld [vmem:[%s9 + $0x18] sm:$0xff]
  %v3921 = vld [vmem:[%s9 + $0x20] sm:$0xff]
  %v3922 = vld [vmem:[%s9 + $0x28] sm:$0xff]
  %v3923 = vld [vmem:[%s9 + $0x30] sm:$0xff]
  %v3924 = vld [vmem:[%s9 + $0x38] sm:$0xff]
  %v3925 = vld [vmem:[%s9 + $0x40] sm:$0xff]
  %v3926 = vld [vmem:[%s9 + $0x48] sm:$0xff]
  %v3927 = vld [vmem:[%s9 + $0x50] sm:$0xff]
  %v3928 = vld [vmem:[%s9 + $0x58] sm:$0xff]
  %v3929 = vld [vmem:[%s9 + $0x60] sm:$0xff]
  %v3930 = vld [vmem:[%s9 + $0x68] sm:$0xff]
  %v3931 = vld [vmem:[%s9 + $0x70] sm:$0xff]
  %v3932 = vld [vmem:[%s9 + $0x78] sm:$0xff]
  %v3933 = vld [vmem:[%s9 + $0x80] sm:$0xff]
  %v3934 = vld [vmem:[%s9 + $0x88] sm:$0xff]
  %v3935 = vld [vmem:[%s9 + $0x90] sm:$0xff]
  %v3936 = vld [vmem:[%s9 + $0x98] sm:$0xff]
  %v3937 = vld [vmem:[%s9 + $0xa0] sm:$0xff]
  %v3938 = vld [vmem:[%s9 + $0xa8] sm:$0xff]
  %v3939 = vld [vmem:[%s9 + $0xb0] sm:$0xff]
  %v3940 = vld [vmem:[%s9 + $0xb8] sm:$0xff]
  %v3941 = vld [vmem:[%s9 + $0xc0] sm:$0xff]
  %v3942 = vld [vmem:[%s9 + $0xc8] sm:$0xff]
  %v3943 = vld [vmem:[%s9 + $0xd0] sm:$0xff]
  %v3944 = vld [vmem:[%s9 + $0xd8] sm:$0xff]
  %v3945 = vld [vmem:[%s9 + $0xe0] sm:$0xff]
  %v3946 = vld [vmem:[%s9 + $0xe8] sm:$0xff]
  %v3947 = vld [vmem:[%s9 + $0xf0] sm:$0xff]
  %v3948 = vld [vmem:[%s9 + $0xf8] sm:$0xff]
  %v3950 = vunpack.c.l.b16 %v3916
  %v3951 = vunpack.c.h.b16 %v3916
  %v3952 = vpack.c.b16 %v3950, %v3950
  %v3953 = vpack.c.b16 %v3951, %v3951
  %v3988 = vunpack.c.l.b16 %v3917
  %v3989 = vunpack.c.h.b16 %v3917
  %v3990 = vunpack.c.l.b16 %v3918
  %v3991 = vunpack.c.h.b16 %v3918
  %v3992 = vunpack.c.l.b16 %v3919
  %v3993 = vunpack.c.h.b16 %v3919
  %v3994 = vunpack.c.l.b16 %v3920
  %v3995 = vunpack.c.h.b16 %v3920
  %v3996 = vunpack.c.l.b16 %v3921
  %v3997 = vunpack.c.h.b16 %v3921
  %v3998 = vunpack.c.l.b16 %v3922
  %v3999 = vunpack.c.h.b16 %v3922
  %v4000 = vunpack.c.l.b16 %v3923
  %v4001 = vunpack.c.h.b16 %v3923
  %v4002 = vunpack.c.l.b16 %v3924
  %v4003 = vunpack.c.h.b16 %v3924
  %v4004 = vunpack.c.l.b16 %v3925
  %v4005 = vunpack.c.h.b16 %v3925
  %v4006 = vunpack.c.l.b16 %v3926
  %v4007 = vunpack.c.h.b16 %v3926
  %v4008 = vunpack.c.l.b16 %v3927
  %v4009 = vunpack.c.h.b16 %v3927
  %v4010 = vunpack.c.l.b16 %v3928
  %v4011 = vunpack.c.h.b16 %v3928
  %v4012 = vunpack.c.l.b16 %v3929
  %v4013 = vunpack.c.h.b16 %v3929
  %v4014 = vunpack.c.l.b16 %v3930
  %v4015 = vunpack.c.h.b16 %v3930
  %v4016 = vunpack.c.l.b16 %v3931
  %v4017 = vunpack.c.h.b16 %v3931
  %v4018 = vunpack.c.l.b16 %v3932
  %v4019 = vunpack.c.h.b16 %v3932
  %v4020 = vunpack.c.l.b16 %v3933
  %v4021 = vunpack.c.h.b16 %v3933
  %v4022 = vunpack.c.l.b16 %v3934
  %v4023 = vunpack.c.h.b16 %v3934
  %v4024 = vunpack.c.l.b16 %v3935
  %v4025 = vunpack.c.h.b16 %v3935
  %v4026 = vunpack.c.l.b16 %v3936
  %v4027 = vunpack.c.h.b16 %v3936
  %v4028 = vunpack.c.l.b16 %v3937
  %v4029 = vunpack.c.h.b16 %v3937
  %v4030 = vunpack.c.l.b16 %v3938
  %v4031 = vunpack.c.h.b16 %v3938
  %v4032 = vunpack.c.l.b16 %v3939
  %v4033 = vunpack.c.h.b16 %v3939
  %v4034 = vunpack.c.l.b16 %v3940
  %v4035 = vunpack.c.h.b16 %v3940
  %v4036 = vunpack.c.l.b16 %v3941
  %v4037 = vunpack.c.h.b16 %v3941
  %v4038 = vunpack.c.l.b16 %v3942
  %v4039 = vunpack.c.h.b16 %v3942
  %v4040 = vunpack.c.l.b16 %v3943
  %v4041 = vunpack.c.h.b16 %v3943
  %v4042 = vunpack.c.l.b16 %v3944
  %v4043 = vunpack.c.h.b16 %v3944
  %v4044 = vunpack.c.l.b16 %v3945
  %v4045 = vunpack.c.h.b16 %v3945
  %v4046 = vunpack.c.l.b16 %v3946
  %v4047 = vunpack.c.h.b16 %v3946
  %v4048 = vunpack.c.l.b16 %v3947
  %v4049 = vunpack.c.h.b16 %v3947
  %v4050 = vunpack.c.l.b16 %v3948
  %v4051 = vunpack.c.h.b16 %v3948
  %v4052 = vpack.c.b16 %v3990, %v3988
  %v4053 = vpack.c.b16 %v3991, %v3989
  %v4054 = vpack.c.b16 %v3994, %v3992
  %v4055 = vpack.c.b16 %v3995, %v3993
  %v4056 = vpack.c.b16 %v3998, %v3996
  %v4057 = vpack.c.b16 %v3999, %v3997
  %v4058 = vpack.c.b16 %v4002, %v4000
  %v4059 = vpack.c.b16 %v4003, %v4001
  %v4060 = vpack.c.b16 %v4006, %v4004
  %v4061 = vpack.c.b16 %v4007, %v4005
  %v4062 = vpack.c.b16 %v4010, %v4008
  %v4063 = vpack.c.b16 %v4011, %v4009
  %v4064 = vpack.c.b16 %v4014, %v4012
  %v4065 = vpack.c.b16 %v4015, %v4013
  %v4066 = vpack.c.b16 %v4018, %v4016
  %v4067 = vpack.c.b16 %v4019, %v4017
  %v4068 = vpack.c.b16 %v4022, %v4020
  %v4069 = vpack.c.b16 %v4023, %v4021
  %v4070 = vpack.c.b16 %v4026, %v4024
  %v4071 = vpack.c.b16 %v4027, %v4025
  %v4072 = vpack.c.b16 %v4030, %v4028
  %v4073 = vpack.c.b16 %v4031, %v4029
  %v4074 = vpack.c.b16 %v4034, %v4032
  %v4075 = vpack.c.b16 %v4035, %v4033
  %v4076 = vpack.c.b16 %v4038, %v4036
  %v4077 = vpack.c.b16 %v4039, %v4037
  %v4078 = vpack.c.b16 %v4042, %v4040
  %v4079 = vpack.c.b16 %v4043, %v4041
  %v4080 = vpack.c.b16 %v4046, %v4044
  %v4081 = vpack.c.b16 %v4047, %v4045
  %v4082 = vpack.c.b16 %v4050, %v4048
  %v4083 = vpack.c.b16 %v4051, %v4049
  %4116 = vmatprep.subr.bf16.mxu0 %v4053
  %4117 = vmatpush1.bf16.msra.mxu0 %v4052
  %4118 = vmatprep.subr.bf16.mxu0 %v4055
  %4119 = vmatpush1.bf16.msra.mxu0 %v4054
  %4120 = vmatprep.subr.bf16.mxu0 %v4057
  %4121 = vmatpush1.bf16.msra.mxu0 %v4056
  %4122 = vmatprep.subr.bf16.mxu0 %v4059
  %4123 = vmatpush1.bf16.msra.mxu0 %v4058
  %4124 = vmatprep.subr.bf16.mxu0 %v4061
  %4125 = vmatpush1.bf16.msra.mxu0 %v4060
  %4126 = vmatprep.subr.bf16.mxu0 %v4063
  %4127 = vmatpush1.bf16.msra.mxu0 %v4062
  %4128 = vmatprep.subr.bf16.mxu0 %v4065
  %4129 = vmatpush1.bf16.msra.mxu0 %v4064
  %4130 = vmatprep.subr.bf16.mxu0 %v4067
  %4131 = vmatpush1.bf16.msra.mxu0 %v4066
  %4132 = vmatprep.subr.bf16.mxu0 %v4069
  %4133 = vmatpush1.bf16.msra.mxu0 %v4068
  %4134 = vmatprep.subr.bf16.mxu0 %v4071
  %4135 = vmatpush1.bf16.msra.mxu0 %v4070
  %4136 = vmatprep.subr.bf16.mxu0 %v4073
  %4137 = vmatpush1.bf16.msra.mxu0 %v4072
  %4138 = vmatprep.subr.bf16.mxu0 %v4075
  %4139 = vmatpush1.bf16.msra.mxu0 %v4074
  %4140 = vmatprep.subr.bf16.mxu0 %v4077
  %4141 = vmatpush1.bf16.msra.mxu0 %v4076
  %4142 = vmatprep.subr.bf16.mxu0 %v4079
  %4143 = vmatpush1.bf16.msra.mxu0 %v4078
  %4144 = vmatprep.subr.bf16.mxu0 %v4081
  %4145 = vmatpush1.bf16.msra.mxu0 %v4080
  %4146 = vmatprep.subr.bf16.mxu0 %v4083
  %4147 = vmatpush1.bf16.msra.mxu0 %v4082
  %4148 = vmatprep.mubr.bf16.mxu0 %v3953
  %4149 = vmatmul.mubr.bf16.gmra.mrb[0].mxu0 %v3952
  %v4150 = vpop.f32.mrb[0].mxu0
  %v4151 = vadd.f32 0.0, %v4150
  %v4152 = vpop.f32.mrb[0].mxu0
  %v4153 = vadd.f32 0.0, %v4152
  %v4154 = vpop.f32.mrb[0].mxu0
  %v4155 = vpop.f32.mrb[0].mxu0
  %4156 = vdwg.mxu0
  %v4157 = vadd.f32 %v3878, %v4151
  %v4158 = vadd.f32 %v3880, %v4153
  %v4159 = vadd.f32 %v3882, %v4151
  %v4160 = vadd.f32 %v3884, %v4153
  %v4161 = vadd.f32 %v3888, %v4151
  %v4162 = vadd.f32 %v3890, %v4153
  %v4163 = vadd.f32 %v3892, %v4151
  %v4164 = vadd.f32 %v3894, %v4153
  %v4165 = vadd.f32 %v3898, %v4151
  %v4166 = vadd.f32 %v3900, %v4153
  %v4167 = vadd.f32 %v3902, %v4151
  %v4168 = vadd.f32 %v3904, %v4153
  %v4169 = vadd.f32 %v3908, %v4151
  %v4170 = vadd.f32 %v3910, %v4153
  %v4171 = vadd.f32 %v3912, %v4151
  %v4172 = vadd.f32 %v3914, %v4153
  %v4173 = vld [vmem:[%s10] sm:$0x3]
  %v4175 = vlaneseq
  %v4176 = vshrl.u32 %v4175, 7
  %v4177 = vsub.s32 0, %v4176
  %v4178 = vrot.slane %v4173, %v4177
  %v4179 = vlaneseq
  %v4180 = vshrl.u32 %v4179, 7
  %v4181 = vsub.s32 1, %v4180
  %v4182 = vrot.slane %v4173, %v4181
  %v4185 = vadd.f32 %v4157, %v4178
  %v4186 = vadd.f32 %v4158, %v4182
  %v4187 = vadd.f32 %v4159, %v4178
  %v4188 = vadd.f32 %v4160, %v4182
  %v4189 = vadd.f32 %v4161, %v4178
  %v4190 = vadd.f32 %v4162, %v4182
  %v4191 = vadd.f32 %v4163, %v4178
  %v4192 = vadd.f32 %v4164, %v4182
  %v4193 = vadd.f32 %v4165, %v4178
  %v4194 = vadd.f32 %v4166, %v4182
  %v4195 = vadd.f32 %v4167, %v4178
  %v4196 = vadd.f32 %v4168, %v4182
  %v4197 = vadd.f32 %v4169, %v4178
  %v4198 = vadd.f32 %v4170, %v4182
  %v4199 = vadd.f32 %v4171, %v4178
  %v4200 = vadd.f32 %v4172, %v4182
  %v4201 = vtanh.pop %v4185
  %v4202 = vtanh.pop %v4186
  %v4203 = vtanh.pop %v4187
  %v4204 = vtanh.pop %v4188
  %v4205 = vtanh.pop %v4189
  %v4206 = vtanh.pop %v4190
  %v4207 = vtanh.pop %v4191
  %v4208 = vtanh.pop %v4192
  %v4209 = vtanh.pop %v4193
  %v4210 = vtanh.pop %v4194
  %v4211 = vtanh.pop %v4195
  %v4212 = vtanh.pop %v4196
  %v4213 = vtanh.pop %v4197
  %v4214 = vtanh.pop %v4198
  %v4215 = vtanh.pop %v4199
  %v4216 = vtanh.pop %v4200
  %v4217 = vld [vmem:[%s11] sm:$0x3]
  %v4219 = vlaneseq
  %v4220 = vshrl.u32 %v4219, 7
  %v4221 = vsub.s32 0, %v4220
  %v4222 = vrot.slane %v4217, %v4221
  %v4223 = vlaneseq
  %v4224 = vshrl.u32 %v4223, 7
  %v4225 = vsub.s32 1, %v4224
  %v4226 = vrot.slane %v4217, %v4225
  %v4229 = vmul.f32 %v4201, %v4222
  %v4230 = vmul.f32 %v4202, %v4226
  %v4231 = vmul.f32 %v4203, %v4222
  %v4232 = vmul.f32 %v4204, %v4226
  %v4233 = vmul.f32 %v4205, %v4222
  %v4234 = vmul.f32 %v4206, %v4226
  %v4235 = vmul.f32 %v4207, %v4222
  %v4236 = vmul.f32 %v4208, %v4226
  %v4237 = vmul.f32 %v4209, %v4222
  %v4238 = vmul.f32 %v4210, %v4226
  %v4239 = vmul.f32 %v4211, %v4222
  %v4240 = vmul.f32 %v4212, %v4226
  %v4241 = vmul.f32 %v4213, %v4222
  %v4242 = vmul.f32 %v4214, %v4226
  %v4243 = vmul.f32 %v4215, %v4222
  %v4244 = vmul.f32 %v4216, %v4226
  %v4245 = vadd.f32 %v4229, %v4230
  %4246 = vadd.xlane.f32.xlu0 %v4245
  %v4247 = vpop.xlane.xlu0 %4246
  %v4248 = vadd.f32 %v4231, %v4232
  %4249 = vadd.xlane.f32.xlu0 %v4248
  %v4250 = vpop.xlane.xlu0 %4249
  %v4251 = vadd.f32 %v4233, %v4234
  %4252 = vadd.xlane.f32.xlu0 %v4251
  %v4253 = vpop.xlane.xlu0 %4252
  %v4254 = vadd.f32 %v4235, %v4236
  %4255 = vadd.xlane.f32.xlu0 %v4254
  %v4256 = vpop.xlane.xlu0 %4255
  %v4257 = vadd.f32 %v4237, %v4238
  %4258 = vadd.xlane.f32.xlu0 %v4257
  %v4259 = vpop.xlane.xlu0 %4258
  %v4260 = vadd.f32 %v4239, %v4240
  %4261 = vadd.xlane.f32.xlu0 %v4260
  %v4262 = vpop.xlane.xlu0 %4261
  %v4263 = vadd.f32 %v4241, %v4242
  %4264 = vadd.xlane.f32.xlu0 %v4263
  %v4265 = vpop.xlane.xlu0 %4264
  %v4266 = vadd.f32 %v4243, %v4244
  %4267 = vadd.xlane.f32.xlu0 %v4266
  %v4268 = vpop.xlane.xlu0 %4267
  %v4269 = vlaneseq
  %v4270 = vshrl.u32 %v4269, 7
  %v4271 = vld [vmem:[%s3] sm:$0x1]
  %v4272 = vlaneseq
  %v4273 = vshrl.u32 %v4272, 7
  %v4274 = vsub.s32 0, %v4273
  %v4275 = vrot.slane %v4271, %v4274
  %vm4276 = vcmp.lt.s32.totalorder %v4270, %v4275
  %v4285 = vlaneseq
  %v4286 = vand.u32 %v4285, 127
  %v4287 = vlaneseq
  %v4288 = vshrl.u32 %v4287, 7
  %v4289 = vsub.s32 %v4286, %v4288
  %v4290 = vrot.slane %v4247, %v4289
  %v4291 = vlaneseq
  %v4292 = vshrl.u32 %v4291, 7
  %v4293 = vsub.s32 %v4286, %v4292
  %v4294 = vrot.slane %v4250, %v4293
  %v4295 = vlaneseq
  %v4296 = vshrl.u32 %v4295, 7
  %v4297 = vsub.s32 %v4286, %v4296
  %v4298 = vrot.slane %v4253, %v4297
  %v4299 = vlaneseq
  %v4300 = vshrl.u32 %v4299, 7
  %v4301 = vsub.s32 %v4286, %v4300
  %v4302 = vrot.slane %v4256, %v4301
  %v4303 = vlaneseq
  %v4304 = vshrl.u32 %v4303, 7
  %v4305 = vsub.s32 %v4286, %v4304
  %v4306 = vrot.slane %v4259, %v4305
  %v4307 = vlaneseq
  %v4308 = vshrl.u32 %v4307, 7
  %v4309 = vsub.s32 %v4286, %v4308
  %v4310 = vrot.slane %v4262, %v4309
  %v4311 = vlaneseq
  %v4312 = vshrl.u32 %v4311, 7
  %v4313 = vsub.s32 %v4286, %v4312
  %v4314 = vrot.slane %v4265, %v4313
  %v4315 = vlaneseq
  %v4316 = vshrl.u32 %v4315, 7
  %v4317 = vsub.s32 %v4286, %v4316
  %v4318 = vrot.slane %v4268, %v4317
  %vm4319 = vcmask 1041409
  %v4320 = vsel %vm4319, %v4294, %v4290
  %vm4321 = vcmask 1042434
  %v4322 = vsel %vm4321, %v4298, %v4320
  %vm4323 = vcmask 1043459
  %v4324 = vsel %vm4323, %v4302, %v4322
  %vm4325 = vcmask 1044484
  %v4326 = vsel %vm4325, %v4306, %v4324
  %vm4327 = vcmask 1045509
  %v4328 = vsel %vm4327, %v4310, %v4326
  %vm4329 = vcmask 1046534
  %v4330 = vsel %vm4329, %v4314, %v4328
  %vm4331 = vcmask 1047559
  %v4332 = vsel %vm4331, %v4318, %v4330
  %v4334 = vsel %vm4276, %v4332, -1000000.0
  %vm4335 = vcmask 64512
  %v4336 = vsel %vm4335, %v4334, -inf
  %v4337 = vrot.slane %v4336, 4
  %v4338 = vmax.f32 %v4336, %v4337
  %v4339 = vrot.slane %v4338, 2
  %v4340 = vmax.f32 %v4338, %v4339
  %v4341 = vrot.slane %v4340, 1
  %v4342 = vmax.f32 %v4340, %v4341
  %v4343 = vsub.f32 %v4334, %v4342
  %v4344 = vmul.f32 %v4343, 1.442695
  %v4345 = vpow.pop %v4344
  %v4346 = vsel %vm4335, %v4345, 0.0
  %v4347 = vrot.slane %v4346, 4
  %v4348 = vadd.f32 %v4346, %v4347
  %v4349 = vrot.slane %v4348, 2
  %v4350 = vadd.f32 %v4348, %v4349
  %v4351 = vrot.slane %v4350, 1
  %v4352 = vadd.f32 %v4350, %v4351
  %v4353 = vrcp.pop %v4352
  %v4354 = vmul.f32 %v4345, %v4353
  %4355 = vst.msk [vmem:[%s17] sm:$0xff] %vm4335, %v4354
  %v4356 = vlaneseq
  %v4357 = vshrl.u32 %v4356, 7
  %v4358 = vsub.s32 0, %v4357
  %v4359 = vrot.slane %v4354, %v4358
  %4361 = vbcast.lane.b32.xlu0 %v4359, 256
  %v4362 = vpop.permute.xlu0 %4361
  %v4363 = vlaneseq
  %v4364 = vshrl.u32 %v4363, 7
  %v4365 = vsub.s32 1, %v4364
  %v4366 = vrot.slane %v4354, %v4365
  %4368 = vbcast.lane.b32.xlu0 %v4366, 256
  %v4369 = vpop.permute.xlu0 %4368
  %v4370 = vlaneseq
  %v4371 = vshrl.u32 %v4370, 7
  %v4372 = vsub.s32 2, %v4371
  %v4373 = vrot.slane %v4354, %v4372
  %4375 = vbcast.lane.b32.xlu0 %v4373, 256
  %v4376 = vpop.permute.xlu0 %4375
  %v4377 = vlaneseq
  %v4378 = vshrl.u32 %v4377, 7
  %v4379 = vsub.s32 3, %v4378
  %v4380 = vrot.slane %v4354, %v4379
  %4382 = vbcast.lane.b32.xlu0 %v4380, 256
  %v4383 = vpop.permute.xlu0 %4382
  %v4384 = vlaneseq
  %v4385 = vshrl.u32 %v4384, 7
  %v4386 = vsub.s32 4, %v4385
  %v4387 = vrot.slane %v4354, %v4386
  %4389 = vbcast.lane.b32.xlu0 %v4387, 256
  %v4390 = vpop.permute.xlu0 %4389
  %v4391 = vlaneseq
  %v4392 = vshrl.u32 %v4391, 7
  %v4393 = vsub.s32 5, %v4392
  %v4394 = vrot.slane %v4354, %v4393
  %4396 = vbcast.lane.b32.xlu0 %v4394, 256
  %v4397 = vpop.permute.xlu0 %4396
  %v4398 = vlaneseq
  %v4399 = vshrl.u32 %v4398, 7
  %v4400 = vsub.s32 6, %v4399
  %v4401 = vrot.slane %v4354, %v4400
  %4403 = vbcast.lane.b32.xlu0 %v4401, 256
  %v4404 = vpop.permute.xlu0 %4403
  %v4405 = vlaneseq
  %v4406 = vshrl.u32 %v4405, 7
  %v4407 = vsub.s32 7, %v4406
  %v4408 = vrot.slane %v4354, %v4407
  %4410 = vbcast.lane.b32.xlu0 %v4408, 256
  %v4411 = vpop.permute.xlu0 %4410
  %v4412 = vmul.f32 %v4362, %v3627
  %v4413 = vmul.f32 %v4362, %v3635
  %v4414 = vmul.f32 %v4369, %v3628
  %v4415 = vmul.f32 %v4369, %v3636
  %v4416 = vmul.f32 %v4376, %v3629
  %v4417 = vmul.f32 %v4376, %v3637
  %v4418 = vmul.f32 %v4383, %v3630
  %v4419 = vmul.f32 %v4383, %v3638
  %v4420 = vmul.f32 %v4390, %v3631
  %v4421 = vmul.f32 %v4390, %v3639
  %v4422 = vmul.f32 %v4397, %v3632
  %v4423 = vmul.f32 %v4397, %v3640
  %v4424 = vmul.f32 %v4404, %v3633
  %v4425 = vmul.f32 %v4404, %v3641
  %v4426 = vmul.f32 %v4411, %v3634
  %v4427 = vmul.f32 %v4411, %v3642
  %v4428 = vadd.f32 %v4412, %v4414
  %v4429 = vadd.f32 %v4428, %v4416
  %v4430 = vadd.f32 %v4429, %v4418
  %v4431 = vadd.f32 %v4430, %v4420
  %v4432 = vadd.f32 %v4431, %v4422
  %v4433 = vadd.f32 %v4432, %v4424
  %v4434 = vadd.f32 %v4433, %v4426
  %v4435 = vadd.f32 %v4413, %v4415
  %v4436 = vadd.f32 %v4435, %v4417
  %v4437 = vadd.f32 %v4436, %v4419
  %v4438 = vadd.f32 %v4437, %v4421
  %v4439 = vadd.f32 %v4438, %v4423
  %v4440 = vadd.f32 %v4439, %v4425
  %v4441 = vadd.f32 %v4440, %v4427
  %v4442 = vpack.c.bf16 %v4434, %v4434
  %v4443 = vpack.c.bf16 %v4441, %v4441
  %v4444 = vld [vmem:[%s12] sm:$0xf]
  %v4445 = vld [vmem:[%s12 + $0x4] sm:$0xf]
  %v4446 = vld [vmem:[%s12 + $0x8] sm:$0xf]
  %v4447 = vld [vmem:[%s12 + $0xc] sm:$0xf]
  %v4448 = vld [vmem:[%s12 + $0x10] sm:$0xf]
  %v4449 = vld [vmem:[%s12 + $0x14] sm:$0xf]
  %v4450 = vld [vmem:[%s12 + $0x18] sm:$0xf]
  %v4451 = vld [vmem:[%s12 + $0x1c] sm:$0xf]
  %v4452 = vld [vmem:[%s12 + $0x20] sm:$0xf]
  %v4453 = vld [vmem:[%s12 + $0x24] sm:$0xf]
  %v4454 = vld [vmem:[%s12 + $0x28] sm:$0xf]
  %v4455 = vld [vmem:[%s12 + $0x2c] sm:$0xf]
  %v4456 = vld [vmem:[%s12 + $0x30] sm:$0xf]
  %v4457 = vld [vmem:[%s12 + $0x34] sm:$0xf]
  %v4458 = vld [vmem:[%s12 + $0x38] sm:$0xf]
  %v4459 = vld [vmem:[%s12 + $0x3c] sm:$0xf]
  %v4460 = vld [vmem:[%s12 + $0x40] sm:$0xf]
  %v4461 = vld [vmem:[%s12 + $0x44] sm:$0xf]
  %v4462 = vld [vmem:[%s12 + $0x48] sm:$0xf]
  %v4463 = vld [vmem:[%s12 + $0x4c] sm:$0xf]
  %v4464 = vld [vmem:[%s12 + $0x50] sm:$0xf]
  %v4465 = vld [vmem:[%s12 + $0x54] sm:$0xf]
  %v4466 = vld [vmem:[%s12 + $0x58] sm:$0xf]
  %v4467 = vld [vmem:[%s12 + $0x5c] sm:$0xf]
  %v4468 = vld [vmem:[%s12 + $0x60] sm:$0xf]
  %v4469 = vld [vmem:[%s12 + $0x64] sm:$0xf]
  %v4470 = vld [vmem:[%s12 + $0x68] sm:$0xf]
  %v4471 = vld [vmem:[%s12 + $0x6c] sm:$0xf]
  %v4472 = vld [vmem:[%s12 + $0x70] sm:$0xf]
  %v4473 = vld [vmem:[%s12 + $0x74] sm:$0xf]
  %v4474 = vld [vmem:[%s12 + $0x78] sm:$0xf]
  %v4475 = vld [vmem:[%s12 + $0x7c] sm:$0xf]
  %v4476 = vld [vmem:[%s13] sm:$0x1]
  %v4478 = vlaneseq
  %v4479 = vshrl.u32 %v4478, 7
  %v4480 = vsub.s32 0, %v4479
  %v4481 = vrot.slane %v4476, %v4480
  %v4515 = vunpack.c.l.b16 %v4444
  %v4516 = vunpack.c.l.b16 %v4445
  %v4517 = vunpack.c.l.b16 %v4446
  %v4518 = vunpack.c.l.b16 %v4447
  %v4519 = vunpack.c.l.b16 %v4448
  %v4520 = vunpack.c.l.b16 %v4449
  %v4521 = vunpack.c.l.b16 %v4450
  %v4522 = vunpack.c.l.b16 %v4451
  %v4523 = vunpack.c.l.b16 %v4452
  %v4524 = vunpack.c.l.b16 %v4453
  %v4525 = vunpack.c.l.b16 %v4454
  %v4526 = vunpack.c.l.b16 %v4455
  %v4527 = vunpack.c.l.b16 %v4456
  %v4528 = vunpack.c.l.b16 %v4457
  %v4529 = vunpack.c.l.b16 %v4458
  %v4530 = vunpack.c.l.b16 %v4459
  %v4531 = vunpack.c.l.b16 %v4460
  %v4532 = vunpack.c.l.b16 %v4461
  %v4533 = vunpack.c.l.b16 %v4462
  %v4534 = vunpack.c.l.b16 %v4463
  %v4535 = vunpack.c.l.b16 %v4464
  %v4536 = vunpack.c.l.b16 %v4465
  %v4537 = vunpack.c.l.b16 %v4466
  %v4538 = vunpack.c.l.b16 %v4467
  %v4539 = vunpack.c.l.b16 %v4468
  %v4540 = vunpack.c.l.b16 %v4469
  %v4541 = vunpack.c.l.b16 %v4470
  %v4542 = vunpack.c.l.b16 %v4471
  %v4543 = vunpack.c.l.b16 %v4472
  %v4544 = vunpack.c.l.b16 %v4473
  %v4545 = vunpack.c.l.b16 %v4474
  %v4546 = vunpack.c.l.b16 %v4475
  %v4547 = vpack.c.b16 %v4516, %v4515
  %v4548 = vpack.c.b16 %v4518, %v4517
  %v4549 = vpack.c.b16 %v4520, %v4519
  %v4550 = vpack.c.b16 %v4522, %v4521
  %v4551 = vpack.c.b16 %v4524, %v4523
  %v4552 = vpack.c.b16 %v4526, %v4525
  %v4553 = vpack.c.b16 %v4528, %v4527
  %v4554 = vpack.c.b16 %v4530, %v4529
  %v4555 = vpack.c.b16 %v4532, %v4531
  %v4556 = vpack.c.b16 %v4534, %v4533
  %v4557 = vpack.c.b16 %v4536, %v4535
  %v4558 = vpack.c.b16 %v4538, %v4537
  %v4559 = vpack.c.b16 %v4540, %v4539
  %v4560 = vpack.c.b16 %v4542, %v4541
  %v4561 = vpack.c.b16 %v4544, %v4543
  %v4562 = vpack.c.b16 %v4546, %v4545
  %4579 = vmatprep.subr.bf16.mxu0 0
  %4580 = vmatpush1.bf16.msra.mxu0 %v4547
  %4581 = vmatprep.subr.bf16.mxu0 0
  %4582 = vmatpush1.bf16.msra.mxu0 %v4548
  %4583 = vmatprep.subr.bf16.mxu0 0
  %4584 = vmatpush1.bf16.msra.mxu0 %v4549
  %4585 = vmatprep.subr.bf16.mxu0 0
  %4586 = vmatpush1.bf16.msra.mxu0 %v4550
  %4587 = vmatprep.subr.bf16.mxu0 0
  %4588 = vmatpush1.bf16.msra.mxu0 %v4551
  %4589 = vmatprep.subr.bf16.mxu0 0
  %4590 = vmatpush1.bf16.msra.mxu0 %v4552
  %4591 = vmatprep.subr.bf16.mxu0 0
  %4592 = vmatpush1.bf16.msra.mxu0 %v4553
  %4593 = vmatprep.subr.bf16.mxu0 0
  %4594 = vmatpush1.bf16.msra.mxu0 %v4554
  %4595 = vmatprep.subr.bf16.mxu0 0
  %4596 = vmatpush1.bf16.msra.mxu0 %v4555
  %4597 = vmatprep.subr.bf16.mxu0 0
  %4598 = vmatpush1.bf16.msra.mxu0 %v4556
  %4599 = vmatprep.subr.bf16.mxu0 0
  %4600 = vmatpush1.bf16.msra.mxu0 %v4557
  %4601 = vmatprep.subr.bf16.mxu0 0
  %4602 = vmatpush1.bf16.msra.mxu0 %v4558
  %4603 = vmatprep.subr.bf16.mxu0 0
  %4604 = vmatpush1.bf16.msra.mxu0 %v4559
  %4605 = vmatprep.subr.bf16.mxu0 0
  %4606 = vmatpush1.bf16.msra.mxu0 %v4560
  %4607 = vmatprep.subr.bf16.mxu0 0
  %4608 = vmatpush1.bf16.msra.mxu0 %v4561
  %4609 = vmatprep.subr.bf16.mxu0 0
  %4610 = vmatpush1.bf16.msra.mxu0 %v4562
  %4611 = vmatprep.mubr.bf16.mxu0 %v4443
  %4612 = vmatmul.mubr.bf16.gmra.mrb[0].mxu0 %v4442
  %v4613 = vpop.f32.mrb[0].mxu0
  %v4614 = vadd.f32 %v4481, %v4613
  %v4615 = vpop.f32.mrb[0].mxu0
  %v4616 = vpop.f32.mrb[0].mxu0
  %v4617 = vpop.f32.mrb[0].mxu0
  %4618 = vdwg.mxu0
  %v4619 = vmax.f32 %v4614, 0.0
  %v4620 = vld [vmem:[%s14] sm:$0xff]
  %v4621 = vld [vmem:[%s14 + $0x8] sm:$0xff]
  %v4622 = vld [vmem:[%s14 + $0x10] sm:$0xff]
  %v4623 = vld [vmem:[%s14 + $0x18] sm:$0xff]
  %v4624 = vld [vmem:[%s14 + $0x20] sm:$0xff]
  %v4625 = vld [vmem:[%s14 + $0x28] sm:$0xff]
  %v4626 = vld [vmem:[%s14 + $0x30] sm:$0xff]
  %v4627 = vld [vmem:[%s14 + $0x38] sm:$0xff]
  %v4628 = vld [vmem:[%s14 + $0x40] sm:$0xff]
  %v4629 = vld [vmem:[%s14 + $0x48] sm:$0xff]
  %v4630 = vld [vmem:[%s14 + $0x50] sm:$0xff]
  %v4631 = vld [vmem:[%s14 + $0x58] sm:$0xff]
  %v4632 = vld [vmem:[%s14 + $0x60] sm:$0xff]
  %v4633 = vld [vmem:[%s14 + $0x68] sm:$0xff]
  %v4634 = vld [vmem:[%s14 + $0x70] sm:$0xff]
  %v4635 = vld [vmem:[%s14 + $0x78] sm:$0xff]
  %v4636 = vld [vmem:[%s15] sm:$0x1]
  %v4638 = vlaneseq
  %v4639 = vshrl.u32 %v4638, 7
  %v4640 = vsub.s32 0, %v4639
  %v4641 = vrot.slane %v4636, %v4640
  %4643 = vmatprep.subr.mxu0 0.0
  %4644 = vmatpush1.msra.mxu0 %v4620
  %4645 = vmatprep.subr.mxu0 0.0
  %4646 = vmatpush1.msra.mxu0 %v4621
  %4647 = vmatprep.subr.mxu0 0.0
  %4648 = vmatpush1.msra.mxu0 %v4622
  %4649 = vmatprep.subr.mxu0 0.0
  %4650 = vmatpush1.msra.mxu0 %v4623
  %4651 = vmatprep.subr.mxu0 0.0
  %4652 = vmatpush1.msra.mxu0 %v4624
  %4653 = vmatprep.subr.mxu0 0.0
  %4654 = vmatpush1.msra.mxu0 %v4625
  %4655 = vmatprep.subr.mxu0 0.0
  %4656 = vmatpush1.msra.mxu0 %v4626
  %4657 = vmatprep.subr.mxu0 0.0
  %4658 = vmatpush1.msra.mxu0 %v4627
  %4659 = vmatprep.subr.mxu0 0.0
  %4660 = vmatpush1.msra.mxu0 %v4628
  %4661 = vmatprep.subr.mxu0 0.0
  %4662 = vmatpush1.msra.mxu0 %v4629
  %4663 = vmatprep.subr.mxu0 0.0
  %4664 = vmatpush1.msra.mxu0 %v4630
  %4665 = vmatprep.subr.mxu0 0.0
  %4666 = vmatpush1.msra.mxu0 %v4631
  %4667 = vmatprep.subr.mxu0 0.0
  %4668 = vmatpush1.msra.mxu0 %v4632
  %4669 = vmatprep.subr.mxu0 0.0
  %4670 = vmatpush1.msra.mxu0 %v4633
  %4671 = vmatprep.subr.mxu0 0.0
  %4672 = vmatpush1.msra.mxu0 %v4634
  %4673 = vmatprep.subr.mxu0 0.0
  %4674 = vmatpush1.msra.mxu0 %v4635
  %4675 = vmatprep.subr.mxu0 0.0
  %4676 = vmatpush1.msra.mxu0 0.0
  %4677 = vmatprep.subr.mxu0 0.0
  %4678 = vmatpush1.msra.mxu0 0.0
  %4679 = vmatprep.subr.mxu0 0.0
  %4680 = vmatpush1.msra.mxu0 0.0
  %4681 = vmatprep.subr.mxu0 0.0
  %4682 = vmatpush1.msra.mxu0 0.0
  %4683 = vmatprep.subr.mxu0 0.0
  %4684 = vmatpush1.msra.mxu0 0.0
  %4685 = vmatprep.subr.mxu0 0.0
  %4686 = vmatpush1.msra.mxu0 0.0
  %4687 = vmatprep.subr.mxu0 0.0
  %4688 = vmatpush1.msra.mxu0 0.0
  %4689 = vmatprep.subr.mxu0 0.0
  %4690 = vmatpush1.msra.mxu0 0.0
  %4691 = vmatprep.subr.mxu0 0.0
  %4692 = vmatpush1.msra.mxu0 0.0
  %4693 = vmatprep.subr.mxu0 0.0
  %4694 = vmatpush1.msra.mxu0 0.0
  %4695 = vmatprep.subr.mxu0 0.0
  %4696 = vmatpush1.msra.mxu0 0.0
  %4697 = vmatprep.subr.mxu0 0.0
  %4698 = vmatpush1.msra.mxu0 0.0
  %4699 = vmatprep.subr.mxu0 0.0
  %4700 = vmatpush1.msra.mxu0 0.0
  %4701 = vmatprep.subr.mxu0 0.0
  %4702 = vmatpush1.msra.mxu0 0.0
  %4703 = vmatprep.subr.mxu0 0.0
  %4704 = vmatpush1.msra.mxu0 0.0
  %4705 = vmatprep.subr.mxu0 0.0
  %4706 = vmatpush1.msra.mxu0 0.0
  %4707 = vmatprep.mubr.f32.mxu0 0.0
  %4708 = vmatmul.mubr.f32.gmra.mrb[0].mxu0 %v4619
  %v4709 = vpop.f32.mrb[0].mxu0
  %v4710 = vadd.f32 %v4641, %v4709
  %v4711 = vpop.f32.mrb[0].mxu0
  %4712 = vdwg.mxu0
  %vm4713 = vcmask 23552
  %4714 = vst.msk [vmem:[%s16] sm:$0xff] %vm4713, %v4710
  // Predicated region
  $region66: #{atgru_forward.1} parent=0 // pred_check
    _
  $region67: #{atgru_forward.1} parent=0 // pred_check_branch
    %4716 = sbr.rel (0) target = $region69
  $region68: #{atgru_forward.1} parent=0 // pred_region
    _
  $region69: #{atgru_forward.1} parent=0 // pred_fallthru
    _
  // Predicated region
  $region70: #{atgru_forward.1} parent=0 // pred_check
    _
  $region71: #{atgru_forward.1} parent=0 // pred_check_branch
    %4718 = sbr.rel (0) target = $region73
  $region72: #{atgru_forward.1} parent=0 // pred_region
    _
  $region73: #{atgru_forward.1} parent=0 // pred_fallthru
    _
  // Predicated region
  $region74: #{atgru_forward.1} parent=0 // pred_check
    _
  $region75: #{atgru_forward.1} parent=0 // pred_check_branch
    %4720 = sbr.rel (0) target = $region77
  $region76: #{atgru_forward.1} parent=0 // pred_region
    _
  $region77: #{atgru_forward.1} parent=0 // pred_fallthru
    _
  // Predicated region
  $region78: #{atgru_forward.1} parent=0 // pred_check
    _
  $region79: #{atgru_forward.1} parent=0 // pred_check_branch
    %4722 = sbr.rel (0) target = $region81
  $region80: #{atgru_forward.1} parent=0 // pred_region
    _
  $region81: #{atgru_forward.1} parent=0 // pred_fallthru
    _

</llo_original>
